<compile_context>
chip_gen: v6e
topology: v6e:2x2x1
jax: 0.10.0
libtpu: 0.0.40
codegen_flags: <defaults>
</compile_context>

<pallas_src>
import random as pyrandom

import numpy as np
import jax
import jax.numpy as jnp
from jax.experimental import pallas as pl
from jax.experimental.pallas import tpu as pltpu

# ------------------------- small synthetic config --------------------------
NUM_LATENTS = 4        # real biggan-deep: len(layers)+1
Z_DIM       = 32       # real: 128
NUM_CLASSES = 128      # real: 1000
IMAGE_SIZE  = 32       # real: 128 / 256 / 512
NUM_CUTOUTS = 8        # real: 128
CUT_TARGET  = 16       # real: 224 (CLIP input resolution)
EMBED_DIM   = 64       # real: 512 (ViT-B/32)
EMBED_PAD   = 128      # lane-dense embedding width (zero-padded columns)
LOSS_COEF   = 100.0

LZ       = NUM_LATENTS * Z_DIM            # 128   (latent part of gen input)
LC       = NUM_LATENTS * NUM_CLASSES      # 512   (class part of gen input)
IMG_FEAT = 3 * IMAGE_SIZE * IMAGE_SIZE    # 3072
CLIP_IN  = 3 * CUT_TARGET * CUT_TARGET    # 768
# 2-step grid: shards across both TensorCores on v7x ("parallel"), and keeps
# DMA/compute overlap with near-zero per-step overhead on single-TC v5e/v6e.
GEN_TN   = 1536

_CLIP_MEAN = jnp.array([0.48145466, 0.4578275, 0.40821073], jnp.float32)
_CLIP_STD  = jnp.array([0.26862954, 0.26130258, 0.27577711], jnp.float32)

_VMEM = pl.BlockSpec(memory_space=pltpu.MemorySpace.VMEM)


# ------------------------------ Pallas kernels ------------------------------
def _gen_kernel(z_ref, c_ref, wz_ref, wc_ref, o_ref):
    # Fused: Latents.forward (classes = sigmoid(cls)), the latent/class concat
    # (expressed as a K-split of the generator weight), the generator matmul
    # stub, and Model.forward's (out + 1) / 2.
    # TODO(synk): BigGAN-deep generator replaced by a single matmul+tanh stub
    # (the full conv / attention stack is not translated).
    z = z_ref[...].astype(jnp.bfloat16)                       # (1, LZ)
    classes = 1.0 / (1.0 + jnp.exp(-c_ref[...]))              # sigmoid, f32
    y = jnp.dot(z, wz_ref[...], preferred_element_type=jnp.float32)
    y = y + jnp.dot(classes.astype(jnp.bfloat16), wc_ref[...],
                    preferred_element_type=jnp.float32)
    o_ref[...] = (jnp.tanh(y) + 1.0) * 0.5


def _loss_kernel(normu_ref, cls_ref, into_ref, wc_ref, bc_ref, txt_ref, o_ref):
    # One fused kernel for: CLIP-stub encode + lat_loss + cls_loss + sim_loss.
    # Output is a lane-dense (1, 128) vector: [lat, cls, sim, 0, ...].

    # ---- latent loss ----
    x = normu_ref[...].astype(jnp.float32)               # (L, Z)
    L, Z = x.shape
    mean_r = jnp.mean(x, axis=1, keepdims=True)          # (L, 1)
    diffs = x - mean_r
    # torch.std(dim=1) default is unbiased (correction = 1)
    var_u = jnp.sum(diffs * diffs, axis=1, keepdims=True) / (Z - 1)
    std_u = jnp.sqrt(var_u)
    term_std  = jnp.mean(jnp.abs(1.0 - std_u), keepdims=True)            # (1,1)
    term_mean = jnp.mean(jnp.abs(mean_r), keepdims=True)                 # (1,1)
    term_sq   = 4.0 * jnp.maximum(jnp.mean(x * x, keepdims=True), 1.0)   # thresh_lat == 1
    # per-row skew / kurtosis with *biased* variance (matches the python loop)
    var_b = jnp.mean(diffs * diffs, axis=1, keepdims=True)
    std_b = jnp.sqrt(var_b) + 1e-20   # tiny eps guards a zero-variance row (torch would NaN)
    zs = diffs / std_b
    z2 = zs * zs
    skews = jnp.mean(z2 * zs, axis=1, keepdims=True)                     # (L,1)
    kurts = jnp.mean(z2 * z2, axis=1, keepdims=True) - 3.0               # (L,1)
    term_hi = jnp.sum(jnp.abs(kurts) + jnp.abs(skews), keepdims=True) / L
    lat_loss = term_std + term_mean + term_sq + term_hi                  # (1,1)

    # ---- class loss ----
    s = 1.0 / (1.0 + jnp.exp(-cls_ref[...]))              # sigmoid(cls), (L, C)
    Lc, C = s.shape
    # torch.topk(largest=False, k=C-1) keeps everything except one copy of the
    # row max, so mean((50*vals)^2) == 2500 * (sum_sq - max^2) / (L*(C-1)).
    row_max = jnp.max(s, axis=1, keepdims=True)
    sum_sq  = jnp.sum(s * s, axis=1, keepdims=True)
    cls_loss = (50.0 * 50.0) * jnp.sum(sum_sq - row_max * row_max,
                                       keepdims=True) / (Lc * (C - 1))   # (1,1)

    # ---- CLIP encode (image normalization folded into weights) + cos-sim ----
    # TODO(synk): CLIP ViT image encoder replaced by a linear projection stub.
    img = jnp.dot(into_ref[...].astype(jnp.bfloat16), wc_ref[...],
                  preferred_element_type=jnp.float32) + bc_ref[...]      # (N, P)
    img_norm = jnp.maximum(jnp.sqrt(jnp.sum(img * img, axis=1, keepdims=True)), 1e-8)
    inv_img = pl.reciprocal(img_norm, approx=True)                       # (N, 1)
    t_all = txt_ref[...]                  # (T, P), rows already sign-scaled (+/-1)
    sim_acc = jnp.zeros((1, 1), jnp.float32)
    for ti in range(t_all.shape[0]):      # T is small & static -> unrolled
        trow = t_all[ti:ti + 1, :]                                       # (1, P)
        # note: torch.cosine_similarity clamps the norm *product*; clamping
        # each norm separately only differs for degenerate near-zero embeds.
        t_norm = jnp.maximum(jnp.sqrt(jnp.sum(trow * trow, keepdims=True)), 1e-8)
        dots = jnp.sum(img * trow, axis=1, keepdims=True)                # (N, 1)
        cos = dots * inv_img * pl.reciprocal(t_norm, approx=True)
        sim_acc = sim_acc + jnp.mean(cos, keepdims=True)
    sim_loss = LOSS_COEF * sim_acc                                       # (1,1)

    lane = jax.lax.broadcasted_iota(jnp.int32, (1, EMBED_PAD), 1)
    o_ref[...] = (jnp.where(lane == 0, lat_loss, 0.0)
                  + jnp.where(lane == 1, cls_loss, 0.0)
                  + jnp.where(lane == 2, sim_loss, 0.0))


# ------------------------------ Pallas wrappers -----------------------------
def generate_image(normu, cls_param, gen_wz, gen_wc):
    z = normu.reshape(1, LZ)
    c = cls_param.reshape(1, LC)
    flat = pl.pallas_call(
        _gen_kernel,
        out_shape=jax.ShapeDtypeStruct((1, IMG_FEAT), jnp.float32),
        grid=(IMG_FEAT // GEN_TN,),
        in_specs=[
            pl.BlockSpec((1, LZ), lambda j: (0, 0)),
            pl.BlockSpec((1, LC), lambda j: (0, 0)),
            pl.BlockSpec((LZ, GEN_TN), lambda j: (0, j)),
            pl.BlockSpec((LC, GEN_TN), lambda j: (0, j)),
        ],
        out_specs=pl.BlockSpec((1, GEN_TN), lambda j: (0, j)),
        compiler_params=pltpu.CompilerParams(dimension_semantics=("parallel",)),
    )(z, c, gen_wz, gen_wc)
    return flat.reshape(1, 3, IMAGE_SIZE, IMAGE_SIZE)        # layout: NCHW


def fused_losses(normu, cls_param, into_flat, clip_w_eff, clip_b, txt_scaled):
    vec = pl.pallas_call(
        _loss_kernel,
        out_shape=jax.ShapeDtypeStruct((1, EMBED_PAD), jnp.float32),
        in_specs=[_VMEM] * 6,
        out_specs=_VMEM,
    )(normu, cls_param, into_flat, clip_w_eff, clip_b, txt_scaled)
    return vec[0, 0], vec[0, 1], vec[0, 2]


# ----------------------------- JAX glue (indexing) --------------------------
def make_cutout_indices(rng):
    # rand_cutout offsets/sizes (host Python RNG stands in for torch RNG) turned
    # into fixed-shape gather index arrays so the whole path can be jitted.
    # TODO(synk): experimental_resample (bicubic) path not implemented.
    width = IMAGE_SIZE
    ri = np.zeros((NUM_CUTOUTS, CUT_TARGET), np.int32)
    ci = np.zeros((NUM_CUTOUTS, CUT_TARGET), np.int32)
    base = np.arange(CUT_TARGET)
    for c in range(NUM_CUTOUTS):
        frac = min(max(rng.gauss(0.8, 0.3), 0.5), 0.95)
        size = int(width * frac)
        max_offset = width - size
        ox = rng.randint(0, max_offset)
        oy = rng.randint(0, max_offset)
        # F.interpolate(mode='nearest'): src = floor(dst * size / out)
        ri[c] = ox + (base * size) // CUT_TARGET
        ci[c] = oy + (base * size) // CUT_TARGET
    return jnp.asarray(ri), jnp.asarray(ci)


def _gather_cutouts(out, ri, ci):
    # out: (1, 3, H, W); ri/ci: (NUM_CUTOUTS, CUT_TARGET)
    out0 = out[0]                                      # (3, H, W)
    cut = out0[:, ri[:, :, None], ci[None if False else slice(None), None, :][0] if False else ci[:, None, :]]
    # (3, C, T, T) -> (C, 3, T, T)
    return jnp.transpose(cut, (1, 0, 2, 3))


# --------------------------------- forward ----------------------------------
@jax.jit
def _forward_image_impl(normu, cls_param, gen_wz, gen_wc):
    return generate_image(normu, cls_param, gen_wz, gen_wc)


@jax.jit
def _forward_loss_impl(normu, cls_param, gen_wz, gen_wc, clip_w_eff, clip_b,
                       txt_scaled, ri, ci):
    out = generate_image(normu, cls_param, gen_wz, gen_wc)   # (1,3,H,W) in [0,1]
    into = _gather_cutouts(out, ri, ci).reshape(NUM_CUTOUTS, CLIP_IN)
    lat_loss, cls_loss, sim_loss = fused_losses(
        normu, cls_param, into, clip_w_eff, clip_b, txt_scaled)
    return out, lat_loss, cls_loss, sim_loss


def big_sleep_forward(params, text_embeds, text_min_embeds=(), return_loss=True, seed=0):
    normu, cls_param, gen_wz, gen_wc, clip_w_eff, clip_b = params
    if not return_loss:
        return _forward_image_impl(normu, cls_param, gen_wz, gen_wc)

    rng = pyrandom.Random(seed)
    ri, ci = make_cutout_indices(rng)

    # Stack text embeds, fold the +/- sign in (cos(s*t, x) == s*cos(t, x) for
    # |s|==1), zero-pad to the lane-dense embedding width.
    rows = [(-1.0, t) for t in text_embeds] + [(1.0, t) for t in text_min_embeds]
    txt = jnp.concatenate([s * t.reshape(1, EMBED_DIM) for s, t in rows], axis=0)
    txt_scaled = jnp.pad(txt, ((0, 0), (0, EMBED_PAD - EMBED_DIM)))

    out, lat_loss, cls_loss, sim_loss = _forward_loss_impl(
        normu, cls_param, gen_wz, gen_wc, clip_w_eff, clip_b, txt_scaled, ri, ci)
    return out, (lat_loss, cls_loss, sim_loss)   # .mean() of a scalar sum == identity


# ------------------------------- param init ---------------------------------
def init_params(key):
    k1, k2, k3, k4 = jax.random.split(key, 4)
    normu = jax.random.normal(k1, (NUM_LATENTS, Z_DIM), jnp.float32)                  # std=1
    cls_p = -3.9 + 0.3 * jax.random.normal(k2, (NUM_LATENTS, NUM_CLASSES), jnp.float32)
    gen_w = 0.05 * jax.random.normal(k3, (LZ + LC, IMG_FEAT), jnp.float32)
    clip_w = 0.05 * jax.random.normal(k4, (CLIP_IN, EMBED_DIM), jnp.float32)
    return normu, cls_p, gen_w, clip_w


def prepare_params(raw):
    normu, cls_p, gen_w, clip_w = raw
    # Split the generator weight along K (latent rows / class rows) so the
    # sigmoid+concat can be fused into the generator kernel; cast to bf16 to
    # halve the HBM stream (accumulation stays f32 on the MXU).
    gen_wz = gen_w[:LZ].astype(jnp.bfloat16)
    gen_wc = gen_w[LZ:].astype(jnp.bfloat16)
    # Lane-dense (zero-padded) CLIP projection with the per-channel image
    # normalization folded in:  ((x - mean)/std) @ W == x @ (W/std) + (-mean/std) @ W
    clip_w_pad = jnp.pad(clip_w, ((0, 0), (0, EMBED_PAD - EMBED_DIM)))
    scale = jnp.repeat(1.0 / _CLIP_STD, CUT_TARGET * CUT_TARGET)       # (CLIP_IN,)
    offset = jnp.repeat(-_CLIP_MEAN / _CLIP_STD, CUT_TARGET * CUT_TARGET)
    clip_w_eff = (clip_w_pad * scale[:, None]).astype(jnp.bfloat16)    # (CLIP_IN, EMBED_PAD)
    clip_b = (offset @ clip_w_pad).reshape(1, EMBED_PAD)               # f32 bias
    return normu, cls_p, gen_wz, gen_wc, clip_w_eff, clip_b


if __name__ == "__main__":
    key = jax.random.PRNGKey(0)
    pkey, tkey = jax.random.split(key)
    params = prepare_params(init_params(pkey))

    t1, t2, t3 = jax.random.split(tkey, 3)
    text_embeds = [
        jax.random.normal(t1, (1, EMBED_DIM), jnp.float32),
        jax.random.normal(t2, (1, EMBED_DIM), jnp.float32),
    ]
    text_min_embeds = [jax.random.normal(t3, (1, EMBED_DIM), jnp.float32)]

    out, (lat_loss, cls_loss, sim_loss) = big_sleep_forward(
        params, text_embeds, text_min_embeds, return_loss=True, seed=0
    )
    jax.block_until_ready((out, lat_loss, cls_loss, sim_loss))
    assert out.shape == (1, 3, IMAGE_SIZE, IMAGE_SIZE)
    assert bool(jnp.isfinite(lat_loss)) and bool(jnp.isfinite(cls_loss)) and bool(jnp.isfinite(sim_loss))
    print("KERNEL_OK")
</pallas_src>

<mosaic_0001>
module attributes {stable_mosaic.version = 11 : i64} {
  func.func @_gen_kernel(%arg0: i32, %arg1: memref<1x128xf32, #tpu.memory_space<vmem>>, %arg2: memref<1x512xf32, #tpu.memory_space<vmem>>, %arg3: memref<128x1536xbf16, #tpu.memory_space<vmem>>, %arg4: memref<512x1536xbf16, #tpu.memory_space<vmem>>, %arg5: memref<1x1536xf32, #tpu.memory_space<vmem>>) attributes {dimension_semantics = [#tpu.dimension_semantics<parallel>], iteration_bounds = array<i64: 2>, scalar_prefetch = 0 : i64, scratch_operands = 0 : i64, tpu.core_type = #tpu.core_type<tc>, window_params = [{pipeline_mode = #tpu.pipeline_mode<synchronous>, transform_indices = @transform_0, window_bounds = array<i64: 1, 128>}, {pipeline_mode = #tpu.pipeline_mode<synchronous>, transform_indices = @transform_1, window_bounds = array<i64: 1, 512>}, {transform_indices = @transform_2, window_bounds = array<i64: 128, 1536>}, {transform_indices = @transform_3, window_bounds = array<i64: 512, 1536>}, {transform_indices = @transform_4, window_bounds = array<i64: 1, 1536>}]} {
    %c0 = arith.constant 0 : index
    %c0_0 = arith.constant 0 : index
    %0 = vector.load %arg1[%c0, %c0_0] : memref<1x128xf32, #tpu.memory_space<vmem>>, vector<1x128xf32>
    %1 = arith.truncf %0 : vector<1x128xf32> to vector<1x128xbf16>
    %c0_1 = arith.constant 0 : index
    %c0_2 = arith.constant 0 : index
    %2 = vector.load %arg2[%c0_1, %c0_2] : memref<1x512xf32, #tpu.memory_space<vmem>>, vector<1x512xf32>
    %cst = arith.constant 0.000000e+00 : f32
    %3 = vector.broadcast %cst : f32 to vector<1x512xf32>
    %4 = arith.subf %3, %2 : vector<1x512xf32>
    %5 = math.exp %4 : vector<1x512xf32>
    %cst_3 = arith.constant 1.000000e+00 : f32
    %6 = vector.broadcast %cst_3 : f32 to vector<1x512xf32>
    %7 = arith.addf %6, %5 : vector<1x512xf32>
    %cst_4 = arith.constant 1.000000e+00 : f32
    %8 = vector.broadcast %cst_4 : f32 to vector<1x512xf32>
    %9 = arith.divf %8, %7 : vector<1x512xf32>
    %c0_5 = arith.constant 0 : index
    %c0_6 = arith.constant 0 : index
    %10 = vector.load %arg3[%c0_5, %c0_6] : memref<128x1536xbf16, #tpu.memory_space<vmem>>, vector<128x1536xbf16>
    %cst_7 = arith.constant dense<0.000000e+00> : vector<1x1536xf32>
    %11 = tpu.matmul %1, %10, %cst_7 {dimension_numbers = #tpu.dot_dimension_numbers<[1], [0], [0], [1], [0, 0, 1, 1], [], []>} : vector<1x128xbf16>, vector<128x1536xbf16>, vector<1x1536xf32> -> vector<1x1536xf32>
    %12 = arith.truncf %9 : vector<1x512xf32> to vector<1x512xbf16>
    %c0_8 = arith.constant 0 : index
    %c0_9 = arith.constant 0 : index
    %13 = vector.load %arg4[%c0_8, %c0_9] : memref<512x1536xbf16, #tpu.memory_space<vmem>>, vector<512x1536xbf16>
    %cst_10 = arith.constant dense<0.000000e+00> : vector<1x1536xf32>
    %14 = tpu.matmul %12, %13, %cst_10 {dimension_numbers = #tpu.dot_dimension_numbers<[1], [0], [0], [1], [0, 0, 1, 1], [], []>} : vector<1x512xbf16>, vector<512x1536xbf16>, vector<1x1536xf32> -> vector<1x1536xf32>
    %15 = arith.addf %11, %14 : vector<1x1536xf32>
    %16 = math.tanh %15 : vector<1x1536xf32>
    %cst_11 = arith.constant 1.000000e+00 : f32
    %17 = vector.broadcast %cst_11 : f32 to vector<1x1536xf32>
    %18 = arith.addf %16, %17 : vector<1x1536xf32>
    %cst_12 = arith.constant 5.000000e-01 : f32
    %19 = vector.broadcast %cst_12 : f32 to vector<1x1536xf32>
    %20 = arith.mulf %18, %19 : vector<1x1536xf32>
    %c0_13 = arith.constant 0 : index
    %c0_14 = arith.constant 0 : index
    %21 = vector.load %arg5[%c0_13, %c0_14] : memref<1x1536xf32, #tpu.memory_space<vmem>>, vector<1x1536xf32>
    tpu.vector_store %arg5[%c0_13, %c0_14], %20 {strides = array<i32>} : memref<1x1536xf32, #tpu.memory_space<vmem>>, vector<1x1536xf32>,
    return
  }
  func.func @transform_0(%arg0: i32) -> (i32, i32) {
    %c0_i32 = arith.constant 0 : i32
    %c0_i32_0 = arith.constant 0 : i32
    %c0_i32_1 = arith.constant 0 : i32
    return %c0_i32, %c0_i32_0 : i32, i32
  }
  func.func @transform_1(%arg0: i32) -> (i32, i32) {
    %c0_i32 = arith.constant 0 : i32
    %c0_i32_0 = arith.constant 0 : i32
    %c0_i32_1 = arith.constant 0 : i32
    return %c0_i32, %c0_i32_0 : i32, i32
  }
  func.func @transform_2(%arg0: i32) -> (i32, i32) {
    %c0_i32 = arith.constant 0 : i32
    %c0_i32_0 = arith.constant 0 : i32
    return %c0_i32, %arg0 : i32, i32
  }
  func.func @transform_3(%arg0: i32) -> (i32, i32) {
    %c0_i32 = arith.constant 0 : i32
    %c0_i32_0 = arith.constant 0 : i32
    return %c0_i32, %arg0 : i32, i32
  }
  func.func @transform_4(%arg0: i32) -> (i32, i32) {
    %c0_i32 = arith.constant 0 : i32
    %c0_i32_0 = arith.constant 0 : i32
    return %c0_i32, %arg0 : i32, i32
  }
}

module attributes {stable_mosaic.version = 11 : i64} {
  func.func @_loss_kernel(%arg0: memref<4x32xf32, #tpu.memory_space<vmem>>, %arg1: memref<4x128xf32, #tpu.memory_space<vmem>>, %arg2: memref<8x768xf32, #tpu.memory_space<vmem>>, %arg3: memref<768x128xbf16, #tpu.memory_space<vmem>>, %arg4: memref<1x128xf32, #tpu.memory_space<vmem>>, %arg5: memref<3x128xf32, #tpu.memory_space<vmem>>, %arg6: memref<1x128xf32, #tpu.memory_space<vmem>>) attributes {dimension_semantics = [], scalar_prefetch = 0 : i64, scratch_operands = 0 : i64, tpu.core_type = #tpu.core_type<tc>} {
    %c0 = arith.constant 0 : index
    %c0_0 = arith.constant 0 : index
    %0 = vector.load %arg0[%c0, %c0_0] : memref<4x32xf32, #tpu.memory_space<vmem>>, vector<4x32xf32>
    %cst = arith.constant dense<0.000000e+00> : vector<4xf32>
    %1 = vector.multi_reduction <add>, %0, %cst [1] : vector<4x32xf32> to vector<4xf32>
    %2 = vector.shape_cast %1 : vector<4xf32> to vector<4x1xf32>
    %cst_1 = arith.constant 3.200000e+01 : f32
    %3 = vector.broadcast %cst_1 : f32 to vector<4x1xf32>
    %4 = arith.divf %2, %3 : vector<4x1xf32>
    %5 = vector.broadcast %4 : vector<4x1xf32> to vector<4x32xf32>
    %6 = arith.subf %0, %5 : vector<4x32xf32>
    %7 = arith.mulf %6, %6 : vector<4x32xf32>
    %cst_2 = arith.constant dense<0.000000e+00> : vector<4xf32>
    %8 = vector.multi_reduction <add>, %7, %cst_2 [1] : vector<4x32xf32> to vector<4xf32>
    %9 = vector.shape_cast %8 : vector<4xf32> to vector<4x1xf32>
    %cst_3 = arith.constant 3.100000e+01 : f32
    %10 = vector.broadcast %cst_3 : f32 to vector<4x1xf32>
    %11 = arith.divf %9, %10 : vector<4x1xf32>
    %12 = math.sqrt %11 : vector<4x1xf32>
    %cst_4 = arith.constant 1.000000e+00 : f32
    %13 = vector.broadcast %cst_4 : f32 to vector<4x1xf32>
    %14 = arith.subf %13, %12 : vector<4x1xf32>
    %15 = math.absf %14 : vector<4x1xf32>
    %16 = vector.shape_cast %15 : vector<4x1xf32> to vector<1x4x1xf32>
    %cst_5 = arith.constant dense<0.000000e+00> : vector<1xf32>
    %17 = vector.multi_reduction <add>, %16, %cst_5 [1, 2] : vector<1x4x1xf32> to vector<1xf32>
    %18 = vector.shape_cast %17 : vector<1xf32> to vector<1x1x1xf32>
    %19 = vector.extract %18[0, 0, 0] : f32 from vector<1x1x1xf32>
    %20 = vector.broadcast %19 : f32 to vector<1x1xf32>
    %cst_6 = arith.constant 4.000000e+00 : f32
    %21 = vector.broadcast %cst_6 : f32 to vector<1x1xf32>
    %22 = arith.divf %20, %21 : vector<1x1xf32>
    %23 = math.absf %4 : vector<4x1xf32>
    %24 = vector.shape_cast %23 : vector<4x1xf32> to vector<1x4x1xf32>
    %cst_7 = arith.constant dense<0.000000e+00> : vector<1xf32>
    %25 = vector.multi_reduction <add>, %24, %cst_7 [1, 2] : vector<1x4x1xf32> to vector<1xf32>
    %26 = vector.shape_cast %25 : vector<1xf32> to vector<1x1x1xf32>
    %27 = vector.extract %26[0, 0, 0] : f32 from vector<1x1x1xf32>
    %28 = vector.broadcast %27 : f32 to vector<1x1xf32>
    %cst_8 = arith.constant 4.000000e+00 : f32
    %29 = vector.broadcast %cst_8 : f32 to vector<1x1xf32>
    %30 = arith.divf %28, %29 : vector<1x1xf32>
    %31 = arith.mulf %0, %0 : vector<4x32xf32>
    %32 = vector.shape_cast %31 : vector<4x32xf32> to vector<1x4x32xf32>
    %cst_9 = arith.constant dense<0.000000e+00> : vector<1xf32>
    %33 = vector.multi_reduction <add>, %32, %cst_9 [1, 2] : vector<1x4x32xf32> to vector<1xf32>
    %34 = vector.shape_cast %33 : vector<1xf32> to vector<1x1x1xf32>
    %35 = vector.extract %34[0, 0, 0] : f32 from vector<1x1x1xf32>
    %36 = vector.broadcast %35 : f32 to vector<1x1xf32>
    %cst_10 = arith.constant 1.280000e+02 : f32
    %37 = vector.broadcast %cst_10 : f32 to vector<1x1xf32>
    %38 = arith.divf %36, %37 : vector<1x1xf32>
    %cst_11 = arith.constant 1.000000e+00 : f32
    %39 = vector.broadcast %cst_11 : f32 to vector<1x1xf32>
    %40 = arith.maximumf %38, %39 : vector<1x1xf32>
    %cst_12 = arith.constant 4.000000e+00 : f32
    %41 = vector.broadcast %cst_12 : f32 to vector<1x1xf32>
    %42 = arith.mulf %41, %40 : vector<1x1xf32>
    %43 = arith.mulf %6, %6 : vector<4x32xf32>
    %cst_13 = arith.constant dense<0.000000e+00> : vector<4xf32>
    %44 = vector.multi_reduction <add>, %43, %cst_13 [1] : vector<4x32xf32> to vector<4xf32>
    %45 = vector.shape_cast %44 : vector<4xf32> to vector<4x1xf32>
    %cst_14 = arith.constant 3.200000e+01 : f32
    %46 = vector.broadcast %cst_14 : f32 to vector<4x1xf32>
    %47 = arith.divf %45, %46 : vector<4x1xf32>
    %48 = math.sqrt %47 : vector<4x1xf32>
    %cst_15 = arith.constant 9.99999968E-21 : f32
    %49 = vector.broadcast %cst_15 : f32 to vector<4x1xf32>
    %50 = arith.addf %48, %49 : vector<4x1xf32>
    %51 = vector.broadcast %50 : vector<4x1xf32> to vector<4x32xf32>
    %52 = arith.divf %6, %51 : vector<4x32xf32>
    %53 = arith.mulf %52, %52 : vector<4x32xf32>
    %54 = arith.mulf %53, %52 : vector<4x32xf32>
    %cst_16 = arith.constant dense<0.000000e+00> : vector<4xf32>
    %55 = vector.multi_reduction <add>, %54, %cst_16 [1] : vector<4x32xf32> to vector<4xf32>
    %56 = vector.shape_cast %55 : vector<4xf32> to vector<4x1xf32>
    %cst_17 = arith.constant 3.200000e+01 : f32
    %57 = vector.broadcast %cst_17 : f32 to vector<4x1xf32>
    %58 = arith.divf %56, %57 : vector<4x1xf32>
    %59 = arith.mulf %53, %53 : vector<4x32xf32>
    %cst_18 = arith.constant dense<0.000000e+00> : vector<4xf32>
    %60 = vector.multi_reduction <add>, %59, %cst_18 [1] : vector<4x32xf32> to vector<4xf32>
    %61 = vector.shape_cast %60 : vector<4xf32> to vector<4x1xf32>
    %cst_19 = arith.constant 3.200000e+01 : f32
    %62 = vector.broadcast %cst_19 : f32 to vector<4x1xf32>
    %63 = arith.divf %61, %62 : vector<4x1xf32>
    %cst_20 = arith.constant 3.000000e+00 : f32
    %64 = vector.broadcast %cst_20 : f32 to vector<4x1xf32>
    %65 = arith.subf %63, %64 : vector<4x1xf32>
    %66 = math.absf %65 : vector<4x1xf32>
    %67 = math.absf %58 : vector<4x1xf32>
    %68 = arith.addf %66, %67 : vector<4x1xf32>
    %69 = vector.shape_cast %68 : vector<4x1xf32> to vector<1x4x1xf32>
    %cst_21 = arith.constant dense<0.000000e+00> : vector<1xf32>
    %70 = vector.multi_reduction <add>, %69, %cst_21 [1, 2] : vector<1x4x1xf32> to vector<1xf32>
    %71 = vector.shape_cast %70 : vector<1xf32> to vector<1x1x1xf32>
    %72 = vector.extract %71[0, 0, 0] : f32 from vector<1x1x1xf32>
    %73 = vector.broadcast %72 : f32 to vector<1x1xf32>
    %cst_22 = arith.constant 4.000000e+00 : f32
    %74 = vector.broadcast %cst_22 : f32 to vector<1x1xf32>
    %75 = arith.divf %73, %74 : vector<1x1xf32>
    %76 = arith.addf %22, %30 : vector<1x1xf32>
    %77 = arith.addf %76, %42 : vector<1x1xf32>
    %78 = arith.addf %77, %75 : vector<1x1xf32>
    %c0_23 = arith.constant 0 : index
    %c0_24 = arith.constant 0 : index
    %79 = vector.load %arg1[%c0_23, %c0_24] : memref<4x128xf32, #tpu.memory_space<vmem>>, vector<4x128xf32>
    %cst_25 = arith.constant 0.000000e+00 : f32
    %80 = vector.broadcast %cst_25 : f32 to vector<4x128xf32>
    %81 = arith.subf %80, %79 : vector<4x128xf32>
    %82 = math.exp %81 : vector<4x128xf32>
    %cst_26 = arith.constant 1.000000e+00 : f32
    %83 = vector.broadcast %cst_26 : f32 to vector<4x128xf32>
    %84 = arith.addf %83, %82 : vector<4x128xf32>
    %cst_27 = arith.constant 1.000000e+00 : f32
    %85 = vector.broadcast %cst_27 : f32 to vector<4x128xf32>
    %86 = arith.divf %85, %84 : vector<4x128xf32>
    %cst_28 = arith.constant dense<0xFF800000> : vector<4xf32>
    %87 = vector.multi_reduction <maximumf>, %86, %cst_28 [1] : vector<4x128xf32> to vector<4xf32>
    %88 = vector.shape_cast %87 : vector<4xf32> to vector<4x1xf32>
    %89 = arith.mulf %86, %86 : vector<4x128xf32>
    %cst_29 = arith.constant dense<0.000000e+00> : vector<4xf32>
    %90 = vector.multi_reduction <add>, %89, %cst_29 [1] : vector<4x128xf32> to vector<4xf32>
    %91 = vector.shape_cast %90 : vector<4xf32> to vector<4x1xf32>
    %92 = arith.mulf %88, %88 : vector<4x1xf32>
    %93 = arith.subf %91, %92 : vector<4x1xf32>
    %94 = vector.shape_cast %93 : vector<4x1xf32> to vector<1x4x1xf32>
    %cst_30 = arith.constant dense<0.000000e+00> : vector<1xf32>
    %95 = vector.multi_reduction <add>, %94, %cst_30 [1, 2] : vector<1x4x1xf32> to vector<1xf32>
    %96 = vector.shape_cast %95 : vector<1xf32> to vector<1x1x1xf32>
    %97 = vector.extract %96[0, 0, 0] : f32 from vector<1x1x1xf32>
    %98 = vector.broadcast %97 : f32 to vector<1x1xf32>
    %cst_31 = arith.constant 2.500000e+03 : f32
    %99 = vector.broadcast %cst_31 : f32 to vector<1x1xf32>
    %100 = arith.mulf %99, %98 : vector<1x1xf32>
    %cst_32 = arith.constant 5.080000e+02 : f32
    %101 = vector.broadcast %cst_32 : f32 to vector<1x1xf32>
    %102 = arith.divf %100, %101 : vector<1x1xf32>
    %c0_33 = arith.constant 0 : index
    %c0_34 = arith.constant 0 : index
    %103 = vector.load %arg2[%c0_33, %c0_34] : memref<8x768xf32, #tpu.memory_space<vmem>>, vector<8x768xf32>
    %104 = arith.truncf %103 : vector<8x768xf32> to vector<8x768xbf16>
    %c0_35 = arith.constant 0 : index
    %c0_36 = arith.constant 0 : index
    %105 = vector.load %arg3[%c0_35, %c0_36] : memref<768x128xbf16, #tpu.memory_space<vmem>>, vector<768x128xbf16>
    %cst_37 = arith.constant dense<0.000000e+00> : vector<8x128xf32>
    %106 = tpu.matmul %104, %105, %cst_37 {dimension_numbers = #tpu.dot_dimension_numbers<[1], [0], [0], [1], [0, 0, 1, 1], [], []>} : vector<8x768xbf16>, vector<768x128xbf16>, vector<8x128xf32> -> vector<8x128xf32>
    %c0_38 = arith.constant 0 : index
    %c0_39 = arith.constant 0 : index
    %107 = vector.load %arg4[%c0_38, %c0_39] : memref<1x128xf32, #tpu.memory_space<vmem>>, vector<1x128xf32>
    %108 = vector.broadcast %107 : vector<1x128xf32> to vector<8x128xf32>
    %109 = arith.addf %106, %108 : vector<8x128xf32>
    %110 = arith.mulf %109, %109 : vector<8x128xf32>
    %cst_40 = arith.constant dense<0.000000e+00> : vector<8xf32>
    %111 = vector.multi_reduction <add>, %110, %cst_40 [1] : vector<8x128xf32> to vector<8xf32>
    %112 = vector.shape_cast %111 : vector<8xf32> to vector<8x1xf32>
    %113 = math.sqrt %112 : vector<8x1xf32>
    %cst_41 = arith.constant 9.99999993E-9 : f32
    %114 = vector.broadcast %cst_41 : f32 to vector<8x1xf32>
    %115 = arith.maximumf %113, %114 : vector<8x1xf32>
    %116 = tpu.reciprocal %115 {approx = true} : vector<8x1xf32> -> vector<8x1xf32>
    %c0_42 = arith.constant 0 : index
    %c0_43 = arith.constant 0 : index
    %117 = vector.load %arg5[%c0_42, %c0_43] : memref<3x128xf32, #tpu.memory_space<vmem>>, vector<3x128xf32>
    %cst_44 = arith.constant 0.000000e+00 : f32
    %118 = vector.broadcast %cst_44 : f32 to vector<1x1xf32>
    %119 = vector.extract_strided_slice %117 {offsets = [0, 0], sizes = [1, 128], strides = [1, 1]} : vector<3x128xf32> to vector<1x128xf32>
    %120 = arith.mulf %119, %119 : vector<1x128xf32>
    %121 = vector.shape_cast %120 : vector<1x128xf32> to vector<1x1x128xf32>
    %cst_45 = arith.constant dense<0.000000e+00> : vector<1xf32>
    %122 = vector.multi_reduction <add>, %121, %cst_45 [1, 2] : vector<1x1x128xf32> to vector<1xf32>
    %123 = vector.shape_cast %122 : vector<1xf32> to vector<1x1x1xf32>
    %124 = vector.extract %123[0, 0, 0] : f32 from vector<1x1x1xf32>
    %125 = vector.broadcast %124 : f32 to vector<1x1xf32>
    %126 = math.sqrt %125 : vector<1x1xf32>
    %cst_46 = arith.constant 9.99999993E-9 : f32
    %127 = vector.broadcast %cst_46 : f32 to vector<1x1xf32>
    %128 = arith.maximumf %126, %127 : vector<1x1xf32>
    %129 = vector.broadcast %119 : vector<1x128xf32> to vector<8x128xf32>
    %130 = arith.mulf %109, %129 : vector<8x128xf32>
    %cst_47 = arith.constant dense<0.000000e+00> : vector<8xf32>
    %131 = vector.multi_reduction <add>, %130, %cst_47 [1] : vector<8x128xf32> to vector<8xf32>
    %132 = vector.shape_cast %131 : vector<8xf32> to vector<8x1xf32>
    %133 = arith.mulf %132, %116 : vector<8x1xf32>
    %134 = tpu.reciprocal %128 {approx = true} : vector<1x1xf32> -> vector<1x1xf32>
    %135 = vector.broadcast %134 : vector<1x1xf32> to vector<8x1xf32>
    %136 = arith.mulf %133, %135 : vector<8x1xf32>
    %137 = vector.shape_cast %136 : vector<8x1xf32> to vector<1x8x1xf32>
    %cst_48 = arith.constant dense<0.000000e+00> : vector<1xf32>
    %138 = vector.multi_reduction <add>, %137, %cst_48 [1, 2] : vector<1x8x1xf32> to vector<1xf32>
    %139 = vector.shape_cast %138 : vector<1xf32> to vector<1x1x1xf32>
    %140 = vector.extract %139[0, 0, 0] : f32 from vector<1x1x1xf32>
    %141 = vector.broadcast %140 : f32 to vector<1x1xf32>
    %cst_49 = arith.constant 8.000000e+00 : f32
    %142 = vector.broadcast %cst_49 : f32 to vector<1x1xf32>
    %143 = arith.divf %141, %142 : vector<1x1xf32>
    %144 = arith.addf %118, %143 : vector<1x1xf32>
    %145 = vector.extract_strided_slice %117 {offsets = [1, 0], sizes = [1, 128], strides = [1, 1]} : vector<3x128xf32> to vector<1x128xf32>
    %146 = arith.mulf %145, %145 : vector<1x128xf32>
    %147 = vector.shape_cast %146 : vector<1x128xf32> to vector<1x1x128xf32>
    %cst_50 = arith.constant dense<0.000000e+00> : vector<1xf32>
    %148 = vector.multi_reduction <add>, %147, %cst_50 [1, 2] : vector<1x1x128xf32> to vector<1xf32>
    %149 = vector.shape_cast %148 : vector<1xf32> to vector<1x1x1xf32>
    %150 = vector.extract %149[0, 0, 0] : f32 from vector<1x1x1xf32>
    %151 = vector.broadcast %150 : f32 to vector<1x1xf32>
    %152 = math.sqrt %151 : vector<1x1xf32>
    %cst_51 = arith.constant 9.99999993E-9 : f32
    %153 = vector.broadcast %cst_51 : f32 to vector<1x1xf32>
    %154 = arith.maximumf %152, %153 : vector<1x1xf32>
    %155 = vector.broadcast %145 : vector<1x128xf32> to vector<8x128xf32>
    %156 = arith.mulf %109, %155 : vector<8x128xf32>
    %cst_52 = arith.constant dense<0.000000e+00> : vector<8xf32>
    %157 = vector.multi_reduction <add>, %156, %cst_52 [1] : vector<8x128xf32> to vector<8xf32>
    %158 = vector.shape_cast %157 : vector<8xf32> to vector<8x1xf32>
    %159 = arith.mulf %158, %116 : vector<8x1xf32>
    %160 = tpu.reciprocal %154 {approx = true} : vector<1x1xf32> -> vector<1x1xf32>
    %161 = vector.broadcast %160 : vector<1x1xf32> to vector<8x1xf32>
    %162 = arith.mulf %159, %161 : vector<8x1xf32>
    %163 = vector.shape_cast %162 : vector<8x1xf32> to vector<1x8x1xf32>
    %cst_53 = arith.constant dense<0.000000e+00> : vector<1xf32>
    %164 = vector.multi_reduction <add>, %163, %cst_53 [1, 2] : vector<1x8x1xf32> to vector<1xf32>
    %165 = vector.shape_cast %164 : vector<1xf32> to vector<1x1x1xf32>
    %166 = vector.extract %165[0, 0, 0] : f32 from vector<1x1x1xf32>
    %167 = vector.broadcast %166 : f32 to vector<1x1xf32>
    %cst_54 = arith.constant 8.000000e+00 : f32
    %168 = vector.broadcast %cst_54 : f32 to vector<1x1xf32>
    %169 = arith.divf %167, %168 : vector<1x1xf32>
    %170 = arith.addf %144, %169 : vector<1x1xf32>
    %171 = vector.extract_strided_slice %117 {offsets = [2, 0], sizes = [1, 128], strides = [1, 1]} : vector<3x128xf32> to vector<1x128xf32>
    %172 = arith.mulf %171, %171 : vector<1x128xf32>
    %173 = vector.shape_cast %172 : vector<1x128xf32> to vector<1x1x128xf32>
    %cst_55 = arith.constant dense<0.000000e+00> : vector<1xf32>
    %174 = vector.multi_reduction <add>, %173, %cst_55 [1, 2] : vector<1x1x128xf32> to vector<1xf32>
    %175 = vector.shape_cast %174 : vector<1xf32> to vector<1x1x1xf32>
    %176 = vector.extract %175[0, 0, 0] : f32 from vector<1x1x1xf32>
    %177 = vector.broadcast %176 : f32 to vector<1x1xf32>
    %178 = math.sqrt %177 : vector<1x1xf32>
    %cst_56 = arith.constant 9.99999993E-9 : f32
    %179 = vector.broadcast %cst_56 : f32 to vector<1x1xf32>
    %180 = arith.maximumf %178, %179 : vector<1x1xf32>
    %181 = vector.broadcast %171 : vector<1x128xf32> to vector<8x128xf32>
    %182 = arith.mulf %109, %181 : vector<8x128xf32>
    %cst_57 = arith.constant dense<0.000000e+00> : vector<8xf32>
    %183 = vector.multi_reduction <add>, %182, %cst_57 [1] : vector<8x128xf32> to vector<8xf32>
    %184 = vector.shape_cast %183 : vector<8xf32> to vector<8x1xf32>
    %185 = arith.mulf %184, %116 : vector<8x1xf32>
    %186 = tpu.reciprocal %180 {approx = true} : vector<1x1xf32> -> vector<1x1xf32>
    %187 = vector.broadcast %186 : vector<1x1xf32> to vector<8x1xf32>
    %188 = arith.mulf %185, %187 : vector<8x1xf32>
    %189 = vector.shape_cast %188 : vector<8x1xf32> to vector<1x8x1xf32>
    %cst_58 = arith.constant dense<0.000000e+00> : vector<1xf32>
    %190 = vector.multi_reduction <add>, %189, %cst_58 [1, 2] : vector<1x8x1xf32> to vector<1xf32>
    %191 = vector.shape_cast %190 : vector<1xf32> to vector<1x1x1xf32>
    %192 = vector.extract %191[0, 0, 0] : f32 from vector<1x1x1xf32>
    %193 = vector.broadcast %192 : f32 to vector<1x1xf32>
    %cst_59 = arith.constant 8.000000e+00 : f32
    %194 = vector.broadcast %cst_59 : f32 to vector<1x1xf32>
    %195 = arith.divf %193, %194 : vector<1x1xf32>
    %196 = arith.addf %170, %195 : vector<1x1xf32>
    %cst_60 = arith.constant 1.000000e+02 : f32
    %197 = vector.broadcast %cst_60 : f32 to vector<1x1xf32>
    %198 = arith.mulf %197, %196 : vector<1x1xf32>
    %199 = tpu.iota {dimensions = array<i32: 1>} : vector<1x128xi32>
    %c0_i32 = arith.constant 0 : i32
    %200 = vector.broadcast %c0_i32 : i32 to vector<1x128xi32>
    %201 = arith.cmpi eq, %199, %200 : vector<1x128xi32>
    %cst_61 = arith.constant 0.000000e+00 : f32
    %202 = vector.shape_cast %78 : vector<1x1xf32> to vector<1x1xf32>
    %203 = vector.broadcast %202 : vector<1x1xf32> to vector<1x128xf32>
    %204 = vector.broadcast %cst_61 : f32 to vector<1x128xf32>
    %205 = arith.select %201, %203, %204 : vector<1x128xi1>, vector<1x128xf32>
    %c1_i32 = arith.constant 1 : i32
    %206 = vector.broadcast %c1_i32 : i32 to vector<1x128xi32>
    %207 = arith.cmpi eq, %199, %206 : vector<1x128xi32>
    %cst_62 = arith.constant 0.000000e+00 : f32
    %208 = vector.shape_cast %102 : vector<1x1xf32> to vector<1x1xf32>
    %209 = vector.broadcast %208 : vector<1x1xf32> to vector<1x128xf32>
    %210 = vector.broadcast %cst_62 : f32 to vector<1x128xf32>
    %211 = arith.select %207, %209, %210 : vector<1x128xi1>, vector<1x128xf32>
    %212 = arith.addf %205, %211 : vector<1x128xf32>
    %c2_i32 = arith.constant 2 : i32
    %213 = vector.broadcast %c2_i32 : i32 to vector<1x128xi32>
    %214 = arith.cmpi eq, %199, %213 : vector<1x128xi32>
    %cst_63 = arith.constant 0.000000e+00 : f32
    %215 = vector.shape_cast %198 : vector<1x1xf32> to vector<1x1xf32>
    %216 = vector.broadcast %215 : vector<1x1xf32> to vector<1x128xf32>
    %217 = vector.broadcast %cst_63 : f32 to vector<1x128xf32>
    %218 = arith.select %214, %216, %217 : vector<1x128xi1>, vector<1x128xf32>
    %219 = arith.addf %212, %218 : vector<1x128xf32>
    %c0_64 = arith.constant 0 : index
    %c0_65 = arith.constant 0 : index
    %220 = vector.load %arg6[%c0_64, %c0_65] : memref<1x128xf32, #tpu.memory_space<vmem>>, vector<1x128xf32>
    tpu.vector_store %arg6[%c0_64, %c0_65], %219 {strides = array<i32>} : memref<1x128xf32, #tpu.memory_space<vmem>>, vector<1x128xf32>,
    return
  }
}

</mosaic_0001>

<llo_original>
// kernel: _forward_loss_impl.3
$region0: #{_forward_loss_impl.3}
  #allocation0 [shape = 'u32[]', space=smem, size = 0x4, offset = 0x4, fixed_abs, tag = 'smem constant byte address 0x4 - core index']
  #allocation1 [shape = 'u32[144,128]{1,0:T(1,128)}', space=vmem, size = 0x12000, scoped, tag = 'internal scratch']
  %s0 = inlined_call_operand.vmem [shape: f32[4,32], index: 0, kind: input, shape index: {}]
  %s1 = inlined_call_operand.vmem [shape: f32[4,128], index: 1, kind: input, shape index: {}]
  %s2 = inlined_call_operand.vmem [shape: f32[8,768], index: 2, kind: input, shape index: {}]
  %s3 = inlined_call_operand.vmem [shape: bf16[768,128], index: 3, kind: input, shape index: {}]
  %s4 = inlined_call_operand.vmem [shape: f32[1,128], index: 4, kind: input, shape index: {}]
  %s5 = inlined_call_operand.vmem [shape: f32[3,128], index: 5, kind: input, shape index: {}]
  %s6 = inlined_call_operand.vmem [shape: f32[1,128], index: 6, kind: output, shape index: {}]
  %s7 = sld [smem:[#allocation0]]
  $region34: #{_forward_loss_impl.3} parent=0
    _
  %s9 = ssub.s32 1, %s7
  %s10 = scalar_select 0, %s9, %s7
  // Predicated region
  $region2: #{_forward_loss_impl.3} parent=0 // pred_check
    _
  $region3: #{_forward_loss_impl.3} parent=0 // pred_check_branch
    %12 = sbr.rel (0) target = $region5
  $region4: #{_forward_loss_impl.3} parent=0 // pred_region
    _
  $region5: #{_forward_loss_impl.3} parent=0 // pred_fallthru
    _
  // Predicated region
  $region6: #{_forward_loss_impl.3} parent=0 // pred_check
    _
  $region7: #{_forward_loss_impl.3} parent=0 // pred_check_branch
    %14 = sbr.rel (0) target = $region9
  $region8: #{_forward_loss_impl.3} parent=0 // pred_region
    _
  $region9: #{_forward_loss_impl.3} parent=0 // pred_fallthru
    _
  // Predicated region
  $region10: #{_forward_loss_impl.3} parent=0 // pred_check
    _
  $region11: #{_forward_loss_impl.3} parent=0 // pred_check_branch
    %16 = sbr.rel (0) target = $region13
  $region12: #{_forward_loss_impl.3} parent=0 // pred_region
    _
  $region13: #{_forward_loss_impl.3} parent=0 // pred_fallthru
    _
  // Predicated region
  $region14: #{_forward_loss_impl.3} parent=0 // pred_check
    _
  $region15: #{_forward_loss_impl.3} parent=0 // pred_check_branch
    %18 = sbr.rel (0) target = $region17
  $region16: #{_forward_loss_impl.3} parent=0 // pred_region
    _
  $region17: #{_forward_loss_impl.3} parent=0 // pred_fallthru
    _
  // Predicated region
  $region18: #{_forward_loss_impl.3} parent=0 // pred_check
    _
  $region19: #{_forward_loss_impl.3} parent=0 // pred_check_branch
    %20 = sbr.rel (0) target = $region21
  $region20: #{_forward_loss_impl.3} parent=0 // pred_region
    _
  $region21: #{_forward_loss_impl.3} parent=0 // pred_fallthru
    _
  // Predicated region
  $region22: #{_forward_loss_impl.3} parent=0 // pred_check
    _
  $region23: #{_forward_loss_impl.3} parent=0 // pred_check_branch
    %22 = sbr.rel (0) target = $region25
  $region24: #{_forward_loss_impl.3} parent=0 // pred_region
    _
  $region25: #{_forward_loss_impl.3} parent=0 // pred_fallthru
    _
  %v24 = vld [vmem:[%s0] sm:$0xf]
  %vm25 = vcmask 257024
  %v26 = vsel %vm25, %v24, 0.0
  %27 = vadd.xlane.f32.xlu0 %v26
  %v28 = vpop.xlane.xlu0 %27
  %v29 = vrcp.pop 32.0
  %v30 = vmul.f32 %v28, %v29
  %v31 = vsub.f32 %v24, %v30
  %v32 = vmul.f32 %v31, %v31
  %v33 = vsel %vm25, %v32, 0.0
  %34 = vadd.xlane.f32.xlu0 %v33
  %v35 = vpop.xlane.xlu0 %34
  %v36 = vrcp.pop 31.0
  %v37 = vmul.f32 %v35, %v36
  %v38 = vrsqrt.pop %v37
  %v39 = vmul.f32 %v37, %v38
  %vm40 = vcmp.eq.f32.partialorder %v37, inf
  %v41 = vsel %vm40, %v37, %v39
  %vm42 = vcmp.eq.f32.partialorder %v37, 0.0
  %v43 = vand.u32 %v37, 2147483648
  %v44 = vsel %vm42, %v43, %v41
  %v45 = vsub.f32 1.0, %v44
  %v46 = vand.u32 2147483647, %v45
  %vm47 = vcmask 3072
  %v48 = vsel %vm47, %v46, 0.0
  %49 = vadd.xlane.f32.xlu0 %v48
  %v50 = vpop.xlane.xlu0 %49
  %v51 = vrot.slane %v50, 4
  %v52 = vadd.f32 %v50, %v51
  %v53 = vrot.slane %v52, 2
  %v54 = vadd.f32 %v52, %v53
  %v55 = vrot.slane %v54, 1
  %v56 = vadd.f32 %v54, %v55
  %s57 = vtos %v56
  %v58 = vstv %s57
  %v59 = vrcp.pop 4.0
  %v60 = vmul.f32 %v58, %v59
  %v61 = vand.u32 2147483647, %v30
  %v62 = vsel %vm47, %v61, 0.0
  %63 = vadd.xlane.f32.xlu0 %v62
  %v64 = vpop.xlane.xlu0 %63
  %v65 = vrot.slane %v64, 4
  %v66 = vadd.f32 %v64, %v65
  %v67 = vrot.slane %v66, 2
  %v68 = vadd.f32 %v66, %v67
  %v69 = vrot.slane %v68, 1
  %v70 = vadd.f32 %v68, %v69
  %s71 = vtos %v70
  %v72 = vstv %s71
  %v73 = vmul.f32 %v72, %v59
  %v74 = vmul.f32 %v24, %v24
  %v75 = vsel %vm25, %v74, 0.0
  %76 = vadd.xlane.f32.xlu0 %v75
  %v77 = vpop.xlane.xlu0 %76
  %v78 = vrot.slane %v77, 4
  %v79 = vadd.f32 %v77, %v78
  %v80 = vrot.slane %v79, 2
  %v81 = vadd.f32 %v79, %v80
  %v82 = vrot.slane %v81, 1
  %v83 = vadd.f32 %v81, %v82
  %s84 = vtos %v83
  %v85 = vstv %s84
  %v86 = vrcp.pop 128.0
  %v87 = vmul.f32 %v85, %v86
  %v88 = vmax.f32 %v87, 1.0
  %v89 = vmul.f32 %v88, 4.0
  %v90 = vmul.f32 %v35, %v29
  %v91 = vrsqrt.pop %v90
  %v92 = vmul.f32 %v90, %v91
  %vm93 = vcmp.eq.f32.partialorder %v90, inf
  %v94 = vsel %vm93, %v90, %v92
  %vm95 = vcmp.eq.f32.partialorder %v90, 0.0
  %v96 = vand.u32 %v90, 2147483648
  %v97 = vsel %vm95, %v96, %v94
  %v98 = vadd.f32 %v97, 1e-20
  %v99 = vrcp.pop %v98
  %v100 = vmul.f32 %v31, %v99
  %v101 = vmul.f32 %v100, %v100
  %v102 = vmul.f32 %v101, %v100
  %v103 = vsel %vm25, %v102, 0.0
  %104 = vadd.xlane.f32.xlu0 %v103
  %v105 = vpop.xlane.xlu0 %104
  %v106 = vmul.f32 %v105, %v29
  %v107 = vmul.f32 %v101, %v101
  %v108 = vsel %vm25, %v107, 0.0
  %109 = vadd.xlane.f32.xlu0 %v108
  %v110 = vpop.xlane.xlu0 %109
  %v111 = vmul.f32 %v110, %v29
  %v112 = vsub.f32 %v111, 3.0
  %v113 = vand.u32 2147483647, %v112
  %v114 = vand.u32 2147483647, %v106
  %v115 = vadd.f32 %v113, %v114
  %v116 = vsel %vm47, %v115, 0.0
  %117 = vadd.xlane.f32.xlu0 %v116
  %v118 = vpop.xlane.xlu0 %117
  %v119 = vrot.slane %v118, 4
  %v120 = vadd.f32 %v118, %v119
  %v121 = vrot.slane %v120, 2
  %v122 = vadd.f32 %v120, %v121
  %v123 = vrot.slane %v122, 1
  %v124 = vadd.f32 %v122, %v123
  %s125 = vtos %v124
  %v126 = vstv %s125
  %v127 = vmul.f32 %v126, %v59
  %v128 = vadd.f32 %v60, %v73
  %v129 = vadd.f32 %v128, %v89
  %v130 = vadd.f32 %v129, %v127
  %v131 = vld [vmem:[%s1] sm:$0xf]
  %v132 = vsub.f32 0.0, %v131
  %v133 = vmul.f32 %v132, 1.442695
  %v134 = vpow.pop %v133
  %v135 = vadd.f32 %v134, 1.0
  %v136 = vrcp.pop %v135
  %v137 = vmul.f32 1.0, %v136
  %vm138 = vcmask 1043456
  %v139 = vsel %vm138, %v137, -inf
  %140 = vmax.xlane.f32.xlu0 %v139
  %v141 = vpop.xlane.xlu0 %140
  %v142 = vmul.f32 %v137, %v137
  %v143 = vsel %vm138, %v142, 0.0
  %144 = vadd.xlane.f32.xlu0 %v143
  %v145 = vpop.xlane.xlu0 %144
  %v146 = vmul.f32 %v141, %v141
  %v147 = vsub.f32 %v145, %v146
  %v148 = vsel %vm47, %v147, 0.0
  %149 = vadd.xlane.f32.xlu0 %v148
  %v150 = vpop.xlane.xlu0 %149
  %v151 = vrot.slane %v150, 4
  %v152 = vadd.f32 %v150, %v151
  %v153 = vrot.slane %v152, 2
  %v154 = vadd.f32 %v152, %v153
  %v155 = vrot.slane %v154, 1
  %v156 = vadd.f32 %v154, %v155
  %s157 = vtos %v156
  %v158 = vstv %s157
  %v159 = vmul.f32 %v158, 2500.0
  %v160 = vrcp.pop 508.0
  %v161 = vmul.f32 %v159, %v160
  %v162 = vld [vmem:[%s2] sm:$0xff]
  %v163 = vld [vmem:[%s2 + $0x8] sm:$0xff]
  %v164 = vld [vmem:[%s2 + $0x10] sm:$0xff]
  %v165 = vld [vmem:[%s2 + $0x18] sm:$0xff]
  %v166 = vld [vmem:[%s2 + $0x20] sm:$0xff]
  %v167 = vld [vmem:[%s2 + $0x28] sm:$0xff]
  %v168 = vpack.c.bf16 %v162, %v162
  %v169 = vpack.c.bf16 %v163, %v163
  %v170 = vpack.c.bf16 %v164, %v164
  %v171 = vpack.c.bf16 %v165, %v165
  %v172 = vpack.c.bf16 %v166, %v166
  %v173 = vpack.c.bf16 %v167, %v167
  %v174 = vld [vmem:[%s3] sm:$0xf]
  %v175 = vld [vmem:[%s3 + $0x4] sm:$0xf]
  %v176 = vld [vmem:[%s3 + $0x8] sm:$0xf]
  %v177 = vld [vmem:[%s3 + $0xc] sm:$0xf]
  %v178 = vld [vmem:[%s3 + $0x10] sm:$0xf]
  %v179 = vld [vmem:[%s3 + $0x14] sm:$0xf]
  %v180 = vld [vmem:[%s3 + $0x18] sm:$0xf]
  %v181 = vld [vmem:[%s3 + $0x1c] sm:$0xf]
  %v182 = vld [vmem:[%s3 + $0x20] sm:$0xf]
  %v183 = vld [vmem:[%s3 + $0x24] sm:$0xf]
  %v184 = vld [vmem:[%s3 + $0x28] sm:$0xf]
  %v185 = vld [vmem:[%s3 + $0x2c] sm:$0xf]
  %v186 = vld [vmem:[%s3 + $0x30] sm:$0xf]
  %v187 = vld [vmem:[%s3 + $0x34] sm:$0xf]
  %v188 = vld [vmem:[%s3 + $0x38] sm:$0xf]
  %v189 = vld [vmem:[%s3 + $0x3c] sm:$0xf]
  %v190 = vld [vmem:[%s3 + $0x40] sm:$0xf]
  %v191 = vld [vmem:[%s3 + $0x44] sm:$0xf]
  %v192 = vld [vmem:[%s3 + $0x48] sm:$0xf]
  %v193 = vld [vmem:[%s3 + $0x4c] sm:$0xf]
  %v194 = vld [vmem:[%s3 + $0x50] sm:$0xf]
  %v195 = vld [vmem:[%s3 + $0x54] sm:$0xf]
  %v196 = vld [vmem:[%s3 + $0x58] sm:$0xf]
  %v197 = vld [vmem:[%s3 + $0x5c] sm:$0xf]
  %v198 = vld [vmem:[%s3 + $0x60] sm:$0xf]
  %v199 = vld [vmem:[%s3 + $0x64] sm:$0xf]
  %v200 = vld [vmem:[%s3 + $0x68] sm:$0xf]
  %v201 = vld [vmem:[%s3 + $0x6c] sm:$0xf]
  %v202 = vld [vmem:[%s3 + $0x70] sm:$0xf]
  %v203 = vld [vmem:[%s3 + $0x74] sm:$0xf]
  %v204 = vld [vmem:[%s3 + $0x78] sm:$0xf]
  %v205 = vld [vmem:[%s3 + $0x7c] sm:$0xf]
  %v206 = vld [vmem:[%s3 + $0x80] sm:$0xf]
  %v207 = vld [vmem:[%s3 + $0x84] sm:$0xf]
  %v208 = vld [vmem:[%s3 + $0x88] sm:$0xf]
  %v209 = vld [vmem:[%s3 + $0x8c] sm:$0xf]
  %v210 = vld [vmem:[%s3 + $0x90] sm:$0xf]
  %v211 = vld [vmem:[%s3 + $0x94] sm:$0xf]
  %v212 = vld [vmem:[%s3 + $0x98] sm:$0xf]
  %v213 = vld [vmem:[%s3 + $0x9c] sm:$0xf]
  %v214 = vld [vmem:[%s3 + $0xa0] sm:$0xf]
  %v215 = vld [vmem:[%s3 + $0xa4] sm:$0xf]
  %v216 = vld [vmem:[%s3 + $0xa8] sm:$0xf]
  %v217 = vld [vmem:[%s3 + $0xac] sm:$0xf]
  %v218 = vld [vmem:[%s3 + $0xb0] sm:$0xf]
  %v219 = vld [vmem:[%s3 + $0xb4] sm:$0xf]
  %v220 = vld [vmem:[%s3 + $0xb8] sm:$0xf]
  %v221 = vld [vmem:[%s3 + $0xbc] sm:$0xf]
  %v222 = vld [vmem:[%s3 + $0xc0] sm:$0xf]
  %v223 = vld [vmem:[%s3 + $0xc4] sm:$0xf]
  %v224 = vld [vmem:[%s3 + $0xc8] sm:$0xf]
  %v225 = vld [vmem:[%s3 + $0xcc] sm:$0xf]
  %v226 = vld [vmem:[%s3 + $0xd0] sm:$0xf]
  %v227 = vld [vmem:[%s3 + $0xd4] sm:$0xf]
  %v228 = vld [vmem:[%s3 + $0xd8] sm:$0xf]
  %v229 = vld [vmem:[%s3 + $0xdc] sm:$0xf]
  %v230 = vld [vmem:[%s3 + $0xe0] sm:$0xf]
  %v231 = vld [vmem:[%s3 + $0xe4] sm:$0xf]
  %v232 = vld [vmem:[%s3 + $0xe8] sm:$0xf]
  %v233 = vld [vmem:[%s3 + $0xec] sm:$0xf]
  %v234 = vld [vmem:[%s3 + $0xf0] sm:$0xf]
  %v235 = vld [vmem:[%s3 + $0xf4] sm:$0xf]
  %v236 = vld [vmem:[%s3 + $0xf8] sm:$0xf]
  %v237 = vld [vmem:[%s3 + $0xfc] sm:$0xf]
  %v238 = vld [vmem:[%s3 + $0x100] sm:$0xf]
  %v239 = vld [vmem:[%s3 + $0x104] sm:$0xf]
  %v240 = vld [vmem:[%s3 + $0x108] sm:$0xf]
  %v241 = vld [vmem:[%s3 + $0x10c] sm:$0xf]
  %v242 = vld [vmem:[%s3 + $0x110] sm:$0xf]
  %v243 = vld [vmem:[%s3 + $0x114] sm:$0xf]
  %v244 = vld [vmem:[%s3 + $0x118] sm:$0xf]
  %v245 = vld [vmem:[%s3 + $0x11c] sm:$0xf]
  %v246 = vld [vmem:[%s3 + $0x120] sm:$0xf]
  %v247 = vld [vmem:[%s3 + $0x124] sm:$0xf]
  %v248 = vld [vmem:[%s3 + $0x128] sm:$0xf]
  %v249 = vld [vmem:[%s3 + $0x12c] sm:$0xf]
  %v250 = vld [vmem:[%s3 + $0x130] sm:$0xf]
  %v251 = vld [vmem:[%s3 + $0x134] sm:$0xf]
  %v252 = vld [vmem:[%s3 + $0x138] sm:$0xf]
  %v253 = vld [vmem:[%s3 + $0x13c] sm:$0xf]
  %v254 = vld [vmem:[%s3 + $0x140] sm:$0xf]
  %v255 = vld [vmem:[%s3 + $0x144] sm:$0xf]
  %v256 = vld [vmem:[%s3 + $0x148] sm:$0xf]
  %v257 = vld [vmem:[%s3 + $0x14c] sm:$0xf]
  %v258 = vld [vmem:[%s3 + $0x150] sm:$0xf]
  %v259 = vld [vmem:[%s3 + $0x154] sm:$0xf]
  %v260 = vld [vmem:[%s3 + $0x158] sm:$0xf]
  %v261 = vld [vmem:[%s3 + $0x15c] sm:$0xf]
  %v262 = vld [vmem:[%s3 + $0x160] sm:$0xf]
  %v263 = vld [vmem:[%s3 + $0x164] sm:$0xf]
  %v264 = vld [vmem:[%s3 + $0x168] sm:$0xf]
  %v265 = vld [vmem:[%s3 + $0x16c] sm:$0xf]
  %v266 = vld [vmem:[%s3 + $0x170] sm:$0xf]
  %v267 = vld [vmem:[%s3 + $0x174] sm:$0xf]
  %v268 = vld [vmem:[%s3 + $0x178] sm:$0xf]
  %v269 = vld [vmem:[%s3 + $0x17c] sm:$0xf]
  %v270 = vld [vmem:[%s4] sm:$0x1]
  %v272 = vlaneseq
  %v273 = vshrl.u32 %v272, 7
  %v274 = vsub.s32 0, %v273
  %v275 = vrot.slane %v270, %v274
  %v373 = vunpack.c.l.b16 %v174
  %v374 = vunpack.c.l.b16 %v175
  %v375 = vunpack.c.l.b16 %v176
  %v376 = vunpack.c.l.b16 %v177
  %v377 = vunpack.c.l.b16 %v178
  %v378 = vunpack.c.l.b16 %v179
  %v379 = vunpack.c.l.b16 %v180
  %v380 = vunpack.c.l.b16 %v181
  %v381 = vunpack.c.l.b16 %v182
  %v382 = vunpack.c.l.b16 %v183
  %v383 = vunpack.c.l.b16 %v184
  %v384 = vunpack.c.l.b16 %v185
  %v385 = vunpack.c.l.b16 %v186
  %v386 = vunpack.c.l.b16 %v187
  %v387 = vunpack.c.l.b16 %v188
  %v388 = vunpack.c.l.b16 %v189
  %v389 = vunpack.c.l.b16 %v190
  %v390 = vunpack.c.l.b16 %v191
  %v391 = vunpack.c.l.b16 %v192
  %v392 = vunpack.c.l.b16 %v193
  %v393 = vunpack.c.l.b16 %v194
  %v394 = vunpack.c.l.b16 %v195
  %v395 = vunpack.c.l.b16 %v196
  %v396 = vunpack.c.l.b16 %v197
  %v397 = vunpack.c.l.b16 %v198
  %v398 = vunpack.c.l.b16 %v199
  %v399 = vunpack.c.l.b16 %v200
  %v400 = vunpack.c.l.b16 %v201
  %v401 = vunpack.c.l.b16 %v202
  %v402 = vunpack.c.l.b16 %v203
  %v403 = vunpack.c.l.b16 %v204
  %v404 = vunpack.c.l.b16 %v205
  %v405 = vunpack.c.l.b16 %v206
  %v406 = vunpack.c.l.b16 %v207
  %v407 = vunpack.c.l.b16 %v208
  %v408 = vunpack.c.l.b16 %v209
  %v409 = vunpack.c.l.b16 %v210
  %v410 = vunpack.c.l.b16 %v211
  %v411 = vunpack.c.l.b16 %v212
  %v412 = vunpack.c.l.b16 %v213
  %v413 = vunpack.c.l.b16 %v214
  %v414 = vunpack.c.l.b16 %v215
  %v415 = vunpack.c.l.b16 %v216
  %v416 = vunpack.c.l.b16 %v217
  %v417 = vunpack.c.l.b16 %v218
  %v418 = vunpack.c.l.b16 %v219
  %v419 = vunpack.c.l.b16 %v220
  %v420 = vunpack.c.l.b16 %v221
  %v421 = vunpack.c.l.b16 %v222
  %v422 = vunpack.c.l.b16 %v223
  %v423 = vunpack.c.l.b16 %v224
  %v424 = vunpack.c.l.b16 %v225
  %v425 = vunpack.c.l.b16 %v226
  %v426 = vunpack.c.l.b16 %v227
  %v427 = vunpack.c.l.b16 %v228
  %v428 = vunpack.c.l.b16 %v229
  %v429 = vunpack.c.l.b16 %v230
  %v430 = vunpack.c.l.b16 %v231
  %v431 = vunpack.c.l.b16 %v232
  %v432 = vunpack.c.l.b16 %v233
  %v433 = vunpack.c.l.b16 %v234
  %v434 = vunpack.c.l.b16 %v235
  %v435 = vunpack.c.l.b16 %v236
  %v436 = vunpack.c.l.b16 %v237
  %v437 = vunpack.c.l.b16 %v238
  %v438 = vunpack.c.l.b16 %v239
  %v439 = vunpack.c.l.b16 %v240
  %v440 = vunpack.c.l.b16 %v241
  %v441 = vunpack.c.l.b16 %v242
  %v442 = vunpack.c.l.b16 %v243
  %v443 = vunpack.c.l.b16 %v244
  %v444 = vunpack.c.l.b16 %v245
  %v445 = vunpack.c.l.b16 %v246
  %v446 = vunpack.c.l.b16 %v247
  %v447 = vunpack.c.l.b16 %v248
  %v448 = vunpack.c.l.b16 %v249
  %v449 = vunpack.c.l.b16 %v250
  %v450 = vunpack.c.l.b16 %v251
  %v451 = vunpack.c.l.b16 %v252
  %v452 = vunpack.c.l.b16 %v253
  %v453 = vunpack.c.l.b16 %v254
  %v454 = vunpack.c.l.b16 %v255
  %v455 = vunpack.c.l.b16 %v256
  %v456 = vunpack.c.l.b16 %v257
  %v457 = vunpack.c.l.b16 %v258
  %v458 = vunpack.c.l.b16 %v259
  %v459 = vunpack.c.l.b16 %v260
  %v460 = vunpack.c.l.b16 %v261
  %v461 = vunpack.c.l.b16 %v262
  %v462 = vunpack.c.l.b16 %v263
  %v463 = vunpack.c.l.b16 %v264
  %v464 = vunpack.c.l.b16 %v265
  %v465 = vunpack.c.l.b16 %v266
  %v466 = vunpack.c.l.b16 %v267
  %v467 = vunpack.c.l.b16 %v268
  %v468 = vunpack.c.l.b16 %v269
  %v469 = vpack.c.b16 %v374, %v373
  %v470 = vpack.c.b16 %v376, %v375
  %v471 = vpack.c.b16 %v378, %v377
  %v472 = vpack.c.b16 %v380, %v379
  %v473 = vpack.c.b16 %v382, %v381
  %v474 = vpack.c.b16 %v384, %v383
  %v475 = vpack.c.b16 %v386, %v385
  %v476 = vpack.c.b16 %v388, %v387
  %v477 = vpack.c.b16 %v390, %v389
  %v478 = vpack.c.b16 %v392, %v391
  %v479 = vpack.c.b16 %v394, %v393
  %v480 = vpack.c.b16 %v396, %v395
  %v481 = vpack.c.b16 %v398, %v397
  %v482 = vpack.c.b16 %v400, %v399
  %v483 = vpack.c.b16 %v402, %v401
  %v484 = vpack.c.b16 %v404, %v403
  %v485 = vpack.c.b16 %v406, %v405
  %v486 = vpack.c.b16 %v408, %v407
  %v487 = vpack.c.b16 %v410, %v409
  %v488 = vpack.c.b16 %v412, %v411
  %v489 = vpack.c.b16 %v414, %v413
  %v490 = vpack.c.b16 %v416, %v415
  %v491 = vpack.c.b16 %v418, %v417
  %v492 = vpack.c.b16 %v420, %v419
  %v493 = vpack.c.b16 %v422, %v421
  %v494 = vpack.c.b16 %v424, %v423
  %v495 = vpack.c.b16 %v426, %v425
  %v496 = vpack.c.b16 %v428, %v427
  %v497 = vpack.c.b16 %v430, %v429
  %v498 = vpack.c.b16 %v432, %v431
  %v499 = vpack.c.b16 %v434, %v433
  %v500 = vpack.c.b16 %v436, %v435
  %v501 = vpack.c.b16 %v438, %v437
  %v502 = vpack.c.b16 %v440, %v439
  %v503 = vpack.c.b16 %v442, %v441
  %v504 = vpack.c.b16 %v444, %v443
  %v505 = vpack.c.b16 %v446, %v445
  %v506 = vpack.c.b16 %v448, %v447
  %v507 = vpack.c.b16 %v450, %v449
  %v508 = vpack.c.b16 %v452, %v451
  %v509 = vpack.c.b16 %v454, %v453
  %v510 = vpack.c.b16 %v456, %v455
  %v511 = vpack.c.b16 %v458, %v457
  %v512 = vpack.c.b16 %v460, %v459
  %v513 = vpack.c.b16 %v462, %v461
  %v514 = vpack.c.b16 %v464, %v463
  %v515 = vpack.c.b16 %v466, %v465
  %v516 = vpack.c.b16 %v468, %v467
  %565 = vmatprep.subr.bf16.mxu0 0
  %566 = vmatpush1.bf16.msra.mxu0 %v476
  %567 = vmatprep.subr.bf16.mxu0 0
  %568 = vmatpush1.bf16.msra.mxu0 %v475
  %569 = vmatprep.subr.bf16.mxu0 0
  %570 = vmatpush1.bf16.msra.mxu0 %v474
  %571 = vmatprep.subr.bf16.mxu0 0
  %572 = vmatpush1.bf16.msra.mxu0 %v473
  %573 = vmatprep.subr.bf16.mxu0 0
  %574 = vmatpush1.bf16.msra.mxu0 %v472
  %575 = vmatprep.subr.bf16.mxu0 0
  %576 = vmatpush1.bf16.msra.mxu0 %v471
  %577 = vmatprep.subr.bf16.mxu0 0
  %578 = vmatpush1.bf16.msra.mxu0 %v470
  %579 = vmatprep.subr.bf16.mxu0 0
  %580 = vmatpush1.bf16.msra.mxu0 %v469
  %581 = vmatprep.subr.bf16.mxu0 0
  %582 = vmatpush2.bf16.msra.mxu0 %v484
  %583 = vmatprep.subr.bf16.mxu0 0
  %584 = vmatpush2.bf16.msra.mxu0 %v483
  %585 = vmatprep.subr.bf16.mxu0 0
  %586 = vmatpush2.bf16.msra.mxu0 %v482
  %587 = vmatprep.subr.bf16.mxu0 0
  %588 = vmatpush2.bf16.msra.mxu0 %v481
  %589 = vmatprep.subr.bf16.mxu0 0
  %590 = vmatpush2.bf16.msra.mxu0 %v480
  %591 = vmatprep.subr.bf16.mxu0 0
  %592 = vmatpush2.bf16.msra.mxu0 %v479
  %593 = vmatprep.subr.bf16.mxu0 0
  %594 = vmatpush2.bf16.msra.mxu0 %v478
  %595 = vmatprep.subr.bf16.mxu0 0
  %596 = vmatpush2.bf16.msra.mxu0 %v477
  %597 = vmatprep.mubr.bf16.mxu0 %v169
  %598 = vmatmul.mubr.bf16.gmra.mxu0 %v168
  %v599 = vpop.f32.mrf.mxu0
  %v600 = vadd.f32 %v275, %v599
  %v601 = vpop.f32.mrf.mxu0
  %v602 = vpop.f32.mrf.mxu0
  %v603 = vpop.f32.mrf.mxu0
  %604 = vdwg.mxu0
  %605 = vmatprep.subr.bf16.mxu0 0
  %606 = vmatpush1.bf16.msra.mxu0 %v492
  %607 = vmatprep.subr.bf16.mxu0 0
  %608 = vmatpush1.bf16.msra.mxu0 %v491
  %609 = vmatprep.subr.bf16.mxu0 0
  %610 = vmatpush1.bf16.msra.mxu0 %v490
  %611 = vmatprep.subr.bf16.mxu0 0
  %612 = vmatpush1.bf16.msra.mxu0 %v489
  %613 = vmatprep.subr.bf16.mxu0 0
  %614 = vmatpush1.bf16.msra.mxu0 %v488
  %615 = vmatprep.subr.bf16.mxu0 0
  %616 = vmatpush1.bf16.msra.mxu0 %v487
  %617 = vmatprep.subr.bf16.mxu0 0
  %618 = vmatpush1.bf16.msra.mxu0 %v486
  %619 = vmatprep.subr.bf16.mxu0 0
  %620 = vmatpush1.bf16.msra.mxu0 %v485
  %621 = vmatprep.subr.bf16.mxu0 0
  %622 = vmatpush2.bf16.msra.mxu0 %v500
  %623 = vmatprep.subr.bf16.mxu0 0
  %624 = vmatpush2.bf16.msra.mxu0 %v499
  %625 = vmatprep.subr.bf16.mxu0 0
  %626 = vmatpush2.bf16.msra.mxu0 %v498
  %627 = vmatprep.subr.bf16.mxu0 0
  %628 = vmatpush2.bf16.msra.mxu0 %v497
  %629 = vmatprep.subr.bf16.mxu0 0
  %630 = vmatpush2.bf16.msra.mxu0 %v496
  %631 = vmatprep.subr.bf16.mxu0 0
  %632 = vmatpush2.bf16.msra.mxu0 %v495
  %633 = vmatprep.subr.bf16.mxu0 0
  %634 = vmatpush2.bf16.msra.mxu0 %v494
  %635 = vmatprep.subr.bf16.mxu0 0
  %636 = vmatpush2.bf16.msra.mxu0 %v493
  %637 = vmatprep.mubr.bf16.mxu0 %v171
  %638 = vmatmul.mubr.bf16.gmra.mxu0 %v170
  %v639 = vpop.f32.mrf.mxu0
  %v640 = vadd.f32 %v600, %v639
  %v641 = vpop.f32.mrf.mxu0
  %v642 = vpop.f32.mrf.mxu0
  %v643 = vpop.f32.mrf.mxu0
  %644 = vdwg.mxu0
  %645 = vmatprep.subr.bf16.mxu0 0
  %646 = vmatpush1.bf16.msra.mxu0 %v508
  %647 = vmatprep.subr.bf16.mxu0 0
  %648 = vmatpush1.bf16.msra.mxu0 %v507
  %649 = vmatprep.subr.bf16.mxu0 0
  %650 = vmatpush1.bf16.msra.mxu0 %v506
  %651 = vmatprep.subr.bf16.mxu0 0
  %652 = vmatpush1.bf16.msra.mxu0 %v505
  %653 = vmatprep.subr.bf16.mxu0 0
  %654 = vmatpush1.bf16.msra.mxu0 %v504
  %655 = vmatprep.subr.bf16.mxu0 0
  %656 = vmatpush1.bf16.msra.mxu0 %v503
  %657 = vmatprep.subr.bf16.mxu0 0
  %658 = vmatpush1.bf16.msra.mxu0 %v502
  %659 = vmatprep.subr.bf16.mxu0 0
  %660 = vmatpush1.bf16.msra.mxu0 %v501
  %661 = vmatprep.subr.bf16.mxu0 0
  %662 = vmatpush2.bf16.msra.mxu0 %v516
  %663 = vmatprep.subr.bf16.mxu0 0
  %664 = vmatpush2.bf16.msra.mxu0 %v515
  %665 = vmatprep.subr.bf16.mxu0 0
  %666 = vmatpush2.bf16.msra.mxu0 %v514
  %667 = vmatprep.subr.bf16.mxu0 0
  %668 = vmatpush2.bf16.msra.mxu0 %v513
  %669 = vmatprep.subr.bf16.mxu0 0
  %670 = vmatpush2.bf16.msra.mxu0 %v512
  %671 = vmatprep.subr.bf16.mxu0 0
  %672 = vmatpush2.bf16.msra.mxu0 %v511
  %673 = vmatprep.subr.bf16.mxu0 0
  %674 = vmatpush2.bf16.msra.mxu0 %v510
  %675 = vmatprep.subr.bf16.mxu0 0
  %676 = vmatpush2.bf16.msra.mxu0 %v509
  %677 = vmatprep.mubr.bf16.mxu0 %v173
  %678 = vmatmul.mubr.bf16.gmra.mxu0 %v172
  %v679 = vpop.f32.mrf.mxu0
  %v680 = vadd.f32 %v640, %v679
  %v681 = vpop.f32.mrf.mxu0
  %v682 = vpop.f32.mrf.mxu0
  %v683 = vpop.f32.mrf.mxu0
  %684 = vdwg.mxu0
  %v685 = vmul.f32 %v680, %v680
  %686 = vadd.xlane.f32.xlu0 %v685
  %v687 = vpop.xlane.xlu0 %686
  %v688 = vrsqrt.pop %v687
  %v689 = vmul.f32 %v687, %v688
  %vm690 = vcmp.eq.f32.partialorder %v687, inf
  %v691 = vsel %vm690, %v687, %v689
  %vm692 = vcmp.eq.f32.partialorder %v687, 0.0
  %v693 = vand.u32 %v687, 2147483648
  %v694 = vsel %vm692, %v693, %v691
  %v695 = vmax.f32 %v694, 1e-08
  %v696 = vrcp.pop %v695
  %v697 = vld [vmem:[%s5] sm:$0x7]
  %v698 = vmul.f32 %v697, %v697
  %vm699 = vcmask 1040384
  %v700 = vsel %vm699, %v698, 0.0
  %701 = vadd.xlane.f32.xlu0 %v700
  %v702 = vpop.xlane.xlu0 %701
  %v703 = vrot.slane %v702, 4
  %v704 = vadd.f32 %v702, %v703
  %v705 = vrot.slane %v704, 2
  %v706 = vadd.f32 %v704, %v705
  %v707 = vrot.slane %v706, 1
  %v708 = vadd.f32 %v706, %v707
  %s709 = vtos %v708
  %v710 = vstv %s709
  %v711 = vrsqrt.pop %v710
  %v712 = vmul.f32 %v710, %v711
  %vm713 = vcmp.eq.f32.partialorder %v710, inf
  %v714 = vsel %vm713, %v710, %v712
  %vm715 = vcmp.eq.f32.partialorder %v710, 0.0
  %v716 = vand.u32 %v710, 2147483648
  %v717 = vsel %vm715, %v716, %v714
  %v718 = vmax.f32 %v717, 1e-08
  %v719 = vlaneseq
  %v720 = vshrl.u32 %v719, 7
  %v721 = vsub.s32 0, %v720
  %v722 = vrot.slane %v697, %v721
  %v723 = vmul.f32 %v680, %v722
  %724 = vadd.xlane.f32.xlu0 %v723
  %v725 = vpop.xlane.xlu0 %724
  %v726 = vmul.f32 %v725, %v696
  %v727 = vrcp.pop %v718
  %v728 = vmul.f32 %v726, %v727
  %vm729 = vcmask 7168
  %v730 = vsel %vm729, %v728, 0.0
  %731 = vadd.xlane.f32.xlu0 %v730
  %v732 = vpop.xlane.xlu0 %731
  %v733 = vrot.slane %v732, 4
  %v734 = vadd.f32 %v732, %v733
  %v735 = vrot.slane %v734, 2
  %v736 = vadd.f32 %v734, %v735
  %v737 = vrot.slane %v736, 1
  %v738 = vadd.f32 %v736, %v737
  %s739 = vtos %v738
  %v740 = vstv %s739
  %v741 = vrcp.pop 8.0
  %v742 = vmul.f32 %v740, %v741
  %v743 = vadd.f32 %v742, 0.0
  %v745 = vrot.slane %v698, 1
  %v747 = vsel %vm699, %v745, 0.0
  %748 = vadd.xlane.f32.xlu0 %v747
  %v749 = vpop.xlane.xlu0 %748
  %v750 = vrot.slane %v749, 4
  %v751 = vadd.f32 %v749, %v750
  %v752 = vrot.slane %v751, 2
  %v753 = vadd.f32 %v751, %v752
  %v754 = vrot.slane %v753, 1
  %v755 = vadd.f32 %v753, %v754
  %s756 = vtos %v755
  %v757 = vstv %s756
  %v758 = vrsqrt.pop %v757
  %v759 = vmul.f32 %v757, %v758
  %vm760 = vcmp.eq.f32.partialorder %v757, inf
  %v761 = vsel %vm760, %v757, %v759
  %vm762 = vcmp.eq.f32.partialorder %v757, 0.0
  %v763 = vand.u32 %v757, 2147483648
  %v764 = vsel %vm762, %v763, %v761
  %v765 = vmax.f32 %v764, 1e-08
  %v766 = vlaneseq
  %v767 = vshrl.u32 %v766, 7
  %v768 = vsub.s32 1, %v767
  %v769 = vrot.slane %v697, %v768
  %v770 = vmul.f32 %v680, %v769
  %771 = vadd.xlane.f32.xlu0 %v770
  %v772 = vpop.xlane.xlu0 %771
  %v773 = vmul.f32 %v772, %v696
  %v774 = vrcp.pop %v765
  %v775 = vmul.f32 %v773, %v774
  %v776 = vsel %vm729, %v775, 0.0
  %777 = vadd.xlane.f32.xlu0 %v776
  %v778 = vpop.xlane.xlu0 %777
  %v779 = vrot.slane %v778, 4
  %v780 = vadd.f32 %v778, %v779
  %v781 = vrot.slane %v780, 2
  %v782 = vadd.f32 %v780, %v781
  %v783 = vrot.slane %v782, 1
  %v784 = vadd.f32 %v782, %v783
  %s785 = vtos %v784
  %v786 = vstv %s785
  %v787 = vmul.f32 %v786, %v741
  %v788 = vadd.f32 %v743, %v787
  %v789 = vrot.slane %v698, 2
  %v791 = vsel %vm699, %v789, 0.0
  %792 = vadd.xlane.f32.xlu0 %v791
  %v793 = vpop.xlane.xlu0 %792
  %v794 = vrot.slane %v793, 4
  %v795 = vadd.f32 %v793, %v794
  %v796 = vrot.slane %v795, 2
  %v797 = vadd.f32 %v795, %v796
  %v798 = vrot.slane %v797, 1
  %v799 = vadd.f32 %v797, %v798
  %s800 = vtos %v799
  %v801 = vstv %s800
  %v802 = vrsqrt.pop %v801
  %v803 = vmul.f32 %v801, %v802
  %vm804 = vcmp.eq.f32.partialorder %v801, inf
  %v805 = vsel %vm804, %v801, %v803
  %vm806 = vcmp.eq.f32.partialorder %v801, 0.0
  %v807 = vand.u32 %v801, 2147483648
  %v808 = vsel %vm806, %v807, %v805
  %v809 = vmax.f32 %v808, 1e-08
  %v810 = vlaneseq
  %v811 = vshrl.u32 %v810, 7
  %v812 = vsub.s32 2, %v811
  %v813 = vrot.slane %v697, %v812
  %v814 = vmul.f32 %v680, %v813
  %815 = vadd.xlane.f32.xlu0 %v814
  %v816 = vpop.xlane.xlu0 %815
  %v817 = vmul.f32 %v816, %v696
  %v818 = vrcp.pop %v809
  %v819 = vmul.f32 %v817, %v818
  %v820 = vsel %vm729, %v819, 0.0
  %821 = vadd.xlane.f32.xlu0 %v820
  %v822 = vpop.xlane.xlu0 %821
  %v823 = vrot.slane %v822, 4
  %v824 = vadd.f32 %v822, %v823
  %v825 = vrot.slane %v824, 2
  %v826 = vadd.f32 %v824, %v825
  %v827 = vrot.slane %v826, 1
  %v828 = vadd.f32 %v826, %v827
  %s829 = vtos %v828
  %v830 = vstv %s829
  %v831 = vmul.f32 %v830, %v741
  %v832 = vadd.f32 %v788, %v831
  %v833 = vmul.f32 %v832, 100.0
  %v834 = vlaneseq
  %v835 = vand.u32 %v834, 127
  %vm836 = vcmp.eq.s32.totalorder %v835, 0
  %v837 = vsel %vm836, %v130, 0.0
  %vm838 = vcmp.eq.s32.totalorder %v835, 1
  %v839 = vsel %vm838, %v161, 0.0
  %v840 = vadd.f32 %v837, %v839
  %vm841 = vcmp.eq.s32.totalorder %v835, 2
  %v842 = vsel %vm841, %v833, 0.0
  %v843 = vadd.f32 %v840, %v842
  %844 = vst [vmem:[%s6] sm:$0x1] %v843
  // Predicated region
  $region26: #{_forward_loss_impl.3} parent=0 // pred_check
    _
  $region27: #{_forward_loss_impl.3} parent=0 // pred_check_branch
    %846 = sbr.rel (0) target = $region29
  $region28: #{_forward_loss_impl.3} parent=0 // pred_region
    _
  $region29: #{_forward_loss_impl.3} parent=0 // pred_fallthru
    _
  // Predicated region
  $region30: #{_forward_loss_impl.3} parent=0 // pred_check
    _
  $region31: #{_forward_loss_impl.3} parent=0 // pred_check_branch
    %848 = sbr.rel (0) target = $region33
  $region32: #{_forward_loss_impl.3} parent=0 // pred_region
    _
  $region33: #{_forward_loss_impl.3} parent=0 // pred_fallthru
    _

// kernel: _forward_loss_impl.2
$region0: #{_forward_loss_impl.2}
  #allocation0 [shape = 'u32[]', space=smem, size = 0x4, offset = 0x4, fixed_abs, tag = 'smem constant byte address 0x4 - core index']
  #allocation1 [shape = 'u32[144,128]{1,0:T(1,128)}', space=vmem, size = 0x12000, scoped, tag = 'internal scratch']
  %s0 = inlined_call_operand.vmem [shape: f32[1,128], index: 0, kind: input, shape index: {}]
  %s1 = inlined_call_operand.hbm [shape: f32[1,512], index: 1, kind: input, shape index: {}]
  %s2 = inlined_call_operand.hbm [shape: bf16[128,3072], index: 2, kind: input, shape index: {}]
  %s3 = inlined_call_operand.hbm [shape: bf16[512,3072], index: 3, kind: input, shape index: {}]
  %s4 = inlined_call_operand.vmem [shape: f32[1,3072], index: 4, kind: output, shape index: {}]
  %s5 = sld [smem:[#allocation0]]
  $region61: #{_forward_loss_impl.2} parent=0
    _
  %s7 = ssub.s32 1, %s5
  %s8 = scalar_select 0, %s7, %s5
  $region1: #{_forward_loss_impl.2} parent=0
    #allocation2 [shape = 'u8[2048]{0}', space=vmem, size = 0x800, scoped, tag = 'input window, operand 1, single buffered']
    #allocation3 [shape = 's32[2]{0}', space=sflag, size = 0x8, scoped, tag = 'scoped memory for _forward_loss_impl.2']
    #allocation4 [shape = 'u8[786432]{0}', space=vmem, size = 0xc0000, scoped, tag = 'input window, operand 2']
    #allocation5 [shape = 's32[2]{0}', space=sflag, size = 0x8, scoped, tag = 'scoped memory for _forward_loss_impl.2']
    #allocation6 [shape = 'u8[3145728]{0}', space=vmem, size = 0x300000, scoped, tag = 'input window, operand 3']
    %9 = vsyncpa [#allocation3], 0
    %10 = vsyncpa [#allocation5], 0
    %s11 = scalar_lea.sflag [#allocation5], 1
    %12 = vsyncpa %s11, 0
    loop: start=0, step=1, limit=4
    $region2: #{_forward_loss_impl.2} parent=1 // loop_pre_header
      _
    $region3: #{_forward_loss_impl.2} parent=1 // loop_header
      %s14 = sphi 0, %s18
      %p15 = scmp.ge.s32.totalorder %s14, 4
      %s22 = sphi 0, %s22
      %s24 = sphi 0, %s22
      %s25 = sphi 0, %s24
      %s39 = sphi 0, %s25
      %s43 = sphi 0, %s43
      %s45 = sphi 0, %s43
      %s46 = sphi 0, %s45
      %s60 = sphi 0, %s46
      %s66 = sphi 0, %s68
      %s69 = sphi 0, %s66
      %s70 = sphi 0, %s69
      %s86 = sphi 0, %s70
      %s92 = sphi 0, %s94
      %s95 = sphi 0, %s92
      %s96 = sphi 0, %s95
      %s112 = sphi 0, %s96
      %s118 = sphi 0, %s120
      %s121 = sphi 0, %s118
      %s122 = sphi 0, %s121
      %s138 = sphi 0, %s122
    $region4: #{_forward_loss_impl.2} parent=1 // loop_header_branch
      %17 = sbr.rel (%p15) target = $region8
    $region5: #{_forward_loss_impl.2} parent=1 // loop_body
      %s19 = ssub.s32 %s14, 1
      %s20 = ssub.s32 %s14, 2
      %s21 = sadd.s32 %s14, 1
      %s23 = sadd.s32 %s22, 1
      %p26 = scmp.eq.s32.totalorder %s14, 1
      %p27 = scmp.ne.s32.totalorder %s22, %s24
      %p28 = scmp.eq.s32.totalorder %s14, 0
      %p29 = por %p27, %p28
      %p30 = scmp.ne.s32.totalorder %s22, %s24
      %p31 = scmp.eq.s32.totalorder %s19, 1
      %p32 = por %p30, %p31
      %p33 = scmp.ne.s32.totalorder %s24, %s25
      %p34 = scmp.eq.s32.totalorder %s19, 0
      %p35 = por %p33, %p34
      %p36 = scmp.ne.s32.totalorder %s24, %s25
      %p37 = scmp.eq.s32.totalorder %s20, 1
      %p38 = por %p36, %p37
      %p40 = scmp.ne.s32.totalorder %s25, %s39
      %p41 = scmp.eq.s32.totalorder %s20, 0
      %p42 = por %p40, %p41
      %s44 = sadd.s32 %s43, 1
      %p47 = scmp.eq.s32.totalorder %s14, 1
      %p48 = scmp.ne.s32.totalorder %s43, %s45
      %p49 = scmp.eq.s32.totalorder %s14, 0
      %p50 = por %p48, %p49
      %p51 = scmp.ne.s32.totalorder %s43, %s45
      %p52 = scmp.eq.s32.totalorder %s19, 1
      %p53 = por %p51, %p52
      %p54 = scmp.ne.s32.totalorder %s45, %s46
      %p55 = scmp.eq.s32.totalorder %s19, 0
      %p56 = por %p54, %p55
      %p57 = scmp.ne.s32.totalorder %s45, %s46
      %p58 = scmp.eq.s32.totalorder %s20, 1
      %p59 = por %p57, %p58
      %p61 = scmp.ne.s32.totalorder %s46, %s60
      %p62 = scmp.eq.s32.totalorder %s20, 0
      %p63 = por %p61, %p62
      %s64 = ssub.s32 %s14, %s21
      %p65 = scmp.eq.s32.totalorder %s64, 0
      %s67 = sadd.s32 %s66, 1
      %s68 = scalar_select %p65, %s66, %s67
      %p71 = pneg %p65
      %p72 = scmp.eq.s32.totalorder %s14, 1
      %p73 = por %p71, %p72
      %p74 = scmp.ne.s32.totalorder %s66, %s69
      %p75 = scmp.eq.s32.totalorder %s14, 0
      %p76 = por %p74, %p75
      %p77 = scmp.ne.s32.totalorder %s66, %s69
      %p78 = scmp.eq.s32.totalorder %s19, 1
      %p79 = por %p77, %p78
      %p80 = scmp.ne.s32.totalorder %s69, %s70
      %p81 = scmp.eq.s32.totalorder %s19, 0
      %p82 = por %p80, %p81
      %p83 = scmp.ne.s32.totalorder %s69, %s70
      %p84 = scmp.eq.s32.totalorder %s20, 1
      %p85 = por %p83, %p84
      %p87 = scmp.ne.s32.totalorder %s70, %s86
      %p88 = scmp.eq.s32.totalorder %s20, 0
      %p89 = por %p87, %p88
      %s90 = ssub.s32 %s14, %s21
      %p91 = scmp.eq.s32.totalorder %s90, 0
      %s93 = sadd.s32 %s92, 1
      %s94 = scalar_select %p91, %s92, %s93
      %p97 = pneg %p91
      %p98 = scmp.eq.s32.totalorder %s14, 1
      %p99 = por %p97, %p98
      %p100 = scmp.ne.s32.totalorder %s92, %s95
      %p101 = scmp.eq.s32.totalorder %s14, 0
      %p102 = por %p100, %p101
      %p103 = scmp.ne.s32.totalorder %s92, %s95
      %p104 = scmp.eq.s32.totalorder %s19, 1
      %p105 = por %p103, %p104
      %p106 = scmp.ne.s32.totalorder %s95, %s96
      %p107 = scmp.eq.s32.totalorder %s19, 0
      %p108 = por %p106, %p107
      %p109 = scmp.ne.s32.totalorder %s95, %s96
      %p110 = scmp.eq.s32.totalorder %s20, 1
      %p111 = por %p109, %p110
      %p113 = scmp.ne.s32.totalorder %s96, %s112
      %p114 = scmp.eq.s32.totalorder %s20, 0
      %p115 = por %p113, %p114
      %s116 = ssub.s32 %s14, %s21
      %p117 = scmp.eq.s32.totalorder %s116, 0
      %s119 = sadd.s32 %s118, 1
      %s120 = scalar_select %p117, %s118, %s119
      %p123 = pneg %p117
      %p124 = scmp.eq.s32.totalorder %s14, 1
      %p125 = por %p123, %p124
      %p126 = scmp.ne.s32.totalorder %s118, %s121
      %p127 = scmp.eq.s32.totalorder %s14, 0
      %p128 = por %p126, %p127
      %p129 = scmp.ne.s32.totalorder %s118, %s121
      %p130 = scmp.eq.s32.totalorder %s19, 1
      %p131 = por %p129, %p130
      %p132 = scmp.ne.s32.totalorder %s121, %s122
      %p133 = scmp.eq.s32.totalorder %s19, 0
      %p134 = por %p132, %p133
      %p135 = scmp.ne.s32.totalorder %s121, %s122
      %p136 = scmp.eq.s32.totalorder %s20, 1
      %p137 = por %p135, %p136
      %p139 = scmp.ne.s32.totalorder %s122, %s138
      %p140 = scmp.eq.s32.totalorder %s20, 0
      %p141 = por %p139, %p140
      %p142 = scmp.le.s32.totalorder 1, %s14
      %p143 = scmp.lt.s32.totalorder %s14, 3
      %p144 = pnand %p142, %p143
      %p145 = pneg %p144
      // Predicated region
      $region9: #{_forward_loss_impl.2} parent=5 // pred_check
        _
      $region10: #{_forward_loss_impl.2} parent=5 // pred_check_branch
        %147 = sbr.rel (%p144) target = $region12
      $region11: #{_forward_loss_impl.2} parent=5 // pred_region
        %s148 = ssub.s32 %s14, 1
        // Predicated region
        $region13: #{_forward_loss_impl.2} parent=11 // pred_check
          %p149 = pneg %p35
        $region14: #{_forward_loss_impl.2} parent=11 // pred_check_branch
          %151 = sbr.rel (%p149) target = $region16
        $region15: #{_forward_loss_impl.2} parent=11 // pred_region
          _
        $region16: #{_forward_loss_impl.2} parent=11 // pred_fallthru
          _
        // Predicated region
        $region17: #{_forward_loss_impl.2} parent=11 // pred_check
          %p152 = pneg %p56
        $region18: #{_forward_loss_impl.2} parent=11 // pred_check_branch
          %154 = sbr.rel (%p152) target = $region20
        $region19: #{_forward_loss_impl.2} parent=11 // pred_region
          %s156 = ssub.s32 64, 64
          %157 = vsyncadd [#allocation3], %s156
          %s159 = sshll.u32 [#allocation2], 4
          %s160 = int_to_ptr.vmem [resolvable:$true] %s159
          %162 = dma.hbm_to_vmem [thread:$0]  %s1, 64, %s160, [#allocation3]
        $region20: #{_forward_loss_impl.2} parent=11 // pred_fallthru
          _
      $region12: #{_forward_loss_impl.2} parent=5 // pred_fallthru
        _
      %p163 = scmp.lt.s32.totalorder %s14, 2
      // Predicated region
      $region21: #{_forward_loss_impl.2} parent=5 // pred_check
        %p164 = pneg %p163
      $region22: #{_forward_loss_impl.2} parent=5 // pred_check_branch
        %166 = sbr.rel (%p164) target = $region24
      $region23: #{_forward_loss_impl.2} parent=5 // pred_region
        // Predicated region
        $region25: #{_forward_loss_impl.2} parent=23 // pred_check
          %p167 = pneg %p76
        $region26: #{_forward_loss_impl.2} parent=23 // pred_check_branch
          %169 = sbr.rel (%p167) target = $region28
        $region27: #{_forward_loss_impl.2} parent=23 // pred_region
          %s170 = sand.u32 %s14, 1
          %s171 = scalar_lea.sflag [#allocation5], %s170
          %s172 = sand.u32 %s66, 1
          %s173 = smul.addr %s172, 768
          %s174 = scalar_lea.vmem [#allocation4], %s173
          %s175 = smul.u32 12, %s14
          %s177 = ssub.s32 12288, 12288
          %178 = vsyncadd %s171, %s177
          %s179 = smul.addr %s175, 64
          %s180 = scalar_lea.hbm %s2, %s179
          %s181 = sshll.u32 %s174, 4
          %s182 = int_to_ptr.vmem [resolvable:$true] %s181
          %187 = dma.hbm_to_vmem [thread:$0]  %s180, 12288, %s182, %s171, 1536, 768, 48
        $region28: #{_forward_loss_impl.2} parent=23 // pred_fallthru
          _
        // Predicated region
        $region29: #{_forward_loss_impl.2} parent=23 // pred_check
          %p188 = pneg %p102
        $region30: #{_forward_loss_impl.2} parent=23 // pred_check_branch
          %190 = sbr.rel (%p188) target = $region32
        $region31: #{_forward_loss_impl.2} parent=23 // pred_region
          %s191 = sand.u32 %s14, 1
          %s192 = scalar_lea.sflag [#allocation5], %s191
          %s193 = sand.u32 %s92, 1
          %s194 = smul.addr %s193, 3072
          %s195 = scalar_lea.vmem [#allocation6], %s194
          %s196 = smul.u32 12, %s14
          %s198 = ssub.s32 49152, 49152
          %199 = vsyncadd %s192, %s198
          %s200 = smul.addr %s196, 64
          %s201 = scalar_lea.hbm %s3, %s200
          %s202 = sshll.u32 %s195, 4
          %s203 = int_to_ptr.vmem [resolvable:$true] %s202
          %208 = dma.hbm_to_vmem [thread:$0]  %s201, 49152, %s203, %s192, 1536, 768, 48
        $region32: #{_forward_loss_impl.2} parent=23 // pred_fallthru
          _
      $region24: #{_forward_loss_impl.2} parent=5 // pred_fallthru
        _
      %p209 = scmp.le.s32.totalorder 1, %s14
      %p210 = scmp.lt.s32.totalorder %s14, 3
      %p211 = pnand %p209, %p210
      %p212 = pneg %p211
      // Predicated region
      $region33: #{_forward_loss_impl.2} parent=5 // pred_check
        _
      $region34: #{_forward_loss_impl.2} parent=5 // pred_check_branch
        %214 = sbr.rel (%p211) target = $region36
      $region35: #{_forward_loss_impl.2} parent=5 // pred_region
        %s215 = ssub.s32 %s14, 1
        // Predicated region
        $region37: #{_forward_loss_impl.2} parent=35 // pred_check
          %p216 = pneg %p56
        $region38: #{_forward_loss_impl.2} parent=35 // pred_check_branch
          %218 = sbr.rel (%p216) target = $region40
        $region39: #{_forward_loss_impl.2} parent=35 // pred_region
          %219 = dma.done [#allocation3], 64
        $region40: #{_forward_loss_impl.2} parent=35 // pred_fallthru
          _
        %s220 = sand.u32 %s19, 1
        %s221 = scalar_lea.sflag [#allocation5], %s220
        %s222 = sand.u32 %s69, 1
        %s223 = smul.addr %s222, 768
        %s224 = scalar_lea.vmem [#allocation4], %s223
        // Predicated region
        $region41: #{_forward_loss_impl.2} parent=35 // pred_check
          %p225 = pneg %p82
        $region42: #{_forward_loss_impl.2} parent=35 // pred_check_branch
          %227 = sbr.rel (%p225) target = $region44
        $region43: #{_forward_loss_impl.2} parent=35 // pred_region
          %228 = dma.done %s221, 12288
        $region44: #{_forward_loss_impl.2} parent=35 // pred_fallthru
          _
        %s229 = sand.u32 %s19, 1
        %s230 = scalar_lea.sflag [#allocation5], %s229
        %s231 = sand.u32 %s95, 1
        %s232 = smul.addr %s231, 3072
        %s233 = scalar_lea.vmem [#allocation6], %s232
        // Predicated region
        $region45: #{_forward_loss_impl.2} parent=35 // pred_check
          %p234 = pneg %p108
        $region46: #{_forward_loss_impl.2} parent=35 // pred_check_branch
          %236 = sbr.rel (%p234) target = $region48
        $region47: #{_forward_loss_impl.2} parent=35 // pred_region
          %237 = dma.done %s230, 49152
        $region48: #{_forward_loss_impl.2} parent=35 // pred_fallthru
          _
        %p238 = pneg %p35
        %p239 = pneg %p32
        %p240 = pneg %p56
        %p241 = pneg %p53
        %s242 = sand.u32 %s19, 1
        %s243 = scalar_lea.sflag [#allocation5], %s242
        %s244 = sand.u32 %s69, 1
        %s245 = smul.addr %s244, 768
        %s246 = scalar_lea.vmem [#allocation4], %s245
        %p247 = pneg %p82
        %p248 = pneg %p79
        %s249 = sand.u32 %s19, 1
        %s250 = scalar_lea.sflag [#allocation5], %s249
        %s251 = sand.u32 %s95, 1
        %s252 = smul.addr %s251, 3072
        %s253 = scalar_lea.vmem [#allocation6], %s252
        %p254 = pneg %p108
        %p255 = pneg %p105
        %p256 = pneg %p134
        %p257 = pneg %p131
        %s258 = smul.u32 12, %s19
        %p259 = scmp.lt.s32.totalorder %s258, 23
        %s260 = scalar_select %p259, %s258, 23
        %s261 = scalar_lea.vmem %s4, %s260
        %s262 = smul.u32 12, %s19
        %s263 = smul.u32 12, %s19
        %s264 = smul.u32 12, %s19
        %p265 = scmp.lt.s32.totalorder %s264, 23
        %s266 = scalar_select %p265, %s264, 23
        %s267 = scalar_lea.vmem %s4, %s266
        %s268 = smul.u32 12, %s19
        %v270 = vld [vmem:[%s0] sm:$0x1]
        %v271 = vpack.c.bf16 %v270, %v270
        %v272 = vld [vmem:[#allocation2] sm:$0xf]
        %v273 = vsub.f32 0.0, %v272
        %v274 = vmul.f32 %v273, 1.442695
        %v275 = vpow.pop %v274
        %v276 = vadd.f32 %v275, 1.0
        %v277 = vrcp.pop %v276
        %v278 = vmul.f32 1.0, %v277
        %v279 = vld [vmem:[%s224] sm:$0xff]
        %v280 = vld [vmem:[%s224 + $0x8] sm:$0xff]
        %v281 = vld [vmem:[%s224 + $0x10] sm:$0xff]
        %v282 = vld [vmem:[%s224 + $0x18] sm:$0xff]
        %v283 = vld [vmem:[%s224 + $0x20] sm:$0xff]
        %v284 = vld [vmem:[%s224 + $0x28] sm:$0xff]
        %v285 = vld [vmem:[%s224 + $0x30] sm:$0xff]
        %v286 = vld [vmem:[%s224 + $0x38] sm:$0xff]
        %v287 = vld [vmem:[%s224 + $0x40] sm:$0xff]
        %v288 = vld [vmem:[%s224 + $0x48] sm:$0xff]
        %v289 = vld [vmem:[%s224 + $0x50] sm:$0xff]
        %v290 = vld [vmem:[%s224 + $0x58] sm:$0xff]
        %v291 = vld [vmem:[%s224 + $0x60] sm:$0xff]
        %v292 = vld [vmem:[%s224 + $0x68] sm:$0xff]
        %v293 = vld [vmem:[%s224 + $0x70] sm:$0xff]
        %v294 = vld [vmem:[%s224 + $0x78] sm:$0xff]
        %v295 = vld [vmem:[%s224 + $0x80] sm:$0xff]
        %v296 = vld [vmem:[%s224 + $0x88] sm:$0xff]
        %v297 = vld [vmem:[%s224 + $0x90] sm:$0xff]
        %v298 = vld [vmem:[%s224 + $0x98] sm:$0xff]
        %v299 = vld [vmem:[%s224 + $0xa0] sm:$0xff]
        %v300 = vld [vmem:[%s224 + $0xa8] sm:$0xff]
        %v301 = vld [vmem:[%s224 + $0xb0] sm:$0xff]
        %v302 = vld [vmem:[%s224 + $0xb8] sm:$0xff]
        %v303 = vld [vmem:[%s224 + $0xc0] sm:$0xff]
        %v304 = vld [vmem:[%s224 + $0xc8] sm:$0xff]
        %v305 = vld [vmem:[%s224 + $0xd0] sm:$0xff]
        %v306 = vld [vmem:[%s224 + $0xd8] sm:$0xff]
        %v307 = vld [vmem:[%s224 + $0xe0] sm:$0xff]
        %v308 = vld [vmem:[%s224 + $0xe8] sm:$0xff]
        %v309 = vld [vmem:[%s224 + $0xf0] sm:$0xff]
        %v310 = vld [vmem:[%s224 + $0xf8] sm:$0xff]
        %v311 = vld [vmem:[%s224 + $0x100] sm:$0xff]
        %v312 = vld [vmem:[%s224 + $0x108] sm:$0xff]
        %v313 = vld [vmem:[%s224 + $0x110] sm:$0xff]
        %v314 = vld [vmem:[%s224 + $0x118] sm:$0xff]
        %v315 = vld [vmem:[%s224 + $0x120] sm:$0xff]
        %v316 = vld [vmem:[%s224 + $0x128] sm:$0xff]
        %v317 = vld [vmem:[%s224 + $0x130] sm:$0xff]
        %v318 = vld [vmem:[%s224 + $0x138] sm:$0xff]
        %v319 = vld [vmem:[%s224 + $0x140] sm:$0xff]
        %v320 = vld [vmem:[%s224 + $0x148] sm:$0xff]
        %v321 = vld [vmem:[%s224 + $0x150] sm:$0xff]
        %v322 = vld [vmem:[%s224 + $0x158] sm:$0xff]
        %v323 = vld [vmem:[%s224 + $0x160] sm:$0xff]
        %v324 = vld [vmem:[%s224 + $0x168] sm:$0xff]
        %v325 = vld [vmem:[%s224 + $0x170] sm:$0xff]
        %v326 = vld [vmem:[%s224 + $0x178] sm:$0xff]
        %v327 = vld [vmem:[%s224 + $0x180] sm:$0xff]
        %v328 = vld [vmem:[%s224 + $0x188] sm:$0xff]
        %v329 = vld [vmem:[%s224 + $0x190] sm:$0xff]
        %v330 = vld [vmem:[%s224 + $0x198] sm:$0xff]
        %v331 = vld [vmem:[%s224 + $0x1a0] sm:$0xff]
        %v332 = vld [vmem:[%s224 + $0x1a8] sm:$0xff]
        %v333 = vld [vmem:[%s224 + $0x1b0] sm:$0xff]
        %v334 = vld [vmem:[%s224 + $0x1b8] sm:$0xff]
        %v335 = vld [vmem:[%s224 + $0x1c0] sm:$0xff]
        %v336 = vld [vmem:[%s224 + $0x1c8] sm:$0xff]
        %v337 = vld [vmem:[%s224 + $0x1d0] sm:$0xff]
        %v338 = vld [vmem:[%s224 + $0x1d8] sm:$0xff]
        %v339 = vld [vmem:[%s224 + $0x1e0] sm:$0xff]
        %v340 = vld [vmem:[%s224 + $0x1e8] sm:$0xff]
        %v341 = vld [vmem:[%s224 + $0x1f0] sm:$0xff]
        %v342 = vld [vmem:[%s224 + $0x1f8] sm:$0xff]
        %v343 = vld [vmem:[%s224 + $0x200] sm:$0xff]
        %v344 = vld [vmem:[%s224 + $0x208] sm:$0xff]
        %v345 = vld [vmem:[%s224 + $0x210] sm:$0xff]
        %v346 = vld [vmem:[%s224 + $0x218] sm:$0xff]
        %v347 = vld [vmem:[%s224 + $0x220] sm:$0xff]
        %v348 = vld [vmem:[%s224 + $0x228] sm:$0xff]
        %v349 = vld [vmem:[%s224 + $0x230] sm:$0xff]
        %v350 = vld [vmem:[%s224 + $0x238] sm:$0xff]
        %v351 = vld [vmem:[%s224 + $0x240] sm:$0xff]
        %v352 = vld [vmem:[%s224 + $0x248] sm:$0xff]
        %v353 = vld [vmem:[%s224 + $0x250] sm:$0xff]
        %v354 = vld [vmem:[%s224 + $0x258] sm:$0xff]
        %v355 = vld [vmem:[%s224 + $0x260] sm:$0xff]
        %v356 = vld [vmem:[%s224 + $0x268] sm:$0xff]
        %v357 = vld [vmem:[%s224 + $0x270] sm:$0xff]
        %v358 = vld [vmem:[%s224 + $0x278] sm:$0xff]
        %v359 = vld [vmem:[%s224 + $0x280] sm:$0xff]
        %v360 = vld [vmem:[%s224 + $0x288] sm:$0xff]
        %v361 = vld [vmem:[%s224 + $0x290] sm:$0xff]
        %v362 = vld [vmem:[%s224 + $0x298] sm:$0xff]
        %v363 = vld [vmem:[%s224 + $0x2a0] sm:$0xff]
        %v364 = vld [vmem:[%s224 + $0x2a8] sm:$0xff]
        %v365 = vld [vmem:[%s224 + $0x2b0] sm:$0xff]
        %v366 = vld [vmem:[%s224 + $0x2b8] sm:$0xff]
        %v367 = vld [vmem:[%s224 + $0x2c0] sm:$0xff]
        %v368 = vld [vmem:[%s224 + $0x2c8] sm:$0xff]
        %v369 = vld [vmem:[%s224 + $0x2d0] sm:$0xff]
        %v370 = vld [vmem:[%s224 + $0x2d8] sm:$0xff]
        %v371 = vld [vmem:[%s224 + $0x2e0] sm:$0xff]
        %v372 = vld [vmem:[%s224 + $0x2e8] sm:$0xff]
        %v373 = vld [vmem:[%s224 + $0x2f0] sm:$0xff]
        %v374 = vld [vmem:[%s224 + $0x2f8] sm:$0xff]
        %v376 = vlaneseq
        %v377 = vshrl.u32 %v376, 7
        %v378 = vsub.s32 0, %v377
        %v379 = vrot.slane %v278, %v378
        %v380 = vlaneseq
        %v381 = vshrl.u32 %v380, 7
        %v382 = vsub.s32 1, %v381
        %v383 = vrot.slane %v278, %v382
        %v384 = vlaneseq
        %v385 = vshrl.u32 %v384, 7
        %v386 = vsub.s32 2, %v385
        %v387 = vrot.slane %v278, %v386
        %v388 = vlaneseq
        %v389 = vshrl.u32 %v388, 7
        %v390 = vsub.s32 3, %v389
        %v391 = vrot.slane %v278, %v390
        %v396 = vpack.c.bf16 %v379, %v379
        %v397 = vpack.c.bf16 %v383, %v383
        %v398 = vpack.c.bf16 %v387, %v387
        %v399 = vpack.c.bf16 %v391, %v391
        %v400 = vld [vmem:[%s233] sm:$0xff]
        %v401 = vld [vmem:[%s233 + $0x8] sm:$0xff]
        %v402 = vld [vmem:[%s233 + $0x10] sm:$0xff]
        %v403 = vld [vmem:[%s233 + $0x18] sm:$0xff]
        %v404 = vld [vmem:[%s233 + $0x20] sm:$0xff]
        %v405 = vld [vmem:[%s233 + $0x28] sm:$0xff]
        %v406 = vld [vmem:[%s233 + $0x30] sm:$0xff]
        %v407 = vld [vmem:[%s233 + $0x38] sm:$0xff]
        %v408 = vld [vmem:[%s233 + $0x40] sm:$0xff]
        %v409 = vld [vmem:[%s233 + $0x48] sm:$0xff]
        %v410 = vld [vmem:[%s233 + $0x50] sm:$0xff]
        %v411 = vld [vmem:[%s233 + $0x58] sm:$0xff]
        %v412 = vld [vmem:[%s233 + $0x60] sm:$0xff]
        %v413 = vld [vmem:[%s233 + $0x68] sm:$0xff]
        %v414 = vld [vmem:[%s233 + $0x70] sm:$0xff]
        %v415 = vld [vmem:[%s233 + $0x78] sm:$0xff]
        %v416 = vld [vmem:[%s233 + $0x80] sm:$0xff]
        %v417 = vld [vmem:[%s233 + $0x88] sm:$0xff]
        %v418 = vld [vmem:[%s233 + $0x90] sm:$0xff]
        %v419 = vld [vmem:[%s233 + $0x98] sm:$0xff]
        %v420 = vld [vmem:[%s233 + $0xa0] sm:$0xff]
        %v421 = vld [vmem:[%s233 + $0xa8] sm:$0xff]
        %v422 = vld [vmem:[%s233 + $0xb0] sm:$0xff]
        %v423 = vld [vmem:[%s233 + $0xb8] sm:$0xff]
        %v424 = vld [vmem:[%s233 + $0xc0] sm:$0xff]
        %v425 = vld [vmem:[%s233 + $0xc8] sm:$0xff]
        %v426 = vld [vmem:[%s233 + $0xd0] sm:$0xff]
        %v427 = vld [vmem:[%s233 + $0xd8] sm:$0xff]
        %v428 = vld [vmem:[%s233 + $0xe0] sm:$0xff]
        %v429 = vld [vmem:[%s233 + $0xe8] sm:$0xff]
        %v430 = vld [vmem:[%s233 + $0xf0] sm:$0xff]
        %v431 = vld [vmem:[%s233 + $0xf8] sm:$0xff]
        %v432 = vld [vmem:[%s233 + $0x100] sm:$0xff]
        %v433 = vld [vmem:[%s233 + $0x108] sm:$0xff]
        %v434 = vld [vmem:[%s233 + $0x110] sm:$0xff]
        %v435 = vld [vmem:[%s233 + $0x118] sm:$0xff]
        %v436 = vld [vmem:[%s233 + $0x120] sm:$0xff]
        %v437 = vld [vmem:[%s233 + $0x128] sm:$0xff]
        %v438 = vld [vmem:[%s233 + $0x130] sm:$0xff]
        %v439 = vld [vmem:[%s233 + $0x138] sm:$0xff]
        %v440 = vld [vmem:[%s233 + $0x140] sm:$0xff]
        %v441 = vld [vmem:[%s233 + $0x148] sm:$0xff]
        %v442 = vld [vmem:[%s233 + $0x150] sm:$0xff]
        %v443 = vld [vmem:[%s233 + $0x158] sm:$0xff]
        %v444 = vld [vmem:[%s233 + $0x160] sm:$0xff]
        %v445 = vld [vmem:[%s233 + $0x168] sm:$0xff]
        %v446 = vld [vmem:[%s233 + $0x170] sm:$0xff]
        %v447 = vld [vmem:[%s233 + $0x178] sm:$0xff]
        %v448 = vld [vmem:[%s233 + $0x180] sm:$0xff]
        %v449 = vld [vmem:[%s233 + $0x188] sm:$0xff]
        %v450 = vld [vmem:[%s233 + $0x190] sm:$0xff]
        %v451 = vld [vmem:[%s233 + $0x198] sm:$0xff]
        %v452 = vld [vmem:[%s233 + $0x1a0] sm:$0xff]
        %v453 = vld [vmem:[%s233 + $0x1a8] sm:$0xff]
        %v454 = vld [vmem:[%s233 + $0x1b0] sm:$0xff]
        %v455 = vld [vmem:[%s233 + $0x1b8] sm:$0xff]
        %v456 = vld [vmem:[%s233 + $0x1c0] sm:$0xff]
        %v457 = vld [vmem:[%s233 + $0x1c8] sm:$0xff]
        %v458 = vld [vmem:[%s233 + $0x1d0] sm:$0xff]
        %v459 = vld [vmem:[%s233 + $0x1d8] sm:$0xff]
        %v460 = vld [vmem:[%s233 + $0x1e0] sm:$0xff]
        %v461 = vld [vmem:[%s233 + $0x1e8] sm:$0xff]
        %v462 = vld [vmem:[%s233 + $0x1f0] sm:$0xff]
        %v463 = vld [vmem:[%s233 + $0x1f8] sm:$0xff]
        %v464 = vld [vmem:[%s233 + $0x200] sm:$0xff]
        %v465 = vld [vmem:[%s233 + $0x208] sm:$0xff]
        %v466 = vld [vmem:[%s233 + $0x210] sm:$0xff]
        %v467 = vld [vmem:[%s233 + $0x218] sm:$0xff]
        %v468 = vld [vmem:[%s233 + $0x220] sm:$0xff]
        %v469 = vld [vmem:[%s233 + $0x228] sm:$0xff]
        %v470 = vld [vmem:[%s233 + $0x230] sm:$0xff]
        %v471 = vld [vmem:[%s233 + $0x238] sm:$0xff]
        %v472 = vld [vmem:[%s233 + $0x240] sm:$0xff]
        %v473 = vld [vmem:[%s233 + $0x248] sm:$0xff]
        %v474 = vld [vmem:[%s233 + $0x250] sm:$0xff]
        %v475 = vld [vmem:[%s233 + $0x258] sm:$0xff]
        %v476 = vld [vmem:[%s233 + $0x260] sm:$0xff]
        %v477 = vld [vmem:[%s233 + $0x268] sm:$0xff]
        %v478 = vld [vmem:[%s233 + $0x270] sm:$0xff]
        %v479 = vld [vmem:[%s233 + $0x278] sm:$0xff]
        %v480 = vld [vmem:[%s233 + $0x280] sm:$0xff]
        %v481 = vld [vmem:[%s233 + $0x288] sm:$0xff]
        %v482 = vld [vmem:[%s233 + $0x290] sm:$0xff]
        %v483 = vld [vmem:[%s233 + $0x298] sm:$0xff]
        %v484 = vld [vmem:[%s233 + $0x2a0] sm:$0xff]
        %v485 = vld [vmem:[%s233 + $0x2a8] sm:$0xff]
        %v486 = vld [vmem:[%s233 + $0x2b0] sm:$0xff]
        %v487 = vld [vmem:[%s233 + $0x2b8] sm:$0xff]
        %v488 = vld [vmem:[%s233 + $0x2c0] sm:$0xff]
        %v489 = vld [vmem:[%s233 + $0x2c8] sm:$0xff]
        %v490 = vld [vmem:[%s233 + $0x2d0] sm:$0xff]
        %v491 = vld [vmem:[%s233 + $0x2d8] sm:$0xff]
        %v492 = vld [vmem:[%s233 + $0x2e0] sm:$0xff]
        %v493 = vld [vmem:[%s233 + $0x2e8] sm:$0xff]
        %v494 = vld [vmem:[%s233 + $0x2f0] sm:$0xff]
        %v495 = vld [vmem:[%s233 + $0x2f8] sm:$0xff]
        %v496 = vld [vmem:[%s233 + $0x300] sm:$0xff]
        %v497 = vld [vmem:[%s233 + $0x308] sm:$0xff]
        %v498 = vld [vmem:[%s233 + $0x310] sm:$0xff]
        %v499 = vld [vmem:[%s233 + $0x318] sm:$0xff]
        %v500 = vld [vmem:[%s233 + $0x320] sm:$0xff]
        %v501 = vld [vmem:[%s233 + $0x328] sm:$0xff]
        %v502 = vld [vmem:[%s233 + $0x330] sm:$0xff]
        %v503 = vld [vmem:[%s233 + $0x338] sm:$0xff]
        %v504 = vld [vmem:[%s233 + $0x340] sm:$0xff]
        %v505 = vld [vmem:[%s233 + $0x348] sm:$0xff]
        %v506 = vld [vmem:[%s233 + $0x350] sm:$0xff]
        %v507 = vld [vmem:[%s233 + $0x358] sm:$0xff]
        %v508 = vld [vmem:[%s233 + $0x360] sm:$0xff]
        %v509 = vld [vmem:[%s233 + $0x368] sm:$0xff]
        %v510 = vld [vmem:[%s233 + $0x370] sm:$0xff]
        %v511 = vld [vmem:[%s233 + $0x378] sm:$0xff]
        %v512 = vld [vmem:[%s233 + $0x380] sm:$0xff]
        %v513 = vld [vmem:[%s233 + $0x388] sm:$0xff]
        %v514 = vld [vmem:[%s233 + $0x390] sm:$0xff]
        %v515 = vld [vmem:[%s233 + $0x398] sm:$0xff]
        %v516 = vld [vmem:[%s233 + $0x3a0] sm:$0xff]
        %v517 = vld [vmem:[%s233 + $0x3a8] sm:$0xff]
        %v518 = vld [vmem:[%s233 + $0x3b0] sm:$0xff]
        %v519 = vld [vmem:[%s233 + $0x3b8] sm:$0xff]
        %v520 = vld [vmem:[%s233 + $0x3c0] sm:$0xff]
        %v521 = vld [vmem:[%s233 + $0x3c8] sm:$0xff]
        %v522 = vld [vmem:[%s233 + $0x3d0] sm:$0xff]
        %v523 = vld [vmem:[%s233 + $0x3d8] sm:$0xff]
        %v524 = vld [vmem:[%s233 + $0x3e0] sm:$0xff]
        %v525 = vld [vmem:[%s233 + $0x3e8] sm:$0xff]
        %v526 = vld [vmem:[%s233 + $0x3f0] sm:$0xff]
        %v527 = vld [vmem:[%s233 + $0x3f8] sm:$0xff]
        %v528 = vld [vmem:[%s233 + $0x400] sm:$0xff]
        %v529 = vld [vmem:[%s233 + $0x408] sm:$0xff]
        %v530 = vld [vmem:[%s233 + $0x410] sm:$0xff]
        %v531 = vld [vmem:[%s233 + $0x418] sm:$0xff]
        %v532 = vld [vmem:[%s233 + $0x420] sm:$0xff]
        %v533 = vld [vmem:[%s233 + $0x428] sm:$0xff]
        %v534 = vld [vmem:[%s233 + $0x430] sm:$0xff]
        %v535 = vld [vmem:[%s233 + $0x438] sm:$0xff]
        %v536 = vld [vmem:[%s233 + $0x440] sm:$0xff]
        %v537 = vld [vmem:[%s233 + $0x448] sm:$0xff]
        %v538 = vld [vmem:[%s233 + $0x450] sm:$0xff]
        %v539 = vld [vmem:[%s233 + $0x458] sm:$0xff]
        %v540 = vld [vmem:[%s233 + $0x460] sm:$0xff]
        %v541 = vld [vmem:[%s233 + $0x468] sm:$0xff]
        %v542 = vld [vmem:[%s233 + $0x470] sm:$0xff]
        %v543 = vld [vmem:[%s233 + $0x478] sm:$0xff]
        %v544 = vld [vmem:[%s233 + $0x480] sm:$0xff]
        %v545 = vld [vmem:[%s233 + $0x488] sm:$0xff]
        %v546 = vld [vmem:[%s233 + $0x490] sm:$0xff]
        %v547 = vld [vmem:[%s233 + $0x498] sm:$0xff]
        %v548 = vld [vmem:[%s233 + $0x4a0] sm:$0xff]
        %v549 = vld [vmem:[%s233 + $0x4a8] sm:$0xff]
        %v550 = vld [vmem:[%s233 + $0x4b0] sm:$0xff]
        %v551 = vld [vmem:[%s233 + $0x4b8] sm:$0xff]
        %v552 = vld [vmem:[%s233 + $0x4c0] sm:$0xff]
        %v553 = vld [vmem:[%s233 + $0x4c8] sm:$0xff]
        %v554 = vld [vmem:[%s233 + $0x4d0] sm:$0xff]
        %v555 = vld [vmem:[%s233 + $0x4d8] sm:$0xff]
        %v556 = vld [vmem:[%s233 + $0x4e0] sm:$0xff]
        %v557 = vld [vmem:[%s233 + $0x4e8] sm:$0xff]
        %v558 = vld [vmem:[%s233 + $0x4f0] sm:$0xff]
        %v559 = vld [vmem:[%s233 + $0x4f8] sm:$0xff]
        %v560 = vld [vmem:[%s233 + $0x500] sm:$0xff]
        %v561 = vld [vmem:[%s233 + $0x508] sm:$0xff]
        %v562 = vld [vmem:[%s233 + $0x510] sm:$0xff]
        %v563 = vld [vmem:[%s233 + $0x518] sm:$0xff]
        %v564 = vld [vmem:[%s233 + $0x520] sm:$0xff]
        %v565 = vld [vmem:[%s233 + $0x528] sm:$0xff]
        %v566 = vld [vmem:[%s233 + $0x530] sm:$0xff]
        %v567 = vld [vmem:[%s233 + $0x538] sm:$0xff]
        %v568 = vld [vmem:[%s233 + $0x540] sm:$0xff]
        %v569 = vld [vmem:[%s233 + $0x548] sm:$0xff]
        %v570 = vld [vmem:[%s233 + $0x550] sm:$0xff]
        %v571 = vld [vmem:[%s233 + $0x558] sm:$0xff]
        %v572 = vld [vmem:[%s233 + $0x560] sm:$0xff]
        %v573 = vld [vmem:[%s233 + $0x568] sm:$0xff]
        %v574 = vld [vmem:[%s233 + $0x570] sm:$0xff]
        %v575 = vld [vmem:[%s233 + $0x578] sm:$0xff]
        %v576 = vld [vmem:[%s233 + $0x580] sm:$0xff]
        %v577 = vld [vmem:[%s233 + $0x588] sm:$0xff]
        %v578 = vld [vmem:[%s233 + $0x590] sm:$0xff]
        %v579 = vld [vmem:[%s233 + $0x598] sm:$0xff]
        %v580 = vld [vmem:[%s233 + $0x5a0] sm:$0xff]
        %v581 = vld [vmem:[%s233 + $0x5a8] sm:$0xff]
        %v582 = vld [vmem:[%s233 + $0x5b0] sm:$0xff]
        %v583 = vld [vmem:[%s233 + $0x5b8] sm:$0xff]
        %v584 = vld [vmem:[%s233 + $0x5c0] sm:$0xff]
        %v585 = vld [vmem:[%s233 + $0x5c8] sm:$0xff]
        %v586 = vld [vmem:[%s233 + $0x5d0] sm:$0xff]
        %v587 = vld [vmem:[%s233 + $0x5d8] sm:$0xff]
        %v588 = vld [vmem:[%s233 + $0x5e0] sm:$0xff]
        %v589 = vld [vmem:[%s233 + $0x5e8] sm:$0xff]
        %v590 = vld [vmem:[%s233 + $0x5f0] sm:$0xff]
        %v591 = vld [vmem:[%s233 + $0x5f8] sm:$0xff]
        %v592 = vld [vmem:[%s233 + $0x600] sm:$0xff]
        %v593 = vld [vmem:[%s233 + $0x608] sm:$0xff]
        %v594 = vld [vmem:[%s233 + $0x610] sm:$0xff]
        %v595 = vld [vmem:[%s233 + $0x618] sm:$0xff]
        %v596 = vld [vmem:[%s233 + $0x620] sm:$0xff]
        %v597 = vld [vmem:[%s233 + $0x628] sm:$0xff]
        %v598 = vld [vmem:[%s233 + $0x630] sm:$0xff]
        %v599 = vld [vmem:[%s233 + $0x638] sm:$0xff]
        %v600 = vld [vmem:[%s233 + $0x640] sm:$0xff]
        %v601 = vld [vmem:[%s233 + $0x648] sm:$0xff]
        %v602 = vld [vmem:[%s233 + $0x650] sm:$0xff]
        %v603 = vld [vmem:[%s233 + $0x658] sm:$0xff]
        %v604 = vld [vmem:[%s233 + $0x660] sm:$0xff]
        %v605 = vld [vmem:[%s233 + $0x668] sm:$0xff]
        %v606 = vld [vmem:[%s233 + $0x670] sm:$0xff]
        %v607 = vld [vmem:[%s233 + $0x678] sm:$0xff]
        %v608 = vld [vmem:[%s233 + $0x680] sm:$0xff]
        %v609 = vld [vmem:[%s233 + $0x688] sm:$0xff]
        %v610 = vld [vmem:[%s233 + $0x690] sm:$0xff]
        %v611 = vld [vmem:[%s233 + $0x698] sm:$0xff]
        %v612 = vld [vmem:[%s233 + $0x6a0] sm:$0xff]
        %v613 = vld [vmem:[%s233 + $0x6a8] sm:$0xff]
        %v614 = vld [vmem:[%s233 + $0x6b0] sm:$0xff]
        %v615 = vld [vmem:[%s233 + $0x6b8] sm:$0xff]
        %v616 = vld [vmem:[%s233 + $0x6c0] sm:$0xff]
        %v617 = vld [vmem:[%s233 + $0x6c8] sm:$0xff]
        %v618 = vld [vmem:[%s233 + $0x6d0] sm:$0xff]
        %v619 = vld [vmem:[%s233 + $0x6d8] sm:$0xff]
        %v620 = vld [vmem:[%s233 + $0x6e0] sm:$0xff]
        %v621 = vld [vmem:[%s233 + $0x6e8] sm:$0xff]
        %v622 = vld [vmem:[%s233 + $0x6f0] sm:$0xff]
        %v623 = vld [vmem:[%s233 + $0x6f8] sm:$0xff]
        %v624 = vld [vmem:[%s233 + $0x700] sm:$0xff]
        %v625 = vld [vmem:[%s233 + $0x708] sm:$0xff]
        %v626 = vld [vmem:[%s233 + $0x710] sm:$0xff]
        %v627 = vld [vmem:[%s233 + $0x718] sm:$0xff]
        %v628 = vld [vmem:[%s233 + $0x720] sm:$0xff]
        %v629 = vld [vmem:[%s233 + $0x728] sm:$0xff]
        %v630 = vld [vmem:[%s233 + $0x730] sm:$0xff]
        %v631 = vld [vmem:[%s233 + $0x738] sm:$0xff]
        %v632 = vld [vmem:[%s233 + $0x740] sm:$0xff]
        %v633 = vld [vmem:[%s233 + $0x748] sm:$0xff]
        %v634 = vld [vmem:[%s233 + $0x750] sm:$0xff]
        %v635 = vld [vmem:[%s233 + $0x758] sm:$0xff]
        %v636 = vld [vmem:[%s233 + $0x760] sm:$0xff]
        %v637 = vld [vmem:[%s233 + $0x768] sm:$0xff]
        %v638 = vld [vmem:[%s233 + $0x770] sm:$0xff]
        %v639 = vld [vmem:[%s233 + $0x778] sm:$0xff]
        %v640 = vld [vmem:[%s233 + $0x780] sm:$0xff]
        %v641 = vld [vmem:[%s233 + $0x788] sm:$0xff]
        %v642 = vld [vmem:[%s233 + $0x790] sm:$0xff]
        %v643 = vld [vmem:[%s233 + $0x798] sm:$0xff]
        %v644 = vld [vmem:[%s233 + $0x7a0] sm:$0xff]
        %v645 = vld [vmem:[%s233 + $0x7a8] sm:$0xff]
        %v646 = vld [vmem:[%s233 + $0x7b0] sm:$0xff]
        %v647 = vld [vmem:[%s233 + $0x7b8] sm:$0xff]
        %v648 = vld [vmem:[%s233 + $0x7c0] sm:$0xff]
        %v649 = vld [vmem:[%s233 + $0x7c8] sm:$0xff]
        %v650 = vld [vmem:[%s233 + $0x7d0] sm:$0xff]
        %v651 = vld [vmem:[%s233 + $0x7d8] sm:$0xff]
        %v652 = vld [vmem:[%s233 + $0x7e0] sm:$0xff]
        %v653 = vld [vmem:[%s233 + $0x7e8] sm:$0xff]
        %v654 = vld [vmem:[%s233 + $0x7f0] sm:$0xff]
        %v655 = vld [vmem:[%s233 + $0x7f8] sm:$0xff]
        %v656 = vld [vmem:[%s233 + $0x800] sm:$0xff]
        %v657 = vld [vmem:[%s233 + $0x808] sm:$0xff]
        %v658 = vld [vmem:[%s233 + $0x810] sm:$0xff]
        %v659 = vld [vmem:[%s233 + $0x818] sm:$0xff]
        %v660 = vld [vmem:[%s233 + $0x820] sm:$0xff]
        %v661 = vld [vmem:[%s233 + $0x828] sm:$0xff]
        %v662 = vld [vmem:[%s233 + $0x830] sm:$0xff]
        %v663 = vld [vmem:[%s233 + $0x838] sm:$0xff]
        %v664 = vld [vmem:[%s233 + $0x840] sm:$0xff]
        %v665 = vld [vmem:[%s233 + $0x848] sm:$0xff]
        %v666 = vld [vmem:[%s233 + $0x850] sm:$0xff]
        %v667 = vld [vmem:[%s233 + $0x858] sm:$0xff]
        %v668 = vld [vmem:[%s233 + $0x860] sm:$0xff]
        %v669 = vld [vmem:[%s233 + $0x868] sm:$0xff]
        %v670 = vld [vmem:[%s233 + $0x870] sm:$0xff]
        %v671 = vld [vmem:[%s233 + $0x878] sm:$0xff]
        %v672 = vld [vmem:[%s233 + $0x880] sm:$0xff]
        %v673 = vld [vmem:[%s233 + $0x888] sm:$0xff]
        %v674 = vld [vmem:[%s233 + $0x890] sm:$0xff]
        %v675 = vld [vmem:[%s233 + $0x898] sm:$0xff]
        %v676 = vld [vmem:[%s233 + $0x8a0] sm:$0xff]
        %v677 = vld [vmem:[%s233 + $0x8a8] sm:$0xff]
        %v678 = vld [vmem:[%s233 + $0x8b0] sm:$0xff]
        %v679 = vld [vmem:[%s233 + $0x8b8] sm:$0xff]
        %v680 = vld [vmem:[%s233 + $0x8c0] sm:$0xff]
        %v681 = vld [vmem:[%s233 + $0x8c8] sm:$0xff]
        %v682 = vld [vmem:[%s233 + $0x8d0] sm:$0xff]
        %v683 = vld [vmem:[%s233 + $0x8d8] sm:$0xff]
        %v684 = vld [vmem:[%s233 + $0x8e0] sm:$0xff]
        %v685 = vld [vmem:[%s233 + $0x8e8] sm:$0xff]
        %v686 = vld [vmem:[%s233 + $0x8f0] sm:$0xff]
        %v687 = vld [vmem:[%s233 + $0x8f8] sm:$0xff]
        %v688 = vld [vmem:[%s233 + $0x900] sm:$0xff]
        %v689 = vld [vmem:[%s233 + $0x908] sm:$0xff]
        %v690 = vld [vmem:[%s233 + $0x910] sm:$0xff]
        %v691 = vld [vmem:[%s233 + $0x918] sm:$0xff]
        %v692 = vld [vmem:[%s233 + $0x920] sm:$0xff]
        %v693 = vld [vmem:[%s233 + $0x928] sm:$0xff]
        %v694 = vld [vmem:[%s233 + $0x930] sm:$0xff]
        %v695 = vld [vmem:[%s233 + $0x938] sm:$0xff]
        %v696 = vld [vmem:[%s233 + $0x940] sm:$0xff]
        %v697 = vld [vmem:[%s233 + $0x948] sm:$0xff]
        %v698 = vld [vmem:[%s233 + $0x950] sm:$0xff]
        %v699 = vld [vmem:[%s233 + $0x958] sm:$0xff]
        %v700 = vld [vmem:[%s233 + $0x960] sm:$0xff]
        %v701 = vld [vmem:[%s233 + $0x968] sm:$0xff]
        %v702 = vld [vmem:[%s233 + $0x970] sm:$0xff]
        %v703 = vld [vmem:[%s233 + $0x978] sm:$0xff]
        %v704 = vld [vmem:[%s233 + $0x980] sm:$0xff]
        %v705 = vld [vmem:[%s233 + $0x988] sm:$0xff]
        %v706 = vld [vmem:[%s233 + $0x990] sm:$0xff]
        %v707 = vld [vmem:[%s233 + $0x998] sm:$0xff]
        %v708 = vld [vmem:[%s233 + $0x9a0] sm:$0xff]
        %v709 = vld [vmem:[%s233 + $0x9a8] sm:$0xff]
        %v710 = vld [vmem:[%s233 + $0x9b0] sm:$0xff]
        %v711 = vld [vmem:[%s233 + $0x9b8] sm:$0xff]
        %v712 = vld [vmem:[%s233 + $0x9c0] sm:$0xff]
        %v713 = vld [vmem:[%s233 + $0x9c8] sm:$0xff]
        %v714 = vld [vmem:[%s233 + $0x9d0] sm:$0xff]
        %v715 = vld [vmem:[%s233 + $0x9d8] sm:$0xff]
        %v716 = vld [vmem:[%s233 + $0x9e0] sm:$0xff]
        %v717 = vld [vmem:[%s233 + $0x9e8] sm:$0xff]
        %v718 = vld [vmem:[%s233 + $0x9f0] sm:$0xff]
        %v719 = vld [vmem:[%s233 + $0x9f8] sm:$0xff]
        %v720 = vld [vmem:[%s233 + $0xa00] sm:$0xff]
        %v721 = vld [vmem:[%s233 + $0xa08] sm:$0xff]
        %v722 = vld [vmem:[%s233 + $0xa10] sm:$0xff]
        %v723 = vld [vmem:[%s233 + $0xa18] sm:$0xff]
        %v724 = vld [vmem:[%s233 + $0xa20] sm:$0xff]
        %v725 = vld [vmem:[%s233 + $0xa28] sm:$0xff]
        %v726 = vld [vmem:[%s233 + $0xa30] sm:$0xff]
        %v727 = vld [vmem:[%s233 + $0xa38] sm:$0xff]
        %v728 = vld [vmem:[%s233 + $0xa40] sm:$0xff]
        %v729 = vld [vmem:[%s233 + $0xa48] sm:$0xff]
        %v730 = vld [vmem:[%s233 + $0xa50] sm:$0xff]
        %v731 = vld [vmem:[%s233 + $0xa58] sm:$0xff]
        %v732 = vld [vmem:[%s233 + $0xa60] sm:$0xff]
        %v733 = vld [vmem:[%s233 + $0xa68] sm:$0xff]
        %v734 = vld [vmem:[%s233 + $0xa70] sm:$0xff]
        %v735 = vld [vmem:[%s233 + $0xa78] sm:$0xff]
        %v736 = vld [vmem:[%s233 + $0xa80] sm:$0xff]
        %v737 = vld [vmem:[%s233 + $0xa88] sm:$0xff]
        %v738 = vld [vmem:[%s233 + $0xa90] sm:$0xff]
        %v739 = vld [vmem:[%s233 + $0xa98] sm:$0xff]
        %v740 = vld [vmem:[%s233 + $0xaa0] sm:$0xff]
        %v741 = vld [vmem:[%s233 + $0xaa8] sm:$0xff]
        %v742 = vld [vmem:[%s233 + $0xab0] sm:$0xff]
        %v743 = vld [vmem:[%s233 + $0xab8] sm:$0xff]
        %v744 = vld [vmem:[%s233 + $0xac0] sm:$0xff]
        %v745 = vld [vmem:[%s233 + $0xac8] sm:$0xff]
        %v746 = vld [vmem:[%s233 + $0xad0] sm:$0xff]
        %v747 = vld [vmem:[%s233 + $0xad8] sm:$0xff]
        %v748 = vld [vmem:[%s233 + $0xae0] sm:$0xff]
        %v749 = vld [vmem:[%s233 + $0xae8] sm:$0xff]
        %v750 = vld [vmem:[%s233 + $0xaf0] sm:$0xff]
        %v751 = vld [vmem:[%s233 + $0xaf8] sm:$0xff]
        %v752 = vld [vmem:[%s233 + $0xb00] sm:$0xff]
        %v753 = vld [vmem:[%s233 + $0xb08] sm:$0xff]
        %v754 = vld [vmem:[%s233 + $0xb10] sm:$0xff]
        %v755 = vld [vmem:[%s233 + $0xb18] sm:$0xff]
        %v756 = vld [vmem:[%s233 + $0xb20] sm:$0xff]
        %v757 = vld [vmem:[%s233 + $0xb28] sm:$0xff]
        %v758 = vld [vmem:[%s233 + $0xb30] sm:$0xff]
        %v759 = vld [vmem:[%s233 + $0xb38] sm:$0xff]
        %v760 = vld [vmem:[%s233 + $0xb40] sm:$0xff]
        %v761 = vld [vmem:[%s233 + $0xb48] sm:$0xff]
        %v762 = vld [vmem:[%s233 + $0xb50] sm:$0xff]
        %v763 = vld [vmem:[%s233 + $0xb58] sm:$0xff]
        %v764 = vld [vmem:[%s233 + $0xb60] sm:$0xff]
        %v765 = vld [vmem:[%s233 + $0xb68] sm:$0xff]
        %v766 = vld [vmem:[%s233 + $0xb70] sm:$0xff]
        %v767 = vld [vmem:[%s233 + $0xb78] sm:$0xff]
        %v768 = vld [vmem:[%s233 + $0xb80] sm:$0xff]
        %v769 = vld [vmem:[%s233 + $0xb88] sm:$0xff]
        %v770 = vld [vmem:[%s233 + $0xb90] sm:$0xff]
        %v771 = vld [vmem:[%s233 + $0xb98] sm:$0xff]
        %v772 = vld [vmem:[%s233 + $0xba0] sm:$0xff]
        %v773 = vld [vmem:[%s233 + $0xba8] sm:$0xff]
        %v774 = vld [vmem:[%s233 + $0xbb0] sm:$0xff]
        %v775 = vld [vmem:[%s233 + $0xbb8] sm:$0xff]
        %v776 = vld [vmem:[%s233 + $0xbc0] sm:$0xff]
        %v777 = vld [vmem:[%s233 + $0xbc8] sm:$0xff]
        %v778 = vld [vmem:[%s233 + $0xbd0] sm:$0xff]
        %v779 = vld [vmem:[%s233 + $0xbd8] sm:$0xff]
        %v780 = vld [vmem:[%s233 + $0xbe0] sm:$0xff]
        %v781 = vld [vmem:[%s233 + $0xbe8] sm:$0xff]
        %v782 = vld [vmem:[%s233 + $0xbf0] sm:$0xff]
        %v783 = vld [vmem:[%s233 + $0xbf8] sm:$0xff]
        %v1168 = vunpack.c.l.b16 %v400
        %v1169 = vunpack.c.h.b16 %v400
        %v1170 = vunpack.c.l.b16 %v401
        %v1171 = vunpack.c.h.b16 %v401
        %v1172 = vunpack.c.l.b16 %v402
        %v1173 = vunpack.c.h.b16 %v402
        %v1174 = vunpack.c.l.b16 %v403
        %v1175 = vunpack.c.h.b16 %v403
        %v1176 = vunpack.c.l.b16 %v404
        %v1177 = vunpack.c.h.b16 %v404
        %v1178 = vunpack.c.l.b16 %v405
        %v1179 = vunpack.c.h.b16 %v405
        %v1180 = vunpack.c.l.b16 %v406
        %v1181 = vunpack.c.h.b16 %v406
        %v1182 = vunpack.c.l.b16 %v407
        %v1183 = vunpack.c.h.b16 %v407
        %v1184 = vunpack.c.l.b16 %v408
        %v1185 = vunpack.c.h.b16 %v408
        %v1186 = vunpack.c.l.b16 %v409
        %v1187 = vunpack.c.h.b16 %v409
        %v1188 = vunpack.c.l.b16 %v410
        %v1189 = vunpack.c.h.b16 %v410
        %v1190 = vunpack.c.l.b16 %v411
        %v1191 = vunpack.c.h.b16 %v411
        %v1192 = vunpack.c.l.b16 %v412
        %v1193 = vunpack.c.h.b16 %v412
        %v1194 = vunpack.c.l.b16 %v413
        %v1195 = vunpack.c.h.b16 %v413
        %v1196 = vunpack.c.l.b16 %v414
        %v1197 = vunpack.c.h.b16 %v414
        %v1198 = vunpack.c.l.b16 %v415
        %v1199 = vunpack.c.h.b16 %v415
        %v1200 = vunpack.c.l.b16 %v416
        %v1201 = vunpack.c.h.b16 %v416
        %v1202 = vunpack.c.l.b16 %v417
        %v1203 = vunpack.c.h.b16 %v417
        %v1204 = vunpack.c.l.b16 %v418
        %v1205 = vunpack.c.h.b16 %v418
        %v1206 = vunpack.c.l.b16 %v419
        %v1207 = vunpack.c.h.b16 %v419
        %v1208 = vunpack.c.l.b16 %v420
        %v1209 = vunpack.c.h.b16 %v420
        %v1210 = vunpack.c.l.b16 %v421
        %v1211 = vunpack.c.h.b16 %v421
        %v1212 = vunpack.c.l.b16 %v422
        %v1213 = vunpack.c.h.b16 %v422
        %v1214 = vunpack.c.l.b16 %v423
        %v1215 = vunpack.c.h.b16 %v423
        %v1216 = vunpack.c.l.b16 %v424
        %v1217 = vunpack.c.h.b16 %v424
        %v1218 = vunpack.c.l.b16 %v425
        %v1219 = vunpack.c.h.b16 %v425
        %v1220 = vunpack.c.l.b16 %v426
        %v1221 = vunpack.c.h.b16 %v426
        %v1222 = vunpack.c.l.b16 %v427
        %v1223 = vunpack.c.h.b16 %v427
        %v1224 = vunpack.c.l.b16 %v428
        %v1225 = vunpack.c.h.b16 %v428
        %v1226 = vunpack.c.l.b16 %v429
        %v1227 = vunpack.c.h.b16 %v429
        %v1228 = vunpack.c.l.b16 %v430
        %v1229 = vunpack.c.h.b16 %v430
        %v1230 = vunpack.c.l.b16 %v431
        %v1231 = vunpack.c.h.b16 %v431
        %v1232 = vunpack.c.l.b16 %v432
        %v1233 = vunpack.c.h.b16 %v432
        %v1234 = vunpack.c.l.b16 %v433
        %v1235 = vunpack.c.h.b16 %v433
        %v1236 = vunpack.c.l.b16 %v434
        %v1237 = vunpack.c.h.b16 %v434
        %v1238 = vunpack.c.l.b16 %v435
        %v1239 = vunpack.c.h.b16 %v435
        %v1240 = vunpack.c.l.b16 %v436
        %v1241 = vunpack.c.h.b16 %v436
        %v1242 = vunpack.c.l.b16 %v437
        %v1243 = vunpack.c.h.b16 %v437
        %v1244 = vunpack.c.l.b16 %v438
        %v1245 = vunpack.c.h.b16 %v438
        %v1246 = vunpack.c.l.b16 %v439
        %v1247 = vunpack.c.h.b16 %v439
        %v1248 = vunpack.c.l.b16 %v440
        %v1249 = vunpack.c.h.b16 %v440
        %v1250 = vunpack.c.l.b16 %v441
        %v1251 = vunpack.c.h.b16 %v441
        %v1252 = vunpack.c.l.b16 %v442
        %v1253 = vunpack.c.h.b16 %v442
        %v1254 = vunpack.c.l.b16 %v443
        %v1255 = vunpack.c.h.b16 %v443
        %v1256 = vunpack.c.l.b16 %v444
        %v1257 = vunpack.c.h.b16 %v444
        %v1258 = vunpack.c.l.b16 %v445
        %v1259 = vunpack.c.h.b16 %v445
        %v1260 = vunpack.c.l.b16 %v446
        %v1261 = vunpack.c.h.b16 %v446
        %v1262 = vunpack.c.l.b16 %v447
        %v1263 = vunpack.c.h.b16 %v447
        %v1264 = vunpack.c.l.b16 %v448
        %v1265 = vunpack.c.h.b16 %v448
        %v1266 = vunpack.c.l.b16 %v449
        %v1267 = vunpack.c.h.b16 %v449
        %v1268 = vunpack.c.l.b16 %v450
        %v1269 = vunpack.c.h.b16 %v450
        %v1270 = vunpack.c.l.b16 %v451
        %v1271 = vunpack.c.h.b16 %v451
        %v1272 = vunpack.c.l.b16 %v452
        %v1273 = vunpack.c.h.b16 %v452
        %v1274 = vunpack.c.l.b16 %v453
        %v1275 = vunpack.c.h.b16 %v453
        %v1276 = vunpack.c.l.b16 %v454
        %v1277 = vunpack.c.h.b16 %v454
        %v1278 = vunpack.c.l.b16 %v455
        %v1279 = vunpack.c.h.b16 %v455
        %v1280 = vunpack.c.l.b16 %v456
        %v1281 = vunpack.c.h.b16 %v456
        %v1282 = vunpack.c.l.b16 %v457
        %v1283 = vunpack.c.h.b16 %v457
        %v1284 = vunpack.c.l.b16 %v458
        %v1285 = vunpack.c.h.b16 %v458
        %v1286 = vunpack.c.l.b16 %v459
        %v1287 = vunpack.c.h.b16 %v459
        %v1288 = vunpack.c.l.b16 %v460
        %v1289 = vunpack.c.h.b16 %v460
        %v1290 = vunpack.c.l.b16 %v461
        %v1291 = vunpack.c.h.b16 %v461
        %v1292 = vunpack.c.l.b16 %v462
        %v1293 = vunpack.c.h.b16 %v462
        %v1294 = vunpack.c.l.b16 %v463
        %v1295 = vunpack.c.h.b16 %v463
        %v1296 = vunpack.c.l.b16 %v464
        %v1297 = vunpack.c.h.b16 %v464
        %v1298 = vunpack.c.l.b16 %v465
        %v1299 = vunpack.c.h.b16 %v465
        %v1300 = vunpack.c.l.b16 %v466
        %v1301 = vunpack.c.h.b16 %v466
        %v1302 = vunpack.c.l.b16 %v467
        %v1303 = vunpack.c.h.b16 %v467
        %v1304 = vunpack.c.l.b16 %v468
        %v1305 = vunpack.c.h.b16 %v468
        %v1306 = vunpack.c.l.b16 %v469
        %v1307 = vunpack.c.h.b16 %v469
        %v1308 = vunpack.c.l.b16 %v470
        %v1309 = vunpack.c.h.b16 %v470
        %v1310 = vunpack.c.l.b16 %v471
        %v1311 = vunpack.c.h.b16 %v471
        %v1312 = vunpack.c.l.b16 %v472
        %v1313 = vunpack.c.h.b16 %v472
        %v1314 = vunpack.c.l.b16 %v473
        %v1315 = vunpack.c.h.b16 %v473
        %v1316 = vunpack.c.l.b16 %v474
        %v1317 = vunpack.c.h.b16 %v474
        %v1318 = vunpack.c.l.b16 %v475
        %v1319 = vunpack.c.h.b16 %v475
        %v1320 = vunpack.c.l.b16 %v476
        %v1321 = vunpack.c.h.b16 %v476
        %v1322 = vunpack.c.l.b16 %v477
        %v1323 = vunpack.c.h.b16 %v477
        %v1324 = vunpack.c.l.b16 %v478
        %v1325 = vunpack.c.h.b16 %v478
        %v1326 = vunpack.c.l.b16 %v479
        %v1327 = vunpack.c.h.b16 %v479
        %v1328 = vunpack.c.l.b16 %v480
        %v1329 = vunpack.c.h.b16 %v480
        %v1330 = vunpack.c.l.b16 %v481
        %v1331 = vunpack.c.h.b16 %v481
        %v1332 = vunpack.c.l.b16 %v482
        %v1333 = vunpack.c.h.b16 %v482
        %v1334 = vunpack.c.l.b16 %v483
        %v1335 = vunpack.c.h.b16 %v483
        %v1336 = vunpack.c.l.b16 %v484
        %v1337 = vunpack.c.h.b16 %v484
        %v1338 = vunpack.c.l.b16 %v485
        %v1339 = vunpack.c.h.b16 %v485
        %v1340 = vunpack.c.l.b16 %v486
        %v1341 = vunpack.c.h.b16 %v486
        %v1342 = vunpack.c.l.b16 %v487
        %v1343 = vunpack.c.h.b16 %v487
        %v1344 = vunpack.c.l.b16 %v488
        %v1345 = vunpack.c.h.b16 %v488
        %v1346 = vunpack.c.l.b16 %v489
        %v1347 = vunpack.c.h.b16 %v489
        %v1348 = vunpack.c.l.b16 %v490
        %v1349 = vunpack.c.h.b16 %v490
        %v1350 = vunpack.c.l.b16 %v491
        %v1351 = vunpack.c.h.b16 %v491
        %v1352 = vunpack.c.l.b16 %v492
        %v1353 = vunpack.c.h.b16 %v492
        %v1354 = vunpack.c.l.b16 %v493
        %v1355 = vunpack.c.h.b16 %v493
        %v1356 = vunpack.c.l.b16 %v494
        %v1357 = vunpack.c.h.b16 %v494
        %v1358 = vunpack.c.l.b16 %v495
        %v1359 = vunpack.c.h.b16 %v495
        %v1360 = vunpack.c.l.b16 %v496
        %v1361 = vunpack.c.h.b16 %v496
        %v1362 = vunpack.c.l.b16 %v497
        %v1363 = vunpack.c.h.b16 %v497
        %v1364 = vunpack.c.l.b16 %v498
        %v1365 = vunpack.c.h.b16 %v498
        %v1366 = vunpack.c.l.b16 %v499
        %v1367 = vunpack.c.h.b16 %v499
        %v1368 = vunpack.c.l.b16 %v500
        %v1369 = vunpack.c.h.b16 %v500
        %v1370 = vunpack.c.l.b16 %v501
        %v1371 = vunpack.c.h.b16 %v501
        %v1372 = vunpack.c.l.b16 %v502
        %v1373 = vunpack.c.h.b16 %v502
        %v1374 = vunpack.c.l.b16 %v503
        %v1375 = vunpack.c.h.b16 %v503
        %v1376 = vunpack.c.l.b16 %v504
        %v1377 = vunpack.c.h.b16 %v504
        %v1378 = vunpack.c.l.b16 %v505
        %v1379 = vunpack.c.h.b16 %v505
        %v1380 = vunpack.c.l.b16 %v506
        %v1381 = vunpack.c.h.b16 %v506
        %v1382 = vunpack.c.l.b16 %v507
        %v1383 = vunpack.c.h.b16 %v507
        %v1384 = vunpack.c.l.b16 %v508
        %v1385 = vunpack.c.h.b16 %v508
        %v1386 = vunpack.c.l.b16 %v509
        %v1387 = vunpack.c.h.b16 %v509
        %v1388 = vunpack.c.l.b16 %v510
        %v1389 = vunpack.c.h.b16 %v510
        %v1390 = vunpack.c.l.b16 %v511
        %v1391 = vunpack.c.h.b16 %v511
        %v1392 = vunpack.c.l.b16 %v512
        %v1393 = vunpack.c.h.b16 %v512
        %v1394 = vunpack.c.l.b16 %v513
        %v1395 = vunpack.c.h.b16 %v513
        %v1396 = vunpack.c.l.b16 %v514
        %v1397 = vunpack.c.h.b16 %v514
        %v1398 = vunpack.c.l.b16 %v515
        %v1399 = vunpack.c.h.b16 %v515
        %v1400 = vunpack.c.l.b16 %v516
        %v1401 = vunpack.c.h.b16 %v516
        %v1402 = vunpack.c.l.b16 %v517
        %v1403 = vunpack.c.h.b16 %v517
        %v1404 = vunpack.c.l.b16 %v518
        %v1405 = vunpack.c.h.b16 %v518
        %v1406 = vunpack.c.l.b16 %v519
        %v1407 = vunpack.c.h.b16 %v519
        %v1408 = vunpack.c.l.b16 %v520
        %v1409 = vunpack.c.h.b16 %v520
        %v1410 = vunpack.c.l.b16 %v521
        %v1411 = vunpack.c.h.b16 %v521
        %v1412 = vunpack.c.l.b16 %v522
        %v1413 = vunpack.c.h.b16 %v522
        %v1414 = vunpack.c.l.b16 %v523
        %v1415 = vunpack.c.h.b16 %v523
        %v1416 = vunpack.c.l.b16 %v524
        %v1417 = vunpack.c.h.b16 %v524
        %v1418 = vunpack.c.l.b16 %v525
        %v1419 = vunpack.c.h.b16 %v525
        %v1420 = vunpack.c.l.b16 %v526
        %v1421 = vunpack.c.h.b16 %v526
        %v1422 = vunpack.c.l.b16 %v527
        %v1423 = vunpack.c.h.b16 %v527
        %v1424 = vunpack.c.l.b16 %v528
        %v1425 = vunpack.c.h.b16 %v528
        %v1426 = vunpack.c.l.b16 %v529
        %v1427 = vunpack.c.h.b16 %v529
        %v1428 = vunpack.c.l.b16 %v530
        %v1429 = vunpack.c.h.b16 %v530
        %v1430 = vunpack.c.l.b16 %v531
        %v1431 = vunpack.c.h.b16 %v531
        %v1432 = vunpack.c.l.b16 %v532
        %v1433 = vunpack.c.h.b16 %v532
        %v1434 = vunpack.c.l.b16 %v533
        %v1435 = vunpack.c.h.b16 %v533
        %v1436 = vunpack.c.l.b16 %v534
        %v1437 = vunpack.c.h.b16 %v534
        %v1438 = vunpack.c.l.b16 %v535
        %v1439 = vunpack.c.h.b16 %v535
        %v1440 = vunpack.c.l.b16 %v536
        %v1441 = vunpack.c.h.b16 %v536
        %v1442 = vunpack.c.l.b16 %v537
        %v1443 = vunpack.c.h.b16 %v537
        %v1444 = vunpack.c.l.b16 %v538
        %v1445 = vunpack.c.h.b16 %v538
        %v1446 = vunpack.c.l.b16 %v539
        %v1447 = vunpack.c.h.b16 %v539
        %v1448 = vunpack.c.l.b16 %v540
        %v1449 = vunpack.c.h.b16 %v540
        %v1450 = vunpack.c.l.b16 %v541
        %v1451 = vunpack.c.h.b16 %v541
        %v1452 = vunpack.c.l.b16 %v542
        %v1453 = vunpack.c.h.b16 %v542
        %v1454 = vunpack.c.l.b16 %v543
        %v1455 = vunpack.c.h.b16 %v543
        %v1456 = vunpack.c.l.b16 %v544
        %v1457 = vunpack.c.h.b16 %v544
        %v1458 = vunpack.c.l.b16 %v545
        %v1459 = vunpack.c.h.b16 %v545
        %v1460 = vunpack.c.l.b16 %v546
        %v1461 = vunpack.c.h.b16 %v546
        %v1462 = vunpack.c.l.b16 %v547
        %v1463 = vunpack.c.h.b16 %v547
        %v1464 = vunpack.c.l.b16 %v548
        %v1465 = vunpack.c.h.b16 %v548
        %v1466 = vunpack.c.l.b16 %v549
        %v1467 = vunpack.c.h.b16 %v549
        %v1468 = vunpack.c.l.b16 %v550
        %v1469 = vunpack.c.h.b16 %v550
        %v1470 = vunpack.c.l.b16 %v551
        %v1471 = vunpack.c.h.b16 %v551
        %v1472 = vunpack.c.l.b16 %v552
        %v1473 = vunpack.c.h.b16 %v552
        %v1474 = vunpack.c.l.b16 %v553
        %v1475 = vunpack.c.h.b16 %v553
        %v1476 = vunpack.c.l.b16 %v554
        %v1477 = vunpack.c.h.b16 %v554
        %v1478 = vunpack.c.l.b16 %v555
        %v1479 = vunpack.c.h.b16 %v555
        %v1480 = vunpack.c.l.b16 %v556
        %v1481 = vunpack.c.h.b16 %v556
        %v1482 = vunpack.c.l.b16 %v557
        %v1483 = vunpack.c.h.b16 %v557
        %v1484 = vunpack.c.l.b16 %v558
        %v1485 = vunpack.c.h.b16 %v558
        %v1486 = vunpack.c.l.b16 %v559
        %v1487 = vunpack.c.h.b16 %v559
        %v1488 = vunpack.c.l.b16 %v560
        %v1489 = vunpack.c.h.b16 %v560
        %v1490 = vunpack.c.l.b16 %v561
        %v1491 = vunpack.c.h.b16 %v561
        %v1492 = vunpack.c.l.b16 %v562
        %v1493 = vunpack.c.h.b16 %v562
        %v1494 = vunpack.c.l.b16 %v563
        %v1495 = vunpack.c.h.b16 %v563
        %v1496 = vunpack.c.l.b16 %v564
        %v1497 = vunpack.c.h.b16 %v564
        %v1498 = vunpack.c.l.b16 %v565
        %v1499 = vunpack.c.h.b16 %v565
        %v1500 = vunpack.c.l.b16 %v566
        %v1501 = vunpack.c.h.b16 %v566
        %v1502 = vunpack.c.l.b16 %v567
        %v1503 = vunpack.c.h.b16 %v567
        %v1504 = vunpack.c.l.b16 %v568
        %v1505 = vunpack.c.h.b16 %v568
        %v1506 = vunpack.c.l.b16 %v569
        %v1507 = vunpack.c.h.b16 %v569
        %v1508 = vunpack.c.l.b16 %v570
        %v1509 = vunpack.c.h.b16 %v570
        %v1510 = vunpack.c.l.b16 %v571
        %v1511 = vunpack.c.h.b16 %v571
        %v1512 = vunpack.c.l.b16 %v572
        %v1513 = vunpack.c.h.b16 %v572
        %v1514 = vunpack.c.l.b16 %v573
        %v1515 = vunpack.c.h.b16 %v573
        %v1516 = vunpack.c.l.b16 %v574
        %v1517 = vunpack.c.h.b16 %v574
        %v1518 = vunpack.c.l.b16 %v575
        %v1519 = vunpack.c.h.b16 %v575
        %v1520 = vunpack.c.l.b16 %v576
        %v1521 = vunpack.c.h.b16 %v576
        %v1522 = vunpack.c.l.b16 %v577
        %v1523 = vunpack.c.h.b16 %v577
        %v1524 = vunpack.c.l.b16 %v578
        %v1525 = vunpack.c.h.b16 %v578
        %v1526 = vunpack.c.l.b16 %v579
        %v1527 = vunpack.c.h.b16 %v579
        %v1528 = vunpack.c.l.b16 %v580
        %v1529 = vunpack.c.h.b16 %v580
        %v1530 = vunpack.c.l.b16 %v581
        %v1531 = vunpack.c.h.b16 %v581
        %v1532 = vunpack.c.l.b16 %v582
        %v1533 = vunpack.c.h.b16 %v582
        %v1534 = vunpack.c.l.b16 %v583
        %v1535 = vunpack.c.h.b16 %v583
        %v1536 = vunpack.c.l.b16 %v584
        %v1537 = vunpack.c.h.b16 %v584
        %v1538 = vunpack.c.l.b16 %v585
        %v1539 = vunpack.c.h.b16 %v585
        %v1540 = vunpack.c.l.b16 %v586
        %v1541 = vunpack.c.h.b16 %v586
        %v1542 = vunpack.c.l.b16 %v587
        %v1543 = vunpack.c.h.b16 %v587
        %v1544 = vunpack.c.l.b16 %v588
        %v1545 = vunpack.c.h.b16 %v588
        %v1546 = vunpack.c.l.b16 %v589
        %v1547 = vunpack.c.h.b16 %v589
        %v1548 = vunpack.c.l.b16 %v590
        %v1549 = vunpack.c.h.b16 %v590
        %v1550 = vunpack.c.l.b16 %v591
        %v1551 = vunpack.c.h.b16 %v591
        %v1552 = vunpack.c.l.b16 %v592
        %v1553 = vunpack.c.h.b16 %v592
        %v1554 = vunpack.c.l.b16 %v593
        %v1555 = vunpack.c.h.b16 %v593
        %v1556 = vunpack.c.l.b16 %v594
        %v1557 = vunpack.c.h.b16 %v594
        %v1558 = vunpack.c.l.b16 %v595
        %v1559 = vunpack.c.h.b16 %v595
        %v1560 = vunpack.c.l.b16 %v596
        %v1561 = vunpack.c.h.b16 %v596
        %v1562 = vunpack.c.l.b16 %v597
        %v1563 = vunpack.c.h.b16 %v597
        %v1564 = vunpack.c.l.b16 %v598
        %v1565 = vunpack.c.h.b16 %v598
        %v1566 = vunpack.c.l.b16 %v599
        %v1567 = vunpack.c.h.b16 %v599
        %v1568 = vunpack.c.l.b16 %v600
        %v1569 = vunpack.c.h.b16 %v600
        %v1570 = vunpack.c.l.b16 %v601
        %v1571 = vunpack.c.h.b16 %v601
        %v1572 = vunpack.c.l.b16 %v602
        %v1573 = vunpack.c.h.b16 %v602
        %v1574 = vunpack.c.l.b16 %v603
        %v1575 = vunpack.c.h.b16 %v603
        %v1576 = vunpack.c.l.b16 %v604
        %v1577 = vunpack.c.h.b16 %v604
        %v1578 = vunpack.c.l.b16 %v605
        %v1579 = vunpack.c.h.b16 %v605
        %v1580 = vunpack.c.l.b16 %v606
        %v1581 = vunpack.c.h.b16 %v606
        %v1582 = vunpack.c.l.b16 %v607
        %v1583 = vunpack.c.h.b16 %v607
        %v1584 = vunpack.c.l.b16 %v608
        %v1585 = vunpack.c.h.b16 %v608
        %v1586 = vunpack.c.l.b16 %v609
        %v1587 = vunpack.c.h.b16 %v609
        %v1588 = vunpack.c.l.b16 %v610
        %v1589 = vunpack.c.h.b16 %v610
        %v1590 = vunpack.c.l.b16 %v611
        %v1591 = vunpack.c.h.b16 %v611
        %v1592 = vunpack.c.l.b16 %v612
        %v1593 = vunpack.c.h.b16 %v612
        %v1594 = vunpack.c.l.b16 %v613
        %v1595 = vunpack.c.h.b16 %v613
        %v1596 = vunpack.c.l.b16 %v614
        %v1597 = vunpack.c.h.b16 %v614
        %v1598 = vunpack.c.l.b16 %v615
        %v1599 = vunpack.c.h.b16 %v615
        %v1600 = vunpack.c.l.b16 %v616
        %v1601 = vunpack.c.h.b16 %v616
        %v1602 = vunpack.c.l.b16 %v617
        %v1603 = vunpack.c.h.b16 %v617
        %v1604 = vunpack.c.l.b16 %v618
        %v1605 = vunpack.c.h.b16 %v618
        %v1606 = vunpack.c.l.b16 %v619
        %v1607 = vunpack.c.h.b16 %v619
        %v1608 = vunpack.c.l.b16 %v620
        %v1609 = vunpack.c.h.b16 %v620
        %v1610 = vunpack.c.l.b16 %v621
        %v1611 = vunpack.c.h.b16 %v621
        %v1612 = vunpack.c.l.b16 %v622
        %v1613 = vunpack.c.h.b16 %v622
        %v1614 = vunpack.c.l.b16 %v623
        %v1615 = vunpack.c.h.b16 %v623
        %v1616 = vunpack.c.l.b16 %v624
        %v1617 = vunpack.c.h.b16 %v624
        %v1618 = vunpack.c.l.b16 %v625
        %v1619 = vunpack.c.h.b16 %v625
        %v1620 = vunpack.c.l.b16 %v626
        %v1621 = vunpack.c.h.b16 %v626
        %v1622 = vunpack.c.l.b16 %v627
        %v1623 = vunpack.c.h.b16 %v627
        %v1624 = vunpack.c.l.b16 %v628
        %v1625 = vunpack.c.h.b16 %v628
        %v1626 = vunpack.c.l.b16 %v629
        %v1627 = vunpack.c.h.b16 %v629
        %v1628 = vunpack.c.l.b16 %v630
        %v1629 = vunpack.c.h.b16 %v630
        %v1630 = vunpack.c.l.b16 %v631
        %v1631 = vunpack.c.h.b16 %v631
        %v1632 = vunpack.c.l.b16 %v632
        %v1633 = vunpack.c.h.b16 %v632
        %v1634 = vunpack.c.l.b16 %v633
        %v1635 = vunpack.c.h.b16 %v633
        %v1636 = vunpack.c.l.b16 %v634
        %v1637 = vunpack.c.h.b16 %v634
        %v1638 = vunpack.c.l.b16 %v635
        %v1639 = vunpack.c.h.b16 %v635
        %v1640 = vunpack.c.l.b16 %v636
        %v1641 = vunpack.c.h.b16 %v636
        %v1642 = vunpack.c.l.b16 %v637
        %v1643 = vunpack.c.h.b16 %v637
        %v1644 = vunpack.c.l.b16 %v638
        %v1645 = vunpack.c.h.b16 %v638
        %v1646 = vunpack.c.l.b16 %v639
        %v1647 = vunpack.c.h.b16 %v639
        %v1648 = vunpack.c.l.b16 %v640
        %v1649 = vunpack.c.h.b16 %v640
        %v1650 = vunpack.c.l.b16 %v641
        %v1651 = vunpack.c.h.b16 %v641
        %v1652 = vunpack.c.l.b16 %v642
        %v1653 = vunpack.c.h.b16 %v642
        %v1654 = vunpack.c.l.b16 %v643
        %v1655 = vunpack.c.h.b16 %v643
        %v1656 = vunpack.c.l.b16 %v644
        %v1657 = vunpack.c.h.b16 %v644
        %v1658 = vunpack.c.l.b16 %v645
        %v1659 = vunpack.c.h.b16 %v645
        %v1660 = vunpack.c.l.b16 %v646
        %v1661 = vunpack.c.h.b16 %v646
        %v1662 = vunpack.c.l.b16 %v647
        %v1663 = vunpack.c.h.b16 %v647
        %v1664 = vunpack.c.l.b16 %v648
        %v1665 = vunpack.c.h.b16 %v648
        %v1666 = vunpack.c.l.b16 %v649
        %v1667 = vunpack.c.h.b16 %v649
        %v1668 = vunpack.c.l.b16 %v650
        %v1669 = vunpack.c.h.b16 %v650
        %v1670 = vunpack.c.l.b16 %v651
        %v1671 = vunpack.c.h.b16 %v651
        %v1672 = vunpack.c.l.b16 %v652
        %v1673 = vunpack.c.h.b16 %v652
        %v1674 = vunpack.c.l.b16 %v653
        %v1675 = vunpack.c.h.b16 %v653
        %v1676 = vunpack.c.l.b16 %v654
        %v1677 = vunpack.c.h.b16 %v654
        %v1678 = vunpack.c.l.b16 %v655
        %v1679 = vunpack.c.h.b16 %v655
        %v1680 = vunpack.c.l.b16 %v656
        %v1681 = vunpack.c.h.b16 %v656
        %v1682 = vunpack.c.l.b16 %v657
        %v1683 = vunpack.c.h.b16 %v657
        %v1684 = vunpack.c.l.b16 %v658
        %v1685 = vunpack.c.h.b16 %v658
        %v1686 = vunpack.c.l.b16 %v659
        %v1687 = vunpack.c.h.b16 %v659
        %v1688 = vunpack.c.l.b16 %v660
        %v1689 = vunpack.c.h.b16 %v660
        %v1690 = vunpack.c.l.b16 %v661
        %v1691 = vunpack.c.h.b16 %v661
        %v1692 = vunpack.c.l.b16 %v662
        %v1693 = vunpack.c.h.b16 %v662
        %v1694 = vunpack.c.l.b16 %v663
        %v1695 = vunpack.c.h.b16 %v663
        %v1696 = vunpack.c.l.b16 %v664
        %v1697 = vunpack.c.h.b16 %v664
        %v1698 = vunpack.c.l.b16 %v665
        %v1699 = vunpack.c.h.b16 %v665
        %v1700 = vunpack.c.l.b16 %v666
        %v1701 = vunpack.c.h.b16 %v666
        %v1702 = vunpack.c.l.b16 %v667
        %v1703 = vunpack.c.h.b16 %v667
        %v1704 = vunpack.c.l.b16 %v668
        %v1705 = vunpack.c.h.b16 %v668
        %v1706 = vunpack.c.l.b16 %v669
        %v1707 = vunpack.c.h.b16 %v669
        %v1708 = vunpack.c.l.b16 %v670
        %v1709 = vunpack.c.h.b16 %v670
        %v1710 = vunpack.c.l.b16 %v671
        %v1711 = vunpack.c.h.b16 %v671
        %v1712 = vunpack.c.l.b16 %v672
        %v1713 = vunpack.c.h.b16 %v672
        %v1714 = vunpack.c.l.b16 %v673
        %v1715 = vunpack.c.h.b16 %v673
        %v1716 = vunpack.c.l.b16 %v674
        %v1717 = vunpack.c.h.b16 %v674
        %v1718 = vunpack.c.l.b16 %v675
        %v1719 = vunpack.c.h.b16 %v675
        %v1720 = vunpack.c.l.b16 %v676
        %v1721 = vunpack.c.h.b16 %v676
        %v1722 = vunpack.c.l.b16 %v677
        %v1723 = vunpack.c.h.b16 %v677
        %v1724 = vunpack.c.l.b16 %v678
        %v1725 = vunpack.c.h.b16 %v678
        %v1726 = vunpack.c.l.b16 %v679
        %v1727 = vunpack.c.h.b16 %v679
        %v1728 = vunpack.c.l.b16 %v680
        %v1729 = vunpack.c.h.b16 %v680
        %v1730 = vunpack.c.l.b16 %v681
        %v1731 = vunpack.c.h.b16 %v681
        %v1732 = vunpack.c.l.b16 %v682
        %v1733 = vunpack.c.h.b16 %v682
        %v1734 = vunpack.c.l.b16 %v683
        %v1735 = vunpack.c.h.b16 %v683
        %v1736 = vunpack.c.l.b16 %v684
        %v1737 = vunpack.c.h.b16 %v684
        %v1738 = vunpack.c.l.b16 %v685
        %v1739 = vunpack.c.h.b16 %v685
        %v1740 = vunpack.c.l.b16 %v686
        %v1741 = vunpack.c.h.b16 %v686
        %v1742 = vunpack.c.l.b16 %v687
        %v1743 = vunpack.c.h.b16 %v687
        %v1744 = vunpack.c.l.b16 %v688
        %v1745 = vunpack.c.h.b16 %v688
        %v1746 = vunpack.c.l.b16 %v689
        %v1747 = vunpack.c.h.b16 %v689
        %v1748 = vunpack.c.l.b16 %v690
        %v1749 = vunpack.c.h.b16 %v690
        %v1750 = vunpack.c.l.b16 %v691
        %v1751 = vunpack.c.h.b16 %v691
        %v1752 = vunpack.c.l.b16 %v692
        %v1753 = vunpack.c.h.b16 %v692
        %v1754 = vunpack.c.l.b16 %v693
        %v1755 = vunpack.c.h.b16 %v693
        %v1756 = vunpack.c.l.b16 %v694
        %v1757 = vunpack.c.h.b16 %v694
        %v1758 = vunpack.c.l.b16 %v695
        %v1759 = vunpack.c.h.b16 %v695
        %v1760 = vunpack.c.l.b16 %v696
        %v1761 = vunpack.c.h.b16 %v696
        %v1762 = vunpack.c.l.b16 %v697
        %v1763 = vunpack.c.h.b16 %v697
        %v1764 = vunpack.c.l.b16 %v698
        %v1765 = vunpack.c.h.b16 %v698
        %v1766 = vunpack.c.l.b16 %v699
        %v1767 = vunpack.c.h.b16 %v699
        %v1768 = vunpack.c.l.b16 %v700
        %v1769 = vunpack.c.h.b16 %v700
        %v1770 = vunpack.c.l.b16 %v701
        %v1771 = vunpack.c.h.b16 %v701
        %v1772 = vunpack.c.l.b16 %v702
        %v1773 = vunpack.c.h.b16 %v702
        %v1774 = vunpack.c.l.b16 %v703
        %v1775 = vunpack.c.h.b16 %v703
        %v1776 = vunpack.c.l.b16 %v704
        %v1777 = vunpack.c.h.b16 %v704
        %v1778 = vunpack.c.l.b16 %v705
        %v1779 = vunpack.c.h.b16 %v705
        %v1780 = vunpack.c.l.b16 %v706
        %v1781 = vunpack.c.h.b16 %v706
        %v1782 = vunpack.c.l.b16 %v707
        %v1783 = vunpack.c.h.b16 %v707
        %v1784 = vunpack.c.l.b16 %v708
        %v1785 = vunpack.c.h.b16 %v708
        %v1786 = vunpack.c.l.b16 %v709
        %v1787 = vunpack.c.h.b16 %v709
        %v1788 = vunpack.c.l.b16 %v710
        %v1789 = vunpack.c.h.b16 %v710
        %v1790 = vunpack.c.l.b16 %v711
        %v1791 = vunpack.c.h.b16 %v711
        %v1792 = vunpack.c.l.b16 %v712
        %v1793 = vunpack.c.h.b16 %v712
        %v1794 = vunpack.c.l.b16 %v713
        %v1795 = vunpack.c.h.b16 %v713
        %v1796 = vunpack.c.l.b16 %v714
        %v1797 = vunpack.c.h.b16 %v714
        %v1798 = vunpack.c.l.b16 %v715
        %v1799 = vunpack.c.h.b16 %v715
        %v1800 = vunpack.c.l.b16 %v716
        %v1801 = vunpack.c.h.b16 %v716
        %v1802 = vunpack.c.l.b16 %v717
        %v1803 = vunpack.c.h.b16 %v717
        %v1804 = vunpack.c.l.b16 %v718
        %v1805 = vunpack.c.h.b16 %v718
        %v1806 = vunpack.c.l.b16 %v719
        %v1807 = vunpack.c.h.b16 %v719
        %v1808 = vunpack.c.l.b16 %v720
        %v1809 = vunpack.c.h.b16 %v720
        %v1810 = vunpack.c.l.b16 %v721
        %v1811 = vunpack.c.h.b16 %v721
        %v1812 = vunpack.c.l.b16 %v722
        %v1813 = vunpack.c.h.b16 %v722
        %v1814 = vunpack.c.l.b16 %v723
        %v1815 = vunpack.c.h.b16 %v723
        %v1816 = vunpack.c.l.b16 %v724
        %v1817 = vunpack.c.h.b16 %v724
        %v1818 = vunpack.c.l.b16 %v725
        %v1819 = vunpack.c.h.b16 %v725
        %v1820 = vunpack.c.l.b16 %v726
        %v1821 = vunpack.c.h.b16 %v726
        %v1822 = vunpack.c.l.b16 %v727
        %v1823 = vunpack.c.h.b16 %v727
        %v1824 = vunpack.c.l.b16 %v728
        %v1825 = vunpack.c.h.b16 %v728
        %v1826 = vunpack.c.l.b16 %v729
        %v1827 = vunpack.c.h.b16 %v729
        %v1828 = vunpack.c.l.b16 %v730
        %v1829 = vunpack.c.h.b16 %v730
        %v1830 = vunpack.c.l.b16 %v731
        %v1831 = vunpack.c.h.b16 %v731
        %v1832 = vunpack.c.l.b16 %v732
        %v1833 = vunpack.c.h.b16 %v732
        %v1834 = vunpack.c.l.b16 %v733
        %v1835 = vunpack.c.h.b16 %v733
        %v1836 = vunpack.c.l.b16 %v734
        %v1837 = vunpack.c.h.b16 %v734
        %v1838 = vunpack.c.l.b16 %v735
        %v1839 = vunpack.c.h.b16 %v735
        %v1840 = vunpack.c.l.b16 %v736
        %v1841 = vunpack.c.h.b16 %v736
        %v1842 = vunpack.c.l.b16 %v737
        %v1843 = vunpack.c.h.b16 %v737
        %v1844 = vunpack.c.l.b16 %v738
        %v1845 = vunpack.c.h.b16 %v738
        %v1846 = vunpack.c.l.b16 %v739
        %v1847 = vunpack.c.h.b16 %v739
        %v1848 = vunpack.c.l.b16 %v740
        %v1849 = vunpack.c.h.b16 %v740
        %v1850 = vunpack.c.l.b16 %v741
        %v1851 = vunpack.c.h.b16 %v741
        %v1852 = vunpack.c.l.b16 %v742
        %v1853 = vunpack.c.h.b16 %v742
        %v1854 = vunpack.c.l.b16 %v743
        %v1855 = vunpack.c.h.b16 %v743
        %v1856 = vunpack.c.l.b16 %v744
        %v1857 = vunpack.c.h.b16 %v744
        %v1858 = vunpack.c.l.b16 %v745
        %v1859 = vunpack.c.h.b16 %v745
        %v1860 = vunpack.c.l.b16 %v746
        %v1861 = vunpack.c.h.b16 %v746
        %v1862 = vunpack.c.l.b16 %v747
        %v1863 = vunpack.c.h.b16 %v747
        %v1864 = vunpack.c.l.b16 %v748
        %v1865 = vunpack.c.h.b16 %v748
        %v1866 = vunpack.c.l.b16 %v749
        %v1867 = vunpack.c.h.b16 %v749
        %v1868 = vunpack.c.l.b16 %v750
        %v1869 = vunpack.c.h.b16 %v750
        %v1870 = vunpack.c.l.b16 %v751
        %v1871 = vunpack.c.h.b16 %v751
        %v1872 = vunpack.c.l.b16 %v752
        %v1873 = vunpack.c.h.b16 %v752
        %v1874 = vunpack.c.l.b16 %v753
        %v1875 = vunpack.c.h.b16 %v753
        %v1876 = vunpack.c.l.b16 %v754
        %v1877 = vunpack.c.h.b16 %v754
        %v1878 = vunpack.c.l.b16 %v755
        %v1879 = vunpack.c.h.b16 %v755
        %v1880 = vunpack.c.l.b16 %v756
        %v1881 = vunpack.c.h.b16 %v756
        %v1882 = vunpack.c.l.b16 %v757
        %v1883 = vunpack.c.h.b16 %v757
        %v1884 = vunpack.c.l.b16 %v758
        %v1885 = vunpack.c.h.b16 %v758
        %v1886 = vunpack.c.l.b16 %v759
        %v1887 = vunpack.c.h.b16 %v759
        %v1888 = vunpack.c.l.b16 %v760
        %v1889 = vunpack.c.h.b16 %v760
        %v1890 = vunpack.c.l.b16 %v761
        %v1891 = vunpack.c.h.b16 %v761
        %v1892 = vunpack.c.l.b16 %v762
        %v1893 = vunpack.c.h.b16 %v762
        %v1894 = vunpack.c.l.b16 %v763
        %v1895 = vunpack.c.h.b16 %v763
        %v1896 = vunpack.c.l.b16 %v764
        %v1897 = vunpack.c.h.b16 %v764
        %v1898 = vunpack.c.l.b16 %v765
        %v1899 = vunpack.c.h.b16 %v765
        %v1900 = vunpack.c.l.b16 %v766
        %v1901 = vunpack.c.h.b16 %v766
        %v1902 = vunpack.c.l.b16 %v767
        %v1903 = vunpack.c.h.b16 %v767
        %v1904 = vunpack.c.l.b16 %v768
        %v1905 = vunpack.c.h.b16 %v768
        %v1906 = vunpack.c.l.b16 %v769
        %v1907 = vunpack.c.h.b16 %v769
        %v1908 = vunpack.c.l.b16 %v770
        %v1909 = vunpack.c.h.b16 %v770
        %v1910 = vunpack.c.l.b16 %v771
        %v1911 = vunpack.c.h.b16 %v771
        %v1912 = vunpack.c.l.b16 %v772
        %v1913 = vunpack.c.h.b16 %v772
        %v1914 = vunpack.c.l.b16 %v773
        %v1915 = vunpack.c.h.b16 %v773
        %v1916 = vunpack.c.l.b16 %v774
        %v1917 = vunpack.c.h.b16 %v774
        %v1918 = vunpack.c.l.b16 %v775
        %v1919 = vunpack.c.h.b16 %v775
        %v1920 = vunpack.c.l.b16 %v776
        %v1921 = vunpack.c.h.b16 %v776
        %v1922 = vunpack.c.l.b16 %v777
        %v1923 = vunpack.c.h.b16 %v777
        %v1924 = vunpack.c.l.b16 %v778
        %v1925 = vunpack.c.h.b16 %v778
        %v1926 = vunpack.c.l.b16 %v779
        %v1927 = vunpack.c.h.b16 %v779
        %v1928 = vunpack.c.l.b16 %v780
        %v1929 = vunpack.c.h.b16 %v780
        %v1930 = vunpack.c.l.b16 %v781
        %v1931 = vunpack.c.h.b16 %v781
        %v1932 = vunpack.c.l.b16 %v782
        %v1933 = vunpack.c.h.b16 %v782
        %v1934 = vunpack.c.l.b16 %v783
        %v1935 = vunpack.c.h.b16 %v783
        %v1936 = vpack.c.b16 %v1180, %v1168
        %v1937 = vpack.c.b16 %v1181, %v1169
        %v1938 = vpack.c.b16 %v1182, %v1170
        %v1939 = vpack.c.b16 %v1183, %v1171
        %v1940 = vpack.c.b16 %v1184, %v1172
        %v1941 = vpack.c.b16 %v1185, %v1173
        %v1942 = vpack.c.b16 %v1186, %v1174
        %v1943 = vpack.c.b16 %v1187, %v1175
        %v1944 = vpack.c.b16 %v1188, %v1176
        %v1945 = vpack.c.b16 %v1189, %v1177
        %v1946 = vpack.c.b16 %v1190, %v1178
        %v1947 = vpack.c.b16 %v1191, %v1179
        %v1948 = vpack.c.b16 %v1204, %v1192
        %v1949 = vpack.c.b16 %v1205, %v1193
        %v1950 = vpack.c.b16 %v1206, %v1194
        %v1951 = vpack.c.b16 %v1207, %v1195
        %v1952 = vpack.c.b16 %v1208, %v1196
        %v1953 = vpack.c.b16 %v1209, %v1197
        %v1954 = vpack.c.b16 %v1210, %v1198
        %v1955 = vpack.c.b16 %v1211, %v1199
        %v1956 = vpack.c.b16 %v1212, %v1200
        %v1957 = vpack.c.b16 %v1213, %v1201
        %v1958 = vpack.c.b16 %v1214, %v1202
        %v1959 = vpack.c.b16 %v1215, %v1203
        %v1960 = vpack.c.b16 %v1228, %v1216
        %v1961 = vpack.c.b16 %v1229, %v1217
        %v1962 = vpack.c.b16 %v1230, %v1218
        %v1963 = vpack.c.b16 %v1231, %v1219
        %v1964 = vpack.c.b16 %v1232, %v1220
        %v1965 = vpack.c.b16 %v1233, %v1221
        %v1966 = vpack.c.b16 %v1234, %v1222
        %v1967 = vpack.c.b16 %v1235, %v1223
        %v1968 = vpack.c.b16 %v1236, %v1224
        %v1969 = vpack.c.b16 %v1237, %v1225
        %v1970 = vpack.c.b16 %v1238, %v1226
        %v1971 = vpack.c.b16 %v1239, %v1227
        %v1972 = vpack.c.b16 %v1252, %v1240
        %v1973 = vpack.c.b16 %v1253, %v1241
        %v1974 = vpack.c.b16 %v1254, %v1242
        %v1975 = vpack.c.b16 %v1255, %v1243
        %v1976 = vpack.c.b16 %v1256, %v1244
        %v1977 = vpack.c.b16 %v1257, %v1245
        %v1978 = vpack.c.b16 %v1258, %v1246
        %v1979 = vpack.c.b16 %v1259, %v1247
        %v1980 = vpack.c.b16 %v1260, %v1248
        %v1981 = vpack.c.b16 %v1261, %v1249
        %v1982 = vpack.c.b16 %v1262, %v1250
        %v1983 = vpack.c.b16 %v1263, %v1251
        %v1984 = vpack.c.b16 %v1276, %v1264
        %v1985 = vpack.c.b16 %v1277, %v1265
        %v1986 = vpack.c.b16 %v1278, %v1266
        %v1987 = vpack.c.b16 %v1279, %v1267
        %v1988 = vpack.c.b16 %v1280, %v1268
        %v1989 = vpack.c.b16 %v1281, %v1269
        %v1990 = vpack.c.b16 %v1282, %v1270
        %v1991 = vpack.c.b16 %v1283, %v1271
        %v1992 = vpack.c.b16 %v1284, %v1272
        %v1993 = vpack.c.b16 %v1285, %v1273
        %v1994 = vpack.c.b16 %v1286, %v1274
        %v1995 = vpack.c.b16 %v1287, %v1275
        %v1996 = vpack.c.b16 %v1300, %v1288
        %v1997 = vpack.c.b16 %v1301, %v1289
        %v1998 = vpack.c.b16 %v1302, %v1290
        %v1999 = vpack.c.b16 %v1303, %v1291
        %v2000 = vpack.c.b16 %v1304, %v1292
        %v2001 = vpack.c.b16 %v1305, %v1293
        %v2002 = vpack.c.b16 %v1306, %v1294
        %v2003 = vpack.c.b16 %v1307, %v1295
        %v2004 = vpack.c.b16 %v1308, %v1296
        %v2005 = vpack.c.b16 %v1309, %v1297
        %v2006 = vpack.c.b16 %v1310, %v1298
        %v2007 = vpack.c.b16 %v1311, %v1299
        %v2008 = vpack.c.b16 %v1324, %v1312
        %v2009 = vpack.c.b16 %v1325, %v1313
        %v2010 = vpack.c.b16 %v1326, %v1314
        %v2011 = vpack.c.b16 %v1327, %v1315
        %v2012 = vpack.c.b16 %v1328, %v1316
        %v2013 = vpack.c.b16 %v1329, %v1317
        %v2014 = vpack.c.b16 %v1330, %v1318
        %v2015 = vpack.c.b16 %v1331, %v1319
        %v2016 = vpack.c.b16 %v1332, %v1320
        %v2017 = vpack.c.b16 %v1333, %v1321
        %v2018 = vpack.c.b16 %v1334, %v1322
        %v2019 = vpack.c.b16 %v1335, %v1323
        %v2020 = vpack.c.b16 %v1348, %v1336
        %v2021 = vpack.c.b16 %v1349, %v1337
        %v2022 = vpack.c.b16 %v1350, %v1338
        %v2023 = vpack.c.b16 %v1351, %v1339
        %v2024 = vpack.c.b16 %v1352, %v1340
        %v2025 = vpack.c.b16 %v1353, %v1341
        %v2026 = vpack.c.b16 %v1354, %v1342
        %v2027 = vpack.c.b16 %v1355, %v1343
        %v2028 = vpack.c.b16 %v1356, %v1344
        %v2029 = vpack.c.b16 %v1357, %v1345
        %v2030 = vpack.c.b16 %v1358, %v1346
        %v2031 = vpack.c.b16 %v1359, %v1347
        %v2032 = vpack.c.b16 %v1372, %v1360
        %v2033 = vpack.c.b16 %v1373, %v1361
        %v2034 = vpack.c.b16 %v1374, %v1362
        %v2035 = vpack.c.b16 %v1375, %v1363
        %v2036 = vpack.c.b16 %v1376, %v1364
        %v2037 = vpack.c.b16 %v1377, %v1365
        %v2038 = vpack.c.b16 %v1378, %v1366
        %v2039 = vpack.c.b16 %v1379, %v1367
        %v2040 = vpack.c.b16 %v1380, %v1368
        %v2041 = vpack.c.b16 %v1381, %v1369
        %v2042 = vpack.c.b16 %v1382, %v1370
        %v2043 = vpack.c.b16 %v1383, %v1371
        %v2044 = vpack.c.b16 %v1396, %v1384
        %v2045 = vpack.c.b16 %v1397, %v1385
        %v2046 = vpack.c.b16 %v1398, %v1386
        %v2047 = vpack.c.b16 %v1399, %v1387
        %v2048 = vpack.c.b16 %v1400, %v1388
        %v2049 = vpack.c.b16 %v1401, %v1389
        %v2050 = vpack.c.b16 %v1402, %v1390
        %v2051 = vpack.c.b16 %v1403, %v1391
        %v2052 = vpack.c.b16 %v1404, %v1392
        %v2053 = vpack.c.b16 %v1405, %v1393
        %v2054 = vpack.c.b16 %v1406, %v1394
        %v2055 = vpack.c.b16 %v1407, %v1395
        %v2056 = vpack.c.b16 %v1420, %v1408
        %v2057 = vpack.c.b16 %v1421, %v1409
        %v2058 = vpack.c.b16 %v1422, %v1410
        %v2059 = vpack.c.b16 %v1423, %v1411
        %v2060 = vpack.c.b16 %v1424, %v1412
        %v2061 = vpack.c.b16 %v1425, %v1413
        %v2062 = vpack.c.b16 %v1426, %v1414
        %v2063 = vpack.c.b16 %v1427, %v1415
        %v2064 = vpack.c.b16 %v1428, %v1416
        %v2065 = vpack.c.b16 %v1429, %v1417
        %v2066 = vpack.c.b16 %v1430, %v1418
        %v2067 = vpack.c.b16 %v1431, %v1419
        %v2068 = vpack.c.b16 %v1444, %v1432
        %v2069 = vpack.c.b16 %v1445, %v1433
        %v2070 = vpack.c.b16 %v1446, %v1434
        %v2071 = vpack.c.b16 %v1447, %v1435
        %v2072 = vpack.c.b16 %v1448, %v1436
        %v2073 = vpack.c.b16 %v1449, %v1437
        %v2074 = vpack.c.b16 %v1450, %v1438
        %v2075 = vpack.c.b16 %v1451, %v1439
        %v2076 = vpack.c.b16 %v1452, %v1440
        %v2077 = vpack.c.b16 %v1453, %v1441
        %v2078 = vpack.c.b16 %v1454, %v1442
        %v2079 = vpack.c.b16 %v1455, %v1443
        %v2080 = vpack.c.b16 %v1468, %v1456
        %v2081 = vpack.c.b16 %v1469, %v1457
        %v2082 = vpack.c.b16 %v1470, %v1458
        %v2083 = vpack.c.b16 %v1471, %v1459
        %v2084 = vpack.c.b16 %v1472, %v1460
        %v2085 = vpack.c.b16 %v1473, %v1461
        %v2086 = vpack.c.b16 %v1474, %v1462
        %v2087 = vpack.c.b16 %v1475, %v1463
        %v2088 = vpack.c.b16 %v1476, %v1464
        %v2089 = vpack.c.b16 %v1477, %v1465
        %v2090 = vpack.c.b16 %v1478, %v1466
        %v2091 = vpack.c.b16 %v1479, %v1467
        %v2092 = vpack.c.b16 %v1492, %v1480
        %v2093 = vpack.c.b16 %v1493, %v1481
        %v2094 = vpack.c.b16 %v1494, %v1482
        %v2095 = vpack.c.b16 %v1495, %v1483
        %v2096 = vpack.c.b16 %v1496, %v1484
        %v2097 = vpack.c.b16 %v1497, %v1485
        %v2098 = vpack.c.b16 %v1498, %v1486
        %v2099 = vpack.c.b16 %v1499, %v1487
        %v2100 = vpack.c.b16 %v1500, %v1488
        %v2101 = vpack.c.b16 %v1501, %v1489
        %v2102 = vpack.c.b16 %v1502, %v1490
        %v2103 = vpack.c.b16 %v1503, %v1491
        %v2104 = vpack.c.b16 %v1516, %v1504
        %v2105 = vpack.c.b16 %v1517, %v1505
        %v2106 = vpack.c.b16 %v1518, %v1506
        %v2107 = vpack.c.b16 %v1519, %v1507
        %v2108 = vpack.c.b16 %v1520, %v1508
        %v2109 = vpack.c.b16 %v1521, %v1509
        %v2110 = vpack.c.b16 %v1522, %v1510
        %v2111 = vpack.c.b16 %v1523, %v1511
        %v2112 = vpack.c.b16 %v1524, %v1512
        %v2113 = vpack.c.b16 %v1525, %v1513
        %v2114 = vpack.c.b16 %v1526, %v1514
        %v2115 = vpack.c.b16 %v1527, %v1515
        %v2116 = vpack.c.b16 %v1540, %v1528
        %v2117 = vpack.c.b16 %v1541, %v1529
        %v2118 = vpack.c.b16 %v1542, %v1530
        %v2119 = vpack.c.b16 %v1543, %v1531
        %v2120 = vpack.c.b16 %v1544, %v1532
        %v2121 = vpack.c.b16 %v1545, %v1533
        %v2122 = vpack.c.b16 %v1546, %v1534
        %v2123 = vpack.c.b16 %v1547, %v1535
        %v2124 = vpack.c.b16 %v1548, %v1536
        %v2125 = vpack.c.b16 %v1549, %v1537
        %v2126 = vpack.c.b16 %v1550, %v1538
        %v2127 = vpack.c.b16 %v1551, %v1539
        %v2128 = vpack.c.b16 %v1564, %v1552
        %v2129 = vpack.c.b16 %v1565, %v1553
        %v2130 = vpack.c.b16 %v1566, %v1554
        %v2131 = vpack.c.b16 %v1567, %v1555
        %v2132 = vpack.c.b16 %v1568, %v1556
        %v2133 = vpack.c.b16 %v1569, %v1557
        %v2134 = vpack.c.b16 %v1570, %v1558
        %v2135 = vpack.c.b16 %v1571, %v1559
        %v2136 = vpack.c.b16 %v1572, %v1560
        %v2137 = vpack.c.b16 %v1573, %v1561
        %v2138 = vpack.c.b16 %v1574, %v1562
        %v2139 = vpack.c.b16 %v1575, %v1563
        %v2140 = vpack.c.b16 %v1588, %v1576
        %v2141 = vpack.c.b16 %v1589, %v1577
        %v2142 = vpack.c.b16 %v1590, %v1578
        %v2143 = vpack.c.b16 %v1591, %v1579
        %v2144 = vpack.c.b16 %v1592, %v1580
        %v2145 = vpack.c.b16 %v1593, %v1581
        %v2146 = vpack.c.b16 %v1594, %v1582
        %v2147 = vpack.c.b16 %v1595, %v1583
        %v2148 = vpack.c.b16 %v1596, %v1584
        %v2149 = vpack.c.b16 %v1597, %v1585
        %v2150 = vpack.c.b16 %v1598, %v1586
        %v2151 = vpack.c.b16 %v1599, %v1587
        %v2152 = vpack.c.b16 %v1612, %v1600
        %v2153 = vpack.c.b16 %v1613, %v1601
        %v2154 = vpack.c.b16 %v1614, %v1602
        %v2155 = vpack.c.b16 %v1615, %v1603
        %v2156 = vpack.c.b16 %v1616, %v1604
        %v2157 = vpack.c.b16 %v1617, %v1605
        %v2158 = vpack.c.b16 %v1618, %v1606
        %v2159 = vpack.c.b16 %v1619, %v1607
        %v2160 = vpack.c.b16 %v1620, %v1608
        %v2161 = vpack.c.b16 %v1621, %v1609
        %v2162 = vpack.c.b16 %v1622, %v1610
        %v2163 = vpack.c.b16 %v1623, %v1611
        %v2164 = vpack.c.b16 %v1636, %v1624
        %v2165 = vpack.c.b16 %v1637, %v1625
        %v2166 = vpack.c.b16 %v1638, %v1626
        %v2167 = vpack.c.b16 %v1639, %v1627
        %v2168 = vpack.c.b16 %v1640, %v1628
        %v2169 = vpack.c.b16 %v1641, %v1629
        %v2170 = vpack.c.b16 %v1642, %v1630
        %v2171 = vpack.c.b16 %v1643, %v1631
        %v2172 = vpack.c.b16 %v1644, %v1632
        %v2173 = vpack.c.b16 %v1645, %v1633
        %v2174 = vpack.c.b16 %v1646, %v1634
        %v2175 = vpack.c.b16 %v1647, %v1635
        %v2176 = vpack.c.b16 %v1660, %v1648
        %v2177 = vpack.c.b16 %v1661, %v1649
        %v2178 = vpack.c.b16 %v1662, %v1650
        %v2179 = vpack.c.b16 %v1663, %v1651
        %v2180 = vpack.c.b16 %v1664, %v1652
        %v2181 = vpack.c.b16 %v1665, %v1653
        %v2182 = vpack.c.b16 %v1666, %v1654
        %v2183 = vpack.c.b16 %v1667, %v1655
        %v2184 = vpack.c.b16 %v1668, %v1656
        %v2185 = vpack.c.b16 %v1669, %v1657
        %v2186 = vpack.c.b16 %v1670, %v1658
        %v2187 = vpack.c.b16 %v1671, %v1659
        %v2188 = vpack.c.b16 %v1684, %v1672
        %v2189 = vpack.c.b16 %v1685, %v1673
        %v2190 = vpack.c.b16 %v1686, %v1674
        %v2191 = vpack.c.b16 %v1687, %v1675
        %v2192 = vpack.c.b16 %v1688, %v1676
        %v2193 = vpack.c.b16 %v1689, %v1677
        %v2194 = vpack.c.b16 %v1690, %v1678
        %v2195 = vpack.c.b16 %v1691, %v1679
        %v2196 = vpack.c.b16 %v1692, %v1680
        %v2197 = vpack.c.b16 %v1693, %v1681
        %v2198 = vpack.c.b16 %v1694, %v1682
        %v2199 = vpack.c.b16 %v1695, %v1683
        %v2200 = vpack.c.b16 %v1708, %v1696
        %v2201 = vpack.c.b16 %v1709, %v1697
        %v2202 = vpack.c.b16 %v1710, %v1698
        %v2203 = vpack.c.b16 %v1711, %v1699
        %v2204 = vpack.c.b16 %v1712, %v1700
        %v2205 = vpack.c.b16 %v1713, %v1701
        %v2206 = vpack.c.b16 %v1714, %v1702
        %v2207 = vpack.c.b16 %v1715, %v1703
        %v2208 = vpack.c.b16 %v1716, %v1704
        %v2209 = vpack.c.b16 %v1717, %v1705
        %v2210 = vpack.c.b16 %v1718, %v1706
        %v2211 = vpack.c.b16 %v1719, %v1707
        %v2212 = vpack.c.b16 %v1732, %v1720
        %v2213 = vpack.c.b16 %v1733, %v1721
        %v2214 = vpack.c.b16 %v1734, %v1722
        %v2215 = vpack.c.b16 %v1735, %v1723
        %v2216 = vpack.c.b16 %v1736, %v1724
        %v2217 = vpack.c.b16 %v1737, %v1725
        %v2218 = vpack.c.b16 %v1738, %v1726
        %v2219 = vpack.c.b16 %v1739, %v1727
        %v2220 = vpack.c.b16 %v1740, %v1728
        %v2221 = vpack.c.b16 %v1741, %v1729
        %v2222 = vpack.c.b16 %v1742, %v1730
        %v2223 = vpack.c.b16 %v1743, %v1731
        %v2224 = vpack.c.b16 %v1756, %v1744
        %v2225 = vpack.c.b16 %v1757, %v1745
        %v2226 = vpack.c.b16 %v1758, %v1746
        %v2227 = vpack.c.b16 %v1759, %v1747
        %v2228 = vpack.c.b16 %v1760, %v1748
        %v2229 = vpack.c.b16 %v1761, %v1749
        %v2230 = vpack.c.b16 %v1762, %v1750
        %v2231 = vpack.c.b16 %v1763, %v1751
        %v2232 = vpack.c.b16 %v1764, %v1752
        %v2233 = vpack.c.b16 %v1765, %v1753
        %v2234 = vpack.c.b16 %v1766, %v1754
        %v2235 = vpack.c.b16 %v1767, %v1755
        %v2236 = vpack.c.b16 %v1780, %v1768
        %v2237 = vpack.c.b16 %v1781, %v1769
        %v2238 = vpack.c.b16 %v1782, %v1770
        %v2239 = vpack.c.b16 %v1783, %v1771
        %v2240 = vpack.c.b16 %v1784, %v1772
        %v2241 = vpack.c.b16 %v1785, %v1773
        %v2242 = vpack.c.b16 %v1786, %v1774
        %v2243 = vpack.c.b16 %v1787, %v1775
        %v2244 = vpack.c.b16 %v1788, %v1776
        %v2245 = vpack.c.b16 %v1789, %v1777
        %v2246 = vpack.c.b16 %v1790, %v1778
        %v2247 = vpack.c.b16 %v1791, %v1779
        %v2248 = vpack.c.b16 %v1804, %v1792
        %v2249 = vpack.c.b16 %v1805, %v1793
        %v2250 = vpack.c.b16 %v1806, %v1794
        %v2251 = vpack.c.b16 %v1807, %v1795
        %v2252 = vpack.c.b16 %v1808, %v1796
        %v2253 = vpack.c.b16 %v1809, %v1797
        %v2254 = vpack.c.b16 %v1810, %v1798
        %v2255 = vpack.c.b16 %v1811, %v1799
        %v2256 = vpack.c.b16 %v1812, %v1800
        %v2257 = vpack.c.b16 %v1813, %v1801
        %v2258 = vpack.c.b16 %v1814, %v1802
        %v2259 = vpack.c.b16 %v1815, %v1803
        %v2260 = vpack.c.b16 %v1828, %v1816
        %v2261 = vpack.c.b16 %v1829, %v1817
        %v2262 = vpack.c.b16 %v1830, %v1818
        %v2263 = vpack.c.b16 %v1831, %v1819
        %v2264 = vpack.c.b16 %v1832, %v1820
        %v2265 = vpack.c.b16 %v1833, %v1821
        %v2266 = vpack.c.b16 %v1834, %v1822
        %v2267 = vpack.c.b16 %v1835, %v1823
        %v2268 = vpack.c.b16 %v1836, %v1824
        %v2269 = vpack.c.b16 %v1837, %v1825
        %v2270 = vpack.c.b16 %v1838, %v1826
        %v2271 = vpack.c.b16 %v1839, %v1827
        %v2272 = vpack.c.b16 %v1852, %v1840
        %v2273 = vpack.c.b16 %v1853, %v1841
        %v2274 = vpack.c.b16 %v1854, %v1842
        %v2275 = vpack.c.b16 %v1855, %v1843
        %v2276 = vpack.c.b16 %v1856, %v1844
        %v2277 = vpack.c.b16 %v1857, %v1845
        %v2278 = vpack.c.b16 %v1858, %v1846
        %v2279 = vpack.c.b16 %v1859, %v1847
        %v2280 = vpack.c.b16 %v1860, %v1848
        %v2281 = vpack.c.b16 %v1861, %v1849
        %v2282 = vpack.c.b16 %v1862, %v1850
        %v2283 = vpack.c.b16 %v1863, %v1851
        %v2284 = vpack.c.b16 %v1876, %v1864
        %v2285 = vpack.c.b16 %v1877, %v1865
        %v2286 = vpack.c.b16 %v1878, %v1866
        %v2287 = vpack.c.b16 %v1879, %v1867
        %v2288 = vpack.c.b16 %v1880, %v1868
        %v2289 = vpack.c.b16 %v1881, %v1869
        %v2290 = vpack.c.b16 %v1882, %v1870
        %v2291 = vpack.c.b16 %v1883, %v1871
        %v2292 = vpack.c.b16 %v1884, %v1872
        %v2293 = vpack.c.b16 %v1885, %v1873
        %v2294 = vpack.c.b16 %v1886, %v1874
        %v2295 = vpack.c.b16 %v1887, %v1875
        %v2296 = vpack.c.b16 %v1900, %v1888
        %v2297 = vpack.c.b16 %v1901, %v1889
        %v2298 = vpack.c.b16 %v1902, %v1890
        %v2299 = vpack.c.b16 %v1903, %v1891
        %v2300 = vpack.c.b16 %v1904, %v1892
        %v2301 = vpack.c.b16 %v1905, %v1893
        %v2302 = vpack.c.b16 %v1906, %v1894
        %v2303 = vpack.c.b16 %v1907, %v1895
        %v2304 = vpack.c.b16 %v1908, %v1896
        %v2305 = vpack.c.b16 %v1909, %v1897
        %v2306 = vpack.c.b16 %v1910, %v1898
        %v2307 = vpack.c.b16 %v1911, %v1899
        %v2308 = vpack.c.b16 %v1924, %v1912
        %v2309 = vpack.c.b16 %v1925, %v1913
        %v2310 = vpack.c.b16 %v1926, %v1914
        %v2311 = vpack.c.b16 %v1927, %v1915
        %v2312 = vpack.c.b16 %v1928, %v1916
        %v2313 = vpack.c.b16 %v1929, %v1917
        %v2314 = vpack.c.b16 %v1930, %v1918
        %v2315 = vpack.c.b16 %v1931, %v1919
        %v2316 = vpack.c.b16 %v1932, %v1920
        %v2317 = vpack.c.b16 %v1933, %v1921
        %v2318 = vpack.c.b16 %v1934, %v1922
        %v2319 = vpack.c.b16 %v1935, %v1923
        %2704 = vmatprep.subr.bf16.mxu0 %v2021
        %2705 = vmatpush1.bf16.msra.mxu0 %v2020
        %2706 = vmatprep.subr.bf16.mxu0 %v2009
        %2707 = vmatpush1.bf16.msra.mxu0 %v2008
        %2708 = vmatprep.subr.bf16.mxu0 %v1997
        %2709 = vmatpush1.bf16.msra.mxu0 %v1996
        %2710 = vmatprep.subr.bf16.mxu0 %v1985
        %2711 = vmatpush1.bf16.msra.mxu0 %v1984
        %2712 = vmatprep.subr.bf16.mxu0 %v1973
        %2713 = vmatpush1.bf16.msra.mxu0 %v1972
        %2714 = vmatprep.subr.bf16.mxu0 %v1961
        %2715 = vmatpush1.bf16.msra.mxu0 %v1960
        %2716 = vmatprep.subr.bf16.mxu0 %v1949
        %2717 = vmatpush1.bf16.msra.mxu0 %v1948
        %2718 = vmatprep.subr.bf16.mxu0 %v1937
        %2719 = vmatpush1.bf16.msra.mxu0 %v1936
        %2720 = vmatprep.subr.bf16.mxu0 %v2117
        %2721 = vmatpush2.bf16.msra.mxu0 %v2116
        %2722 = vmatprep.subr.bf16.mxu0 %v2105
        %2723 = vmatpush2.bf16.msra.mxu0 %v2104
        %2724 = vmatprep.subr.bf16.mxu0 %v2093
        %2725 = vmatpush2.bf16.msra.mxu0 %v2092
        %2726 = vmatprep.subr.bf16.mxu0 %v2081
        %2727 = vmatpush2.bf16.msra.mxu0 %v2080
        %2728 = vmatprep.subr.bf16.mxu0 %v2069
        %2729 = vmatpush2.bf16.msra.mxu0 %v2068
        %2730 = vmatprep.subr.bf16.mxu0 %v2057
        %2731 = vmatpush2.bf16.msra.mxu0 %v2056
        %2732 = vmatprep.subr.bf16.mxu0 %v2045
        %2733 = vmatpush2.bf16.msra.mxu0 %v2044
        %2734 = vmatprep.subr.bf16.mxu0 %v2033
        %2735 = vmatpush2.bf16.msra.mxu0 %v2032
        %2736 = vmatprep.mubr.bf16.mxu0 %v397
        %2737 = vmatmul.mubr.bf16.gmra.mxu0 %v396
        %v2738 = vpop.f32.mrf.mxu0
        %v2739 = vadd.f32 0.0, %v2738
        %v2740 = vpop.f32.mrf.mxu0
        %v2741 = vadd.f32 0.0, %v2740
        %v2742 = vpop.f32.mrf.mxu0
        %v2743 = vpop.f32.mrf.mxu0
        %2744 = vdwg.mxu0
        %2745 = vmatprep.subr.bf16.mxu0 %v2213
        %2746 = vmatpush1.bf16.msra.mxu0 %v2212
        %2747 = vmatprep.subr.bf16.mxu0 %v2201
        %2748 = vmatpush1.bf16.msra.mxu0 %v2200
        %2749 = vmatprep.subr.bf16.mxu0 %v2189
        %2750 = vmatpush1.bf16.msra.mxu0 %v2188
        %2751 = vmatprep.subr.bf16.mxu0 %v2177
        %2752 = vmatpush1.bf16.msra.mxu0 %v2176
        %2753 = vmatprep.subr.bf16.mxu0 %v2165
        %2754 = vmatpush1.bf16.msra.mxu0 %v2164
        %2755 = vmatprep.subr.bf16.mxu0 %v2153
        %2756 = vmatpush1.bf16.msra.mxu0 %v2152
        %2757 = vmatprep.subr.bf16.mxu0 %v2141
        %2758 = vmatpush1.bf16.msra.mxu0 %v2140
        %2759 = vmatprep.subr.bf16.mxu0 %v2129
        %2760 = vmatpush1.bf16.msra.mxu0 %v2128
        %2761 = vmatprep.subr.bf16.mxu0 %v2309
        %2762 = vmatpush2.bf16.msra.mxu0 %v2308
        %2763 = vmatprep.subr.bf16.mxu0 %v2297
        %2764 = vmatpush2.bf16.msra.mxu0 %v2296
        %2765 = vmatprep.subr.bf16.mxu0 %v2285
        %2766 = vmatpush2.bf16.msra.mxu0 %v2284
        %2767 = vmatprep.subr.bf16.mxu0 %v2273
        %2768 = vmatpush2.bf16.msra.mxu0 %v2272
        %2769 = vmatprep.subr.bf16.mxu0 %v2261
        %2770 = vmatpush2.bf16.msra.mxu0 %v2260
        %2771 = vmatprep.subr.bf16.mxu0 %v2249
        %2772 = vmatpush2.bf16.msra.mxu0 %v2248
        %2773 = vmatprep.subr.bf16.mxu0 %v2237
        %2774 = vmatpush2.bf16.msra.mxu0 %v2236
        %2775 = vmatprep.subr.bf16.mxu0 %v2225
        %2776 = vmatpush2.bf16.msra.mxu0 %v2224
        %2777 = vmatprep.mubr.bf16.mxu0 %v399
        %2778 = vmatmul.mubr.bf16.gmra.mxu0 %v398
        %v2779 = vpop.f32.mrf.mxu0
        %v2780 = vadd.f32 %v2739, %v2779
        %v2781 = vpop.f32.mrf.mxu0
        %v2782 = vadd.f32 %v2741, %v2781
        %v2783 = vpop.f32.mrf.mxu0
        %v2784 = vpop.f32.mrf.mxu0
        %2785 = vdwg.mxu0
        %2786 = vmatprep.subr.bf16.mxu0 %v2023
        %2787 = vmatpush1.bf16.msra.mxu0 %v2022
        %2788 = vmatprep.subr.bf16.mxu0 %v2011
        %2789 = vmatpush1.bf16.msra.mxu0 %v2010
        %2790 = vmatprep.subr.bf16.mxu0 %v1999
        %2791 = vmatpush1.bf16.msra.mxu0 %v1998
        %2792 = vmatprep.subr.bf16.mxu0 %v1987
        %2793 = vmatpush1.bf16.msra.mxu0 %v1986
        %2794 = vmatprep.subr.bf16.mxu0 %v1975
        %2795 = vmatpush1.bf16.msra.mxu0 %v1974
        %2796 = vmatprep.subr.bf16.mxu0 %v1963
        %2797 = vmatpush1.bf16.msra.mxu0 %v1962
        %2798 = vmatprep.subr.bf16.mxu0 %v1951
        %2799 = vmatpush1.bf16.msra.mxu0 %v1950
        %2800 = vmatprep.subr.bf16.mxu0 %v1939
        %2801 = vmatpush1.bf16.msra.mxu0 %v1938
        %2802 = vmatprep.subr.bf16.mxu0 %v2119
        %2803 = vmatpush2.bf16.msra.mxu0 %v2118
        %2804 = vmatprep.subr.bf16.mxu0 %v2107
        %2805 = vmatpush2.bf16.msra.mxu0 %v2106
        %2806 = vmatprep.subr.bf16.mxu0 %v2095
        %2807 = vmatpush2.bf16.msra.mxu0 %v2094
        %2808 = vmatprep.subr.bf16.mxu0 %v2083
        %2809 = vmatpush2.bf16.msra.mxu0 %v2082
        %2810 = vmatprep.subr.bf16.mxu0 %v2071
        %2811 = vmatpush2.bf16.msra.mxu0 %v2070
        %2812 = vmatprep.subr.bf16.mxu0 %v2059
        %2813 = vmatpush2.bf16.msra.mxu0 %v2058
        %2814 = vmatprep.subr.bf16.mxu0 %v2047
        %2815 = vmatpush2.bf16.msra.mxu0 %v2046
        %2816 = vmatprep.subr.bf16.mxu0 %v2035
        %2817 = vmatpush2.bf16.msra.mxu0 %v2034
        %2818 = vmatprep.mubr.bf16.mxu0 %v397
        %2819 = vmatmul.mubr.bf16.gmra.mxu0 %v396
        %v2820 = vpop.f32.mrf.mxu0
        %v2821 = vadd.f32 0.0, %v2820
        %v2822 = vpop.f32.mrf.mxu0
        %v2823 = vadd.f32 0.0, %v2822
        %v2824 = vpop.f32.mrf.mxu0
        %v2825 = vpop.f32.mrf.mxu0
        %2826 = vdwg.mxu0
        %2827 = vmatprep.subr.bf16.mxu0 %v2215
        %2828 = vmatpush1.bf16.msra.mxu0 %v2214
        %2829 = vmatprep.subr.bf16.mxu0 %v2203
        %2830 = vmatpush1.bf16.msra.mxu0 %v2202
        %2831 = vmatprep.subr.bf16.mxu0 %v2191
        %2832 = vmatpush1.bf16.msra.mxu0 %v2190
        %2833 = vmatprep.subr.bf16.mxu0 %v2179
        %2834 = vmatpush1.bf16.msra.mxu0 %v2178
        %2835 = vmatprep.subr.bf16.mxu0 %v2167
        %2836 = vmatpush1.bf16.msra.mxu0 %v2166
        %2837 = vmatprep.subr.bf16.mxu0 %v2155
        %2838 = vmatpush1.bf16.msra.mxu0 %v2154
        %2839 = vmatprep.subr.bf16.mxu0 %v2143
        %2840 = vmatpush1.bf16.msra.mxu0 %v2142
        %2841 = vmatprep.subr.bf16.mxu0 %v2131
        %2842 = vmatpush1.bf16.msra.mxu0 %v2130
        %2843 = vmatprep.subr.bf16.mxu0 %v2311
        %2844 = vmatpush2.bf16.msra.mxu0 %v2310
        %2845 = vmatprep.subr.bf16.mxu0 %v2299
        %2846 = vmatpush2.bf16.msra.mxu0 %v2298
        %2847 = vmatprep.subr.bf16.mxu0 %v2287
        %2848 = vmatpush2.bf16.msra.mxu0 %v2286
        %2849 = vmatprep.subr.bf16.mxu0 %v2275
        %2850 = vmatpush2.bf16.msra.mxu0 %v2274
        %2851 = vmatprep.subr.bf16.mxu0 %v2263
        %2852 = vmatpush2.bf16.msra.mxu0 %v2262
        %2853 = vmatprep.subr.bf16.mxu0 %v2251
        %2854 = vmatpush2.bf16.msra.mxu0 %v2250
        %2855 = vmatprep.subr.bf16.mxu0 %v2239
        %2856 = vmatpush2.bf16.msra.mxu0 %v2238
        %2857 = vmatprep.subr.bf16.mxu0 %v2227
        %2858 = vmatpush2.bf16.msra.mxu0 %v2226
        %2859 = vmatprep.mubr.bf16.mxu0 %v399
        %2860 = vmatmul.mubr.bf16.gmra.mxu0 %v398
        %v2861 = vpop.f32.mrf.mxu0
        %v2862 = vadd.f32 %v2821, %v2861
        %v2863 = vpop.f32.mrf.mxu0
        %v2864 = vadd.f32 %v2823, %v2863
        %v2865 = vpop.f32.mrf.mxu0
        %v2866 = vpop.f32.mrf.mxu0
        %2867 = vdwg.mxu0
        %2868 = vmatprep.subr.bf16.mxu0 %v2025
        %2869 = vmatpush1.bf16.msra.mxu0 %v2024
        %2870 = vmatprep.subr.bf16.mxu0 %v2013
        %2871 = vmatpush1.bf16.msra.mxu0 %v2012
        %2872 = vmatprep.subr.bf16.mxu0 %v2001
        %2873 = vmatpush1.bf16.msra.mxu0 %v2000
        %2874 = vmatprep.subr.bf16.mxu0 %v1989
        %2875 = vmatpush1.bf16.msra.mxu0 %v1988
        %2876 = vmatprep.subr.bf16.mxu0 %v1977
        %2877 = vmatpush1.bf16.msra.mxu0 %v1976
        %2878 = vmatprep.subr.bf16.mxu0 %v1965
        %2879 = vmatpush1.bf16.msra.mxu0 %v1964
        %2880 = vmatprep.subr.bf16.mxu0 %v1953
        %2881 = vmatpush1.bf16.msra.mxu0 %v1952
        %2882 = vmatprep.subr.bf16.mxu0 %v1941
        %2883 = vmatpush1.bf16.msra.mxu0 %v1940
        %2884 = vmatprep.subr.bf16.mxu0 %v2121
        %2885 = vmatpush2.bf16.msra.mxu0 %v2120
        %2886 = vmatprep.subr.bf16.mxu0 %v2109
        %2887 = vmatpush2.bf16.msra.mxu0 %v2108
        %2888 = vmatprep.subr.bf16.mxu0 %v2097
        %2889 = vmatpush2.bf16.msra.mxu0 %v2096
        %2890 = vmatprep.subr.bf16.mxu0 %v2085
        %2891 = vmatpush2.bf16.msra.mxu0 %v2084
        %2892 = vmatprep.subr.bf16.mxu0 %v2073
        %2893 = vmatpush2.bf16.msra.mxu0 %v2072
        %2894 = vmatprep.subr.bf16.mxu0 %v2061
        %2895 = vmatpush2.bf16.msra.mxu0 %v2060
        %2896 = vmatprep.subr.bf16.mxu0 %v2049
        %2897 = vmatpush2.bf16.msra.mxu0 %v2048
        %2898 = vmatprep.subr.bf16.mxu0 %v2037
        %2899 = vmatpush2.bf16.msra.mxu0 %v2036
        %2900 = vmatprep.mubr.bf16.mxu0 %v397
        %2901 = vmatmul.mubr.bf16.gmra.mxu0 %v396
        %v2902 = vpop.f32.mrf.mxu0
        %v2903 = vadd.f32 0.0, %v2902
        %v2904 = vpop.f32.mrf.mxu0
        %v2905 = vadd.f32 0.0, %v2904
        %v2906 = vpop.f32.mrf.mxu0
        %v2907 = vpop.f32.mrf.mxu0
        %2908 = vdwg.mxu0
        %2909 = vmatprep.subr.bf16.mxu0 %v2217
        %2910 = vmatpush1.bf16.msra.mxu0 %v2216
        %2911 = vmatprep.subr.bf16.mxu0 %v2205
        %2912 = vmatpush1.bf16.msra.mxu0 %v2204
        %2913 = vmatprep.subr.bf16.mxu0 %v2193
        %2914 = vmatpush1.bf16.msra.mxu0 %v2192
        %2915 = vmatprep.subr.bf16.mxu0 %v2181
        %2916 = vmatpush1.bf16.msra.mxu0 %v2180
        %2917 = vmatprep.subr.bf16.mxu0 %v2169
        %2918 = vmatpush1.bf16.msra.mxu0 %v2168
        %2919 = vmatprep.subr.bf16.mxu0 %v2157
        %2920 = vmatpush1.bf16.msra.mxu0 %v2156
        %2921 = vmatprep.subr.bf16.mxu0 %v2145
        %2922 = vmatpush1.bf16.msra.mxu0 %v2144
        %2923 = vmatprep.subr.bf16.mxu0 %v2133
        %2924 = vmatpush1.bf16.msra.mxu0 %v2132
        %2925 = vmatprep.subr.bf16.mxu0 %v2313
        %2926 = vmatpush2.bf16.msra.mxu0 %v2312
        %2927 = vmatprep.subr.bf16.mxu0 %v2301
        %2928 = vmatpush2.bf16.msra.mxu0 %v2300
        %2929 = vmatprep.subr.bf16.mxu0 %v2289
        %2930 = vmatpush2.bf16.msra.mxu0 %v2288
        %2931 = vmatprep.subr.bf16.mxu0 %v2277
        %2932 = vmatpush2.bf16.msra.mxu0 %v2276
        %2933 = vmatprep.subr.bf16.mxu0 %v2265
        %2934 = vmatpush2.bf16.msra.mxu0 %v2264
        %2935 = vmatprep.subr.bf16.mxu0 %v2253
        %2936 = vmatpush2.bf16.msra.mxu0 %v2252
        %2937 = vmatprep.subr.bf16.mxu0 %v2241
        %2938 = vmatpush2.bf16.msra.mxu0 %v2240
        %2939 = vmatprep.subr.bf16.mxu0 %v2229
        %2940 = vmatpush2.bf16.msra.mxu0 %v2228
        %2941 = vmatprep.mubr.bf16.mxu0 %v399
        %2942 = vmatmul.mubr.bf16.gmra.mxu0 %v398
        %v2943 = vpop.f32.mrf.mxu0
        %v2944 = vadd.f32 %v2903, %v2943
        %v2945 = vpop.f32.mrf.mxu0
        %v2946 = vadd.f32 %v2905, %v2945
        %v2947 = vpop.f32.mrf.mxu0
        %v2948 = vpop.f32.mrf.mxu0
        %2949 = vdwg.mxu0
        %2950 = vmatprep.subr.bf16.mxu0 %v2027
        %2951 = vmatpush1.bf16.msra.mxu0 %v2026
        %2952 = vmatprep.subr.bf16.mxu0 %v2015
        %2953 = vmatpush1.bf16.msra.mxu0 %v2014
        %2954 = vmatprep.subr.bf16.mxu0 %v2003
        %2955 = vmatpush1.bf16.msra.mxu0 %v2002
        %2956 = vmatprep.subr.bf16.mxu0 %v1991
        %2957 = vmatpush1.bf16.msra.mxu0 %v1990
        %2958 = vmatprep.subr.bf16.mxu0 %v1979
        %2959 = vmatpush1.bf16.msra.mxu0 %v1978
        %2960 = vmatprep.subr.bf16.mxu0 %v1967
        %2961 = vmatpush1.bf16.msra.mxu0 %v1966
        %2962 = vmatprep.subr.bf16.mxu0 %v1955
        %2963 = vmatpush1.bf16.msra.mxu0 %v1954
        %2964 = vmatprep.subr.bf16.mxu0 %v1943
        %2965 = vmatpush1.bf16.msra.mxu0 %v1942
        %2966 = vmatprep.subr.bf16.mxu0 %v2123
        %2967 = vmatpush2.bf16.msra.mxu0 %v2122
        %2968 = vmatprep.subr.bf16.mxu0 %v2111
        %2969 = vmatpush2.bf16.msra.mxu0 %v2110
        %2970 = vmatprep.subr.bf16.mxu0 %v2099
        %2971 = vmatpush2.bf16.msra.mxu0 %v2098
        %2972 = vmatprep.subr.bf16.mxu0 %v2087
        %2973 = vmatpush2.bf16.msra.mxu0 %v2086
        %2974 = vmatprep.subr.bf16.mxu0 %v2075
        %2975 = vmatpush2.bf16.msra.mxu0 %v2074
        %2976 = vmatprep.subr.bf16.mxu0 %v2063
        %2977 = vmatpush2.bf16.msra.mxu0 %v2062
        %2978 = vmatprep.subr.bf16.mxu0 %v2051
        %2979 = vmatpush2.bf16.msra.mxu0 %v2050
        %2980 = vmatprep.subr.bf16.mxu0 %v2039
        %2981 = vmatpush2.bf16.msra.mxu0 %v2038
        %2982 = vmatprep.mubr.bf16.mxu0 %v397
        %2983 = vmatmul.mubr.bf16.gmra.mxu0 %v396
        %v2984 = vpop.f32.mrf.mxu0
        %v2985 = vadd.f32 0.0, %v2984
        %v2986 = vpop.f32.mrf.mxu0
        %v2987 = vadd.f32 0.0, %v2986
        %v2988 = vpop.f32.mrf.mxu0
        %v2989 = vpop.f32.mrf.mxu0
        %2990 = vdwg.mxu0
        %2991 = vmatprep.subr.bf16.mxu0 %v2219
        %2992 = vmatpush1.bf16.msra.mxu0 %v2218
        %2993 = vmatprep.subr.bf16.mxu0 %v2207
        %2994 = vmatpush1.bf16.msra.mxu0 %v2206
        %2995 = vmatprep.subr.bf16.mxu0 %v2195
        %2996 = vmatpush1.bf16.msra.mxu0 %v2194
        %2997 = vmatprep.subr.bf16.mxu0 %v2183
        %2998 = vmatpush1.bf16.msra.mxu0 %v2182
        %2999 = vmatprep.subr.bf16.mxu0 %v2171
        %3000 = vmatpush1.bf16.msra.mxu0 %v2170
        %3001 = vmatprep.subr.bf16.mxu0 %v2159
        %3002 = vmatpush1.bf16.msra.mxu0 %v2158
        %3003 = vmatprep.subr.bf16.mxu0 %v2147
        %3004 = vmatpush1.bf16.msra.mxu0 %v2146
        %3005 = vmatprep.subr.bf16.mxu0 %v2135
        %3006 = vmatpush1.bf16.msra.mxu0 %v2134
        %3007 = vmatprep.subr.bf16.mxu0 %v2315
        %3008 = vmatpush2.bf16.msra.mxu0 %v2314
        %3009 = vmatprep.subr.bf16.mxu0 %v2303
        %3010 = vmatpush2.bf16.msra.mxu0 %v2302
        %3011 = vmatprep.subr.bf16.mxu0 %v2291
        %3012 = vmatpush2.bf16.msra.mxu0 %v2290
        %3013 = vmatprep.subr.bf16.mxu0 %v2279
        %3014 = vmatpush2.bf16.msra.mxu0 %v2278
        %3015 = vmatprep.subr.bf16.mxu0 %v2267
        %3016 = vmatpush2.bf16.msra.mxu0 %v2266
        %3017 = vmatprep.subr.bf16.mxu0 %v2255
        %3018 = vmatpush2.bf16.msra.mxu0 %v2254
        %3019 = vmatprep.subr.bf16.mxu0 %v2243
        %3020 = vmatpush2.bf16.msra.mxu0 %v2242
        %3021 = vmatprep.subr.bf16.mxu0 %v2231
        %3022 = vmatpush2.bf16.msra.mxu0 %v2230
        %3023 = vmatprep.mubr.bf16.mxu0 %v399
        %3024 = vmatmul.mubr.bf16.gmra.mxu0 %v398
        %v3025 = vpop.f32.mrf.mxu0
        %v3026 = vadd.f32 %v2985, %v3025
        %v3027 = vpop.f32.mrf.mxu0
        %v3028 = vadd.f32 %v2987, %v3027
        %v3029 = vpop.f32.mrf.mxu0
        %v3030 = vpop.f32.mrf.mxu0
        %3031 = vdwg.mxu0
        %3032 = vmatprep.subr.bf16.mxu0 %v2029
        %3033 = vmatpush1.bf16.msra.mxu0 %v2028
        %3034 = vmatprep.subr.bf16.mxu0 %v2017
        %3035 = vmatpush1.bf16.msra.mxu0 %v2016
        %3036 = vmatprep.subr.bf16.mxu0 %v2005
        %3037 = vmatpush1.bf16.msra.mxu0 %v2004
        %3038 = vmatprep.subr.bf16.mxu0 %v1993
        %3039 = vmatpush1.bf16.msra.mxu0 %v1992
        %3040 = vmatprep.subr.bf16.mxu0 %v1981
        %3041 = vmatpush1.bf16.msra.mxu0 %v1980
        %3042 = vmatprep.subr.bf16.mxu0 %v1969
        %3043 = vmatpush1.bf16.msra.mxu0 %v1968
        %3044 = vmatprep.subr.bf16.mxu0 %v1957
        %3045 = vmatpush1.bf16.msra.mxu0 %v1956
        %3046 = vmatprep.subr.bf16.mxu0 %v1945
        %3047 = vmatpush1.bf16.msra.mxu0 %v1944
        %3048 = vmatprep.subr.bf16.mxu0 %v2125
        %3049 = vmatpush2.bf16.msra.mxu0 %v2124
        %3050 = vmatprep.subr.bf16.mxu0 %v2113
        %3051 = vmatpush2.bf16.msra.mxu0 %v2112
        %3052 = vmatprep.subr.bf16.mxu0 %v2101
        %3053 = vmatpush2.bf16.msra.mxu0 %v2100
        %3054 = vmatprep.subr.bf16.mxu0 %v2089
        %3055 = vmatpush2.bf16.msra.mxu0 %v2088
        %3056 = vmatprep.subr.bf16.mxu0 %v2077
        %3057 = vmatpush2.bf16.msra.mxu0 %v2076
        %3058 = vmatprep.subr.bf16.mxu0 %v2065
        %3059 = vmatpush2.bf16.msra.mxu0 %v2064
        %3060 = vmatprep.subr.bf16.mxu0 %v2053
        %3061 = vmatpush2.bf16.msra.mxu0 %v2052
        %3062 = vmatprep.subr.bf16.mxu0 %v2041
        %3063 = vmatpush2.bf16.msra.mxu0 %v2040
        %3064 = vmatprep.mubr.bf16.mxu0 %v397
        %3065 = vmatmul.mubr.bf16.gmra.mxu0 %v396
        %v3066 = vpop.f32.mrf.mxu0
        %v3067 = vadd.f32 0.0, %v3066
        %v3068 = vpop.f32.mrf.mxu0
        %v3069 = vadd.f32 0.0, %v3068
        %v3070 = vpop.f32.mrf.mxu0
        %v3071 = vpop.f32.mrf.mxu0
        %3072 = vdwg.mxu0
        %3073 = vmatprep.subr.bf16.mxu0 %v2221
        %3074 = vmatpush1.bf16.msra.mxu0 %v2220
        %3075 = vmatprep.subr.bf16.mxu0 %v2209
        %3076 = vmatpush1.bf16.msra.mxu0 %v2208
        %3077 = vmatprep.subr.bf16.mxu0 %v2197
        %3078 = vmatpush1.bf16.msra.mxu0 %v2196
        %3079 = vmatprep.subr.bf16.mxu0 %v2185
        %3080 = vmatpush1.bf16.msra.mxu0 %v2184
        %3081 = vmatprep.subr.bf16.mxu0 %v2173
        %3082 = vmatpush1.bf16.msra.mxu0 %v2172
        %3083 = vmatprep.subr.bf16.mxu0 %v2161
        %3084 = vmatpush1.bf16.msra.mxu0 %v2160
        %3085 = vmatprep.subr.bf16.mxu0 %v2149
        %3086 = vmatpush1.bf16.msra.mxu0 %v2148
        %3087 = vmatprep.subr.bf16.mxu0 %v2137
        %3088 = vmatpush1.bf16.msra.mxu0 %v2136
        %3089 = vmatprep.subr.bf16.mxu0 %v2317
        %3090 = vmatpush2.bf16.msra.mxu0 %v2316
        %3091 = vmatprep.subr.bf16.mxu0 %v2305
        %3092 = vmatpush2.bf16.msra.mxu0 %v2304
        %3093 = vmatprep.subr.bf16.mxu0 %v2293
        %3094 = vmatpush2.bf16.msra.mxu0 %v2292
        %3095 = vmatprep.subr.bf16.mxu0 %v2281
        %3096 = vmatpush2.bf16.msra.mxu0 %v2280
        %3097 = vmatprep.subr.bf16.mxu0 %v2269
        %3098 = vmatpush2.bf16.msra.mxu0 %v2268
        %3099 = vmatprep.subr.bf16.mxu0 %v2257
        %3100 = vmatpush2.bf16.msra.mxu0 %v2256
        %3101 = vmatprep.subr.bf16.mxu0 %v2245
        %3102 = vmatpush2.bf16.msra.mxu0 %v2244
        %3103 = vmatprep.subr.bf16.mxu0 %v2233
        %3104 = vmatpush2.bf16.msra.mxu0 %v2232
        %3105 = vmatprep.mubr.bf16.mxu0 %v399
        %3106 = vmatmul.mubr.bf16.gmra.mxu0 %v398
        %v3107 = vpop.f32.mrf.mxu0
        %v3108 = vadd.f32 %v3067, %v3107
        %v3109 = vpop.f32.mrf.mxu0
        %v3110 = vadd.f32 %v3069, %v3109
        %v3111 = vpop.f32.mrf.mxu0
        %v3112 = vpop.f32.mrf.mxu0
        %3113 = vdwg.mxu0
        %3114 = vmatprep.subr.bf16.mxu0 %v2031
        %3115 = vmatpush1.bf16.msra.mxu0 %v2030
        %3116 = vmatprep.subr.bf16.mxu0 %v2019
        %3117 = vmatpush1.bf16.msra.mxu0 %v2018
        %3118 = vmatprep.subr.bf16.mxu0 %v2007
        %3119 = vmatpush1.bf16.msra.mxu0 %v2006
        %3120 = vmatprep.subr.bf16.mxu0 %v1995
        %3121 = vmatpush1.bf16.msra.mxu0 %v1994
        %3122 = vmatprep.subr.bf16.mxu0 %v1983
        %3123 = vmatpush1.bf16.msra.mxu0 %v1982
        %3124 = vmatprep.subr.bf16.mxu0 %v1971
        %3125 = vmatpush1.bf16.msra.mxu0 %v1970
        %3126 = vmatprep.subr.bf16.mxu0 %v1959
        %3127 = vmatpush1.bf16.msra.mxu0 %v1958
        %3128 = vmatprep.subr.bf16.mxu0 %v1947
        %3129 = vmatpush1.bf16.msra.mxu0 %v1946
        %3130 = vmatprep.subr.bf16.mxu0 %v2127
        %3131 = vmatpush2.bf16.msra.mxu0 %v2126
        %3132 = vmatprep.subr.bf16.mxu0 %v2115
        %3133 = vmatpush2.bf16.msra.mxu0 %v2114
        %3134 = vmatprep.subr.bf16.mxu0 %v2103
        %3135 = vmatpush2.bf16.msra.mxu0 %v2102
        %3136 = vmatprep.subr.bf16.mxu0 %v2091
        %3137 = vmatpush2.bf16.msra.mxu0 %v2090
        %3138 = vmatprep.subr.bf16.mxu0 %v2079
        %3139 = vmatpush2.bf16.msra.mxu0 %v2078
        %3140 = vmatprep.subr.bf16.mxu0 %v2067
        %3141 = vmatpush2.bf16.msra.mxu0 %v2066
        %3142 = vmatprep.subr.bf16.mxu0 %v2055
        %3143 = vmatpush2.bf16.msra.mxu0 %v2054
        %3144 = vmatprep.subr.bf16.mxu0 %v2043
        %3145 = vmatpush2.bf16.msra.mxu0 %v2042
        %3146 = vmatprep.mubr.bf16.mxu0 %v397
        %3147 = vmatmul.mubr.bf16.gmra.mxu0 %v396
        %v3148 = vpop.f32.mrf.mxu0
        %v3149 = vadd.f32 0.0, %v3148
        %v3150 = vpop.f32.mrf.mxu0
        %v3151 = vadd.f32 0.0, %v3150
        %v3152 = vpop.f32.mrf.mxu0
        %v3153 = vpop.f32.mrf.mxu0
        %3154 = vdwg.mxu0
        %3155 = vmatprep.subr.bf16.mxu0 %v2223
        %3156 = vmatpush1.bf16.msra.mxu0 %v2222
        %3157 = vmatprep.subr.bf16.mxu0 %v2211
        %3158 = vmatpush1.bf16.msra.mxu0 %v2210
        %3159 = vmatprep.subr.bf16.mxu0 %v2199
        %3160 = vmatpush1.bf16.msra.mxu0 %v2198
        %3161 = vmatprep.subr.bf16.mxu0 %v2187
        %3162 = vmatpush1.bf16.msra.mxu0 %v2186
        %3163 = vmatprep.subr.bf16.mxu0 %v2175
        %3164 = vmatpush1.bf16.msra.mxu0 %v2174
        %3165 = vmatprep.subr.bf16.mxu0 %v2163
        %3166 = vmatpush1.bf16.msra.mxu0 %v2162
        %3167 = vmatprep.subr.bf16.mxu0 %v2151
        %3168 = vmatpush1.bf16.msra.mxu0 %v2150
        %3169 = vmatprep.subr.bf16.mxu0 %v2139
        %3170 = vmatpush1.bf16.msra.mxu0 %v2138
        %3171 = vmatprep.subr.bf16.mxu0 %v2319
        %3172 = vmatpush2.bf16.msra.mxu0 %v2318
        %3173 = vmatprep.subr.bf16.mxu0 %v2307
        %3174 = vmatpush2.bf16.msra.mxu0 %v2306
        %3175 = vmatprep.subr.bf16.mxu0 %v2295
        %3176 = vmatpush2.bf16.msra.mxu0 %v2294
        %3177 = vmatprep.subr.bf16.mxu0 %v2283
        %3178 = vmatpush2.bf16.msra.mxu0 %v2282
        %3179 = vmatprep.subr.bf16.mxu0 %v2271
        %3180 = vmatpush2.bf16.msra.mxu0 %v2270
        %3181 = vmatprep.subr.bf16.mxu0 %v2259
        %3182 = vmatpush2.bf16.msra.mxu0 %v2258
        %3183 = vmatprep.subr.bf16.mxu0 %v2247
        %3184 = vmatpush2.bf16.msra.mxu0 %v2246
        %3185 = vmatprep.subr.bf16.mxu0 %v2235
        %3186 = vmatpush2.bf16.msra.mxu0 %v2234
        %3187 = vmatprep.mubr.bf16.mxu0 %v399
        %3188 = vmatmul.mubr.bf16.gmra.mxu0 %v398
        %v3189 = vpop.f32.mrf.mxu0
        %v3190 = vadd.f32 %v3149, %v3189
        %v3191 = vpop.f32.mrf.mxu0
        %v3192 = vadd.f32 %v3151, %v3191
        %v3193 = vpop.f32.mrf.mxu0
        %v3194 = vpop.f32.mrf.mxu0
        %3195 = vdwg.mxu0
        %v3292 = vunpack.c.l.b16 %v279
        %v3293 = vunpack.c.h.b16 %v279
        %v3294 = vunpack.c.l.b16 %v280
        %v3295 = vunpack.c.h.b16 %v280
        %v3296 = vunpack.c.l.b16 %v281
        %v3297 = vunpack.c.h.b16 %v281
        %v3298 = vunpack.c.l.b16 %v282
        %v3299 = vunpack.c.h.b16 %v282
        %v3300 = vunpack.c.l.b16 %v283
        %v3301 = vunpack.c.h.b16 %v283
        %v3302 = vunpack.c.l.b16 %v284
        %v3303 = vunpack.c.h.b16 %v284
        %v3304 = vunpack.c.l.b16 %v285
        %v3305 = vunpack.c.h.b16 %v285
        %v3306 = vunpack.c.l.b16 %v286
        %v3307 = vunpack.c.h.b16 %v286
        %v3308 = vunpack.c.l.b16 %v287
        %v3309 = vunpack.c.h.b16 %v287
        %v3310 = vunpack.c.l.b16 %v288
        %v3311 = vunpack.c.h.b16 %v288
        %v3312 = vunpack.c.l.b16 %v289
        %v3313 = vunpack.c.h.b16 %v289
        %v3314 = vunpack.c.l.b16 %v290
        %v3315 = vunpack.c.h.b16 %v290
        %v3316 = vunpack.c.l.b16 %v291
        %v3317 = vunpack.c.h.b16 %v291
        %v3318 = vunpack.c.l.b16 %v292
        %v3319 = vunpack.c.h.b16 %v292
        %v3320 = vunpack.c.l.b16 %v293
        %v3321 = vunpack.c.h.b16 %v293
        %v3322 = vunpack.c.l.b16 %v294
        %v3323 = vunpack.c.h.b16 %v294
        %v3324 = vunpack.c.l.b16 %v295
        %v3325 = vunpack.c.h.b16 %v295
        %v3326 = vunpack.c.l.b16 %v296
        %v3327 = vunpack.c.h.b16 %v296
        %v3328 = vunpack.c.l.b16 %v297
        %v3329 = vunpack.c.h.b16 %v297
        %v3330 = vunpack.c.l.b16 %v298
        %v3331 = vunpack.c.h.b16 %v298
        %v3332 = vunpack.c.l.b16 %v299
        %v3333 = vunpack.c.h.b16 %v299
        %v3334 = vunpack.c.l.b16 %v300
        %v3335 = vunpack.c.h.b16 %v300
        %v3336 = vunpack.c.l.b16 %v301
        %v3337 = vunpack.c.h.b16 %v301
        %v3338 = vunpack.c.l.b16 %v302
        %v3339 = vunpack.c.h.b16 %v302
        %v3340 = vunpack.c.l.b16 %v303
        %v3341 = vunpack.c.h.b16 %v303
        %v3342 = vunpack.c.l.b16 %v304
        %v3343 = vunpack.c.h.b16 %v304
        %v3344 = vunpack.c.l.b16 %v305
        %v3345 = vunpack.c.h.b16 %v305
        %v3346 = vunpack.c.l.b16 %v306
        %v3347 = vunpack.c.h.b16 %v306
        %v3348 = vunpack.c.l.b16 %v307
        %v3349 = vunpack.c.h.b16 %v307
        %v3350 = vunpack.c.l.b16 %v308
        %v3351 = vunpack.c.h.b16 %v308
        %v3352 = vunpack.c.l.b16 %v309
        %v3353 = vunpack.c.h.b16 %v309
        %v3354 = vunpack.c.l.b16 %v310
        %v3355 = vunpack.c.h.b16 %v310
        %v3356 = vunpack.c.l.b16 %v311
        %v3357 = vunpack.c.h.b16 %v311
        %v3358 = vunpack.c.l.b16 %v312
        %v3359 = vunpack.c.h.b16 %v312
        %v3360 = vunpack.c.l.b16 %v313
        %v3361 = vunpack.c.h.b16 %v313
        %v3362 = vunpack.c.l.b16 %v314
        %v3363 = vunpack.c.h.b16 %v314
        %v3364 = vunpack.c.l.b16 %v315
        %v3365 = vunpack.c.h.b16 %v315
        %v3366 = vunpack.c.l.b16 %v316
        %v3367 = vunpack.c.h.b16 %v316
        %v3368 = vunpack.c.l.b16 %v317
        %v3369 = vunpack.c.h.b16 %v317
        %v3370 = vunpack.c.l.b16 %v318
        %v3371 = vunpack.c.h.b16 %v318
        %v3372 = vunpack.c.l.b16 %v319
        %v3373 = vunpack.c.h.b16 %v319
        %v3374 = vunpack.c.l.b16 %v320
        %v3375 = vunpack.c.h.b16 %v320
        %v3376 = vunpack.c.l.b16 %v321
        %v3377 = vunpack.c.h.b16 %v321
        %v3378 = vunpack.c.l.b16 %v322
        %v3379 = vunpack.c.h.b16 %v322
        %v3380 = vunpack.c.l.b16 %v323
        %v3381 = vunpack.c.h.b16 %v323
        %v3382 = vunpack.c.l.b16 %v324
        %v3383 = vunpack.c.h.b16 %v324
        %v3384 = vunpack.c.l.b16 %v325
        %v3385 = vunpack.c.h.b16 %v325
        %v3386 = vunpack.c.l.b16 %v326
        %v3387 = vunpack.c.h.b16 %v326
        %v3388 = vunpack.c.l.b16 %v327
        %v3389 = vunpack.c.h.b16 %v327
        %v3390 = vunpack.c.l.b16 %v328
        %v3391 = vunpack.c.h.b16 %v328
        %v3392 = vunpack.c.l.b16 %v329
        %v3393 = vunpack.c.h.b16 %v329
        %v3394 = vunpack.c.l.b16 %v330
        %v3395 = vunpack.c.h.b16 %v330
        %v3396 = vunpack.c.l.b16 %v331
        %v3397 = vunpack.c.h.b16 %v331
        %v3398 = vunpack.c.l.b16 %v332
        %v3399 = vunpack.c.h.b16 %v332
        %v3400 = vunpack.c.l.b16 %v333
        %v3401 = vunpack.c.h.b16 %v333
        %v3402 = vunpack.c.l.b16 %v334
        %v3403 = vunpack.c.h.b16 %v334
        %v3404 = vunpack.c.l.b16 %v335
        %v3405 = vunpack.c.h.b16 %v335
        %v3406 = vunpack.c.l.b16 %v336
        %v3407 = vunpack.c.h.b16 %v336
        %v3408 = vunpack.c.l.b16 %v337
        %v3409 = vunpack.c.h.b16 %v337
        %v3410 = vunpack.c.l.b16 %v338
        %v3411 = vunpack.c.h.b16 %v338
        %v3412 = vunpack.c.l.b16 %v339
        %v3413 = vunpack.c.h.b16 %v339
        %v3414 = vunpack.c.l.b16 %v340
        %v3415 = vunpack.c.h.b16 %v340
        %v3416 = vunpack.c.l.b16 %v341
        %v3417 = vunpack.c.h.b16 %v341
        %v3418 = vunpack.c.l.b16 %v342
        %v3419 = vunpack.c.h.b16 %v342
        %v3420 = vunpack.c.l.b16 %v343
        %v3421 = vunpack.c.h.b16 %v343
        %v3422 = vunpack.c.l.b16 %v344
        %v3423 = vunpack.c.h.b16 %v344
        %v3424 = vunpack.c.l.b16 %v345
        %v3425 = vunpack.c.h.b16 %v345
        %v3426 = vunpack.c.l.b16 %v346
        %v3427 = vunpack.c.h.b16 %v346
        %v3428 = vunpack.c.l.b16 %v347
        %v3429 = vunpack.c.h.b16 %v347
        %v3430 = vunpack.c.l.b16 %v348
        %v3431 = vunpack.c.h.b16 %v348
        %v3432 = vunpack.c.l.b16 %v349
        %v3433 = vunpack.c.h.b16 %v349
        %v3434 = vunpack.c.l.b16 %v350
        %v3435 = vunpack.c.h.b16 %v350
        %v3436 = vunpack.c.l.b16 %v351
        %v3437 = vunpack.c.h.b16 %v351
        %v3438 = vunpack.c.l.b16 %v352
        %v3439 = vunpack.c.h.b16 %v352
        %v3440 = vunpack.c.l.b16 %v353
        %v3441 = vunpack.c.h.b16 %v353
        %v3442 = vunpack.c.l.b16 %v354
        %v3443 = vunpack.c.h.b16 %v354
        %v3444 = vunpack.c.l.b16 %v355
        %v3445 = vunpack.c.h.b16 %v355
        %v3446 = vunpack.c.l.b16 %v356
        %v3447 = vunpack.c.h.b16 %v356
        %v3448 = vunpack.c.l.b16 %v357
        %v3449 = vunpack.c.h.b16 %v357
        %v3450 = vunpack.c.l.b16 %v358
        %v3451 = vunpack.c.h.b16 %v358
        %v3452 = vunpack.c.l.b16 %v359
        %v3453 = vunpack.c.h.b16 %v359
        %v3454 = vunpack.c.l.b16 %v360
        %v3455 = vunpack.c.h.b16 %v360
        %v3456 = vunpack.c.l.b16 %v361
        %v3457 = vunpack.c.h.b16 %v361
        %v3458 = vunpack.c.l.b16 %v362
        %v3459 = vunpack.c.h.b16 %v362
        %v3460 = vunpack.c.l.b16 %v363
        %v3461 = vunpack.c.h.b16 %v363
        %v3462 = vunpack.c.l.b16 %v364
        %v3463 = vunpack.c.h.b16 %v364
        %v3464 = vunpack.c.l.b16 %v365
        %v3465 = vunpack.c.h.b16 %v365
        %v3466 = vunpack.c.l.b16 %v366
        %v3467 = vunpack.c.h.b16 %v366
        %v3468 = vunpack.c.l.b16 %v367
        %v3469 = vunpack.c.h.b16 %v367
        %v3470 = vunpack.c.l.b16 %v368
        %v3471 = vunpack.c.h.b16 %v368
        %v3472 = vunpack.c.l.b16 %v369
        %v3473 = vunpack.c.h.b16 %v369
        %v3474 = vunpack.c.l.b16 %v370
        %v3475 = vunpack.c.h.b16 %v370
        %v3476 = vunpack.c.l.b16 %v371
        %v3477 = vunpack.c.h.b16 %v371
        %v3478 = vunpack.c.l.b16 %v372
        %v3479 = vunpack.c.h.b16 %v372
        %v3480 = vunpack.c.l.b16 %v373
        %v3481 = vunpack.c.h.b16 %v373
        %v3482 = vunpack.c.l.b16 %v374
        %v3483 = vunpack.c.h.b16 %v374
        %v3484 = vpack.c.b16 %v3304, %v3292
        %v3485 = vpack.c.b16 %v3305, %v3293
        %v3486 = vpack.c.b16 %v3306, %v3294
        %v3487 = vpack.c.b16 %v3307, %v3295
        %v3488 = vpack.c.b16 %v3308, %v3296
        %v3489 = vpack.c.b16 %v3309, %v3297
        %v3490 = vpack.c.b16 %v3310, %v3298
        %v3491 = vpack.c.b16 %v3311, %v3299
        %v3492 = vpack.c.b16 %v3312, %v3300
        %v3493 = vpack.c.b16 %v3313, %v3301
        %v3494 = vpack.c.b16 %v3314, %v3302
        %v3495 = vpack.c.b16 %v3315, %v3303
        %v3496 = vpack.c.b16 %v3328, %v3316
        %v3497 = vpack.c.b16 %v3329, %v3317
        %v3498 = vpack.c.b16 %v3330, %v3318
        %v3499 = vpack.c.b16 %v3331, %v3319
        %v3500 = vpack.c.b16 %v3332, %v3320
        %v3501 = vpack.c.b16 %v3333, %v3321
        %v3502 = vpack.c.b16 %v3334, %v3322
        %v3503 = vpack.c.b16 %v3335, %v3323
        %v3504 = vpack.c.b16 %v3336, %v3324
        %v3505 = vpack.c.b16 %v3337, %v3325
        %v3506 = vpack.c.b16 %v3338, %v3326
        %v3507 = vpack.c.b16 %v3339, %v3327
        %v3508 = vpack.c.b16 %v3352, %v3340
        %v3509 = vpack.c.b16 %v3353, %v3341
        %v3510 = vpack.c.b16 %v3354, %v3342
        %v3511 = vpack.c.b16 %v3355, %v3343
        %v3512 = vpack.c.b16 %v3356, %v3344
        %v3513 = vpack.c.b16 %v3357, %v3345
        %v3514 = vpack.c.b16 %v3358, %v3346
        %v3515 = vpack.c.b16 %v3359, %v3347
        %v3516 = vpack.c.b16 %v3360, %v3348
        %v3517 = vpack.c.b16 %v3361, %v3349
        %v3518 = vpack.c.b16 %v3362, %v3350
        %v3519 = vpack.c.b16 %v3363, %v3351
        %v3520 = vpack.c.b16 %v3376, %v3364
        %v3521 = vpack.c.b16 %v3377, %v3365
        %v3522 = vpack.c.b16 %v3378, %v3366
        %v3523 = vpack.c.b16 %v3379, %v3367
        %v3524 = vpack.c.b16 %v3380, %v3368
        %v3525 = vpack.c.b16 %v3381, %v3369
        %v3526 = vpack.c.b16 %v3382, %v3370
        %v3527 = vpack.c.b16 %v3383, %v3371
        %v3528 = vpack.c.b16 %v3384, %v3372
        %v3529 = vpack.c.b16 %v3385, %v3373
        %v3530 = vpack.c.b16 %v3386, %v3374
        %v3531 = vpack.c.b16 %v3387, %v3375
        %v3532 = vpack.c.b16 %v3400, %v3388
        %v3533 = vpack.c.b16 %v3401, %v3389
        %v3534 = vpack.c.b16 %v3402, %v3390
        %v3535 = vpack.c.b16 %v3403, %v3391
        %v3536 = vpack.c.b16 %v3404, %v3392
        %v3537 = vpack.c.b16 %v3405, %v3393
        %v3538 = vpack.c.b16 %v3406, %v3394
        %v3539 = vpack.c.b16 %v3407, %v3395
        %v3540 = vpack.c.b16 %v3408, %v3396
        %v3541 = vpack.c.b16 %v3409, %v3397
        %v3542 = vpack.c.b16 %v3410, %v3398
        %v3543 = vpack.c.b16 %v3411, %v3399
        %v3544 = vpack.c.b16 %v3424, %v3412
        %v3545 = vpack.c.b16 %v3425, %v3413
        %v3546 = vpack.c.b16 %v3426, %v3414
        %v3547 = vpack.c.b16 %v3427, %v3415
        %v3548 = vpack.c.b16 %v3428, %v3416
        %v3549 = vpack.c.b16 %v3429, %v3417
        %v3550 = vpack.c.b16 %v3430, %v3418
        %v3551 = vpack.c.b16 %v3431, %v3419
        %v3552 = vpack.c.b16 %v3432, %v3420
        %v3553 = vpack.c.b16 %v3433, %v3421
        %v3554 = vpack.c.b16 %v3434, %v3422
        %v3555 = vpack.c.b16 %v3435, %v3423
        %v3556 = vpack.c.b16 %v3448, %v3436
        %v3557 = vpack.c.b16 %v3449, %v3437
        %v3558 = vpack.c.b16 %v3450, %v3438
        %v3559 = vpack.c.b16 %v3451, %v3439
        %v3560 = vpack.c.b16 %v3452, %v3440
        %v3561 = vpack.c.b16 %v3453, %v3441
        %v3562 = vpack.c.b16 %v3454, %v3442
        %v3563 = vpack.c.b16 %v3455, %v3443
        %v3564 = vpack.c.b16 %v3456, %v3444
        %v3565 = vpack.c.b16 %v3457, %v3445
        %v3566 = vpack.c.b16 %v3458, %v3446
        %v3567 = vpack.c.b16 %v3459, %v3447
        %v3568 = vpack.c.b16 %v3472, %v3460
        %v3569 = vpack.c.b16 %v3473, %v3461
        %v3570 = vpack.c.b16 %v3474, %v3462
        %v3571 = vpack.c.b16 %v3475, %v3463
        %v3572 = vpack.c.b16 %v3476, %v3464
        %v3573 = vpack.c.b16 %v3477, %v3465
        %v3574 = vpack.c.b16 %v3478, %v3466
        %v3575 = vpack.c.b16 %v3479, %v3467
        %v3576 = vpack.c.b16 %v3480, %v3468
        %v3577 = vpack.c.b16 %v3481, %v3469
        %v3578 = vpack.c.b16 %v3482, %v3470
        %v3579 = vpack.c.b16 %v3483, %v3471
        %3676 = vmatprep.subr.bf16.mxu0 %v3569
        %3677 = vmatpush1.bf16.msra.mxu0 %v3568
        %3678 = vmatprep.subr.bf16.mxu0 %v3557
        %3679 = vmatpush1.bf16.msra.mxu0 %v3556
        %3680 = vmatprep.subr.bf16.mxu0 %v3545
        %3681 = vmatpush1.bf16.msra.mxu0 %v3544
        %3682 = vmatprep.subr.bf16.mxu0 %v3533
        %3683 = vmatpush1.bf16.msra.mxu0 %v3532
        %3684 = vmatprep.subr.bf16.mxu0 %v3521
        %3685 = vmatpush1.bf16.msra.mxu0 %v3520
        %3686 = vmatprep.subr.bf16.mxu0 %v3509
        %3687 = vmatpush1.bf16.msra.mxu0 %v3508
        %3688 = vmatprep.subr.bf16.mxu0 %v3497
        %3689 = vmatpush1.bf16.msra.mxu0 %v3496
        %3690 = vmatprep.subr.bf16.mxu0 %v3485
        %3691 = vmatpush1.bf16.msra.mxu0 %v3484
        %3692 = vmatprep.subr.bf16.mxu0 0
        %3693 = vmatpush2.bf16.msra.mxu0 0
        %3694 = vmatprep.subr.bf16.mxu0 0
        %3695 = vmatpush2.bf16.msra.mxu0 0
        %3696 = vmatprep.subr.bf16.mxu0 0
        %3697 = vmatpush2.bf16.msra.mxu0 0
        %3698 = vmatprep.subr.bf16.mxu0 0
        %3699 = vmatpush2.bf16.msra.mxu0 0
        %3700 = vmatprep.subr.bf16.mxu0 0
        %3701 = vmatpush2.bf16.msra.mxu0 0
        %3702 = vmatprep.subr.bf16.mxu0 0
        %3703 = vmatpush2.bf16.msra.mxu0 0
        %3704 = vmatprep.subr.bf16.mxu0 0
        %3705 = vmatpush2.bf16.msra.mxu0 0
        %3706 = vmatprep.subr.bf16.mxu0 0
        %3707 = vmatpush2.bf16.msra.mxu0 0
        %3708 = vmatprep.mubr.bf16.mxu0 0
        %3709 = vmatmul.mubr.bf16.gmra.mxu0 %v271
        %v3710 = vpop.f32.mrf.mxu0
        %v3711 = vadd.f32 %v2780, %v3710
        %v3712 = vpop.f32.mrf.mxu0
        %v3713 = vadd.f32 %v2782, %v3712
        %v3714 = vpop.f32.mrf.mxu0
        %v3715 = vpop.f32.mrf.mxu0
        %3716 = vdwg.mxu0
        %3717 = vmatprep.subr.bf16.mxu0 %v3571
        %3718 = vmatpush1.bf16.msra.mxu0 %v3570
        %3719 = vmatprep.subr.bf16.mxu0 %v3559
        %3720 = vmatpush1.bf16.msra.mxu0 %v3558
        %3721 = vmatprep.subr.bf16.mxu0 %v3547
        %3722 = vmatpush1.bf16.msra.mxu0 %v3546
        %3723 = vmatprep.subr.bf16.mxu0 %v3535
        %3724 = vmatpush1.bf16.msra.mxu0 %v3534
        %3725 = vmatprep.subr.bf16.mxu0 %v3523
        %3726 = vmatpush1.bf16.msra.mxu0 %v3522
        %3727 = vmatprep.subr.bf16.mxu0 %v3511
        %3728 = vmatpush1.bf16.msra.mxu0 %v3510
        %3729 = vmatprep.subr.bf16.mxu0 %v3499
        %3730 = vmatpush1.bf16.msra.mxu0 %v3498
        %3731 = vmatprep.subr.bf16.mxu0 %v3487
        %3732 = vmatpush1.bf16.msra.mxu0 %v3486
        %3733 = vmatprep.subr.bf16.mxu0 0
        %3734 = vmatpush2.bf16.msra.mxu0 0
        %3735 = vmatprep.subr.bf16.mxu0 0
        %3736 = vmatpush2.bf16.msra.mxu0 0
        %3737 = vmatprep.subr.bf16.mxu0 0
        %3738 = vmatpush2.bf16.msra.mxu0 0
        %3739 = vmatprep.subr.bf16.mxu0 0
        %3740 = vmatpush2.bf16.msra.mxu0 0
        %3741 = vmatprep.subr.bf16.mxu0 0
        %3742 = vmatpush2.bf16.msra.mxu0 0
        %3743 = vmatprep.subr.bf16.mxu0 0
        %3744 = vmatpush2.bf16.msra.mxu0 0
        %3745 = vmatprep.subr.bf16.mxu0 0
        %3746 = vmatpush2.bf16.msra.mxu0 0
        %3747 = vmatprep.subr.bf16.mxu0 0
        %3748 = vmatpush2.bf16.msra.mxu0 0
        %3749 = vmatprep.mubr.bf16.mxu0 0
        %3750 = vmatmul.mubr.bf16.gmra.mxu0 %v271
        %v3751 = vpop.f32.mrf.mxu0
        %v3752 = vadd.f32 %v2862, %v3751
        %v3753 = vpop.f32.mrf.mxu0
        %v3754 = vadd.f32 %v2864, %v3753
        %v3755 = vpop.f32.mrf.mxu0
        %v3756 = vpop.f32.mrf.mxu0
        %3757 = vdwg.mxu0
        %3758 = vmatprep.subr.bf16.mxu0 %v3573
        %3759 = vmatpush1.bf16.msra.mxu0 %v3572
        %3760 = vmatprep.subr.bf16.mxu0 %v3561
        %3761 = vmatpush1.bf16.msra.mxu0 %v3560
        %3762 = vmatprep.subr.bf16.mxu0 %v3549
        %3763 = vmatpush1.bf16.msra.mxu0 %v3548
        %3764 = vmatprep.subr.bf16.mxu0 %v3537
        %3765 = vmatpush1.bf16.msra.mxu0 %v3536
        %3766 = vmatprep.subr.bf16.mxu0 %v3525
        %3767 = vmatpush1.bf16.msra.mxu0 %v3524
        %3768 = vmatprep.subr.bf16.mxu0 %v3513
        %3769 = vmatpush1.bf16.msra.mxu0 %v3512
        %3770 = vmatprep.subr.bf16.mxu0 %v3501
        %3771 = vmatpush1.bf16.msra.mxu0 %v3500
        %3772 = vmatprep.subr.bf16.mxu0 %v3489
        %3773 = vmatpush1.bf16.msra.mxu0 %v3488
        %3774 = vmatprep.subr.bf16.mxu0 0
        %3775 = vmatpush2.bf16.msra.mxu0 0
        %3776 = vmatprep.subr.bf16.mxu0 0
        %3777 = vmatpush2.bf16.msra.mxu0 0
        %3778 = vmatprep.subr.bf16.mxu0 0
        %3779 = vmatpush2.bf16.msra.mxu0 0
        %3780 = vmatprep.subr.bf16.mxu0 0
        %3781 = vmatpush2.bf16.msra.mxu0 0
        %3782 = vmatprep.subr.bf16.mxu0 0
        %3783 = vmatpush2.bf16.msra.mxu0 0
        %3784 = vmatprep.subr.bf16.mxu0 0
        %3785 = vmatpush2.bf16.msra.mxu0 0
        %3786 = vmatprep.subr.bf16.mxu0 0
        %3787 = vmatpush2.bf16.msra.mxu0 0
        %3788 = vmatprep.subr.bf16.mxu0 0
        %3789 = vmatpush2.bf16.msra.mxu0 0
        %3790 = vmatprep.mubr.bf16.mxu0 0
        %3791 = vmatmul.mubr.bf16.gmra.mxu0 %v271
        %v3792 = vpop.f32.mrf.mxu0
        %v3793 = vadd.f32 %v2944, %v3792
        %v3794 = vpop.f32.mrf.mxu0
        %v3795 = vadd.f32 %v2946, %v3794
        %v3796 = vpop.f32.mrf.mxu0
        %v3797 = vpop.f32.mrf.mxu0
        %3798 = vdwg.mxu0
        %3799 = vmatprep.subr.bf16.mxu0 %v3575
        %3800 = vmatpush1.bf16.msra.mxu0 %v3574
        %3801 = vmatprep.subr.bf16.mxu0 %v3563
        %3802 = vmatpush1.bf16.msra.mxu0 %v3562
        %3803 = vmatprep.subr.bf16.mxu0 %v3551
        %3804 = vmatpush1.bf16.msra.mxu0 %v3550
        %3805 = vmatprep.subr.bf16.mxu0 %v3539
        %3806 = vmatpush1.bf16.msra.mxu0 %v3538
        %3807 = vmatprep.subr.bf16.mxu0 %v3527
        %3808 = vmatpush1.bf16.msra.mxu0 %v3526
        %3809 = vmatprep.subr.bf16.mxu0 %v3515
        %3810 = vmatpush1.bf16.msra.mxu0 %v3514
        %3811 = vmatprep.subr.bf16.mxu0 %v3503
        %3812 = vmatpush1.bf16.msra.mxu0 %v3502
        %3813 = vmatprep.subr.bf16.mxu0 %v3491
        %3814 = vmatpush1.bf16.msra.mxu0 %v3490
        %3815 = vmatprep.subr.bf16.mxu0 0
        %3816 = vmatpush2.bf16.msra.mxu0 0
        %3817 = vmatprep.subr.bf16.mxu0 0
        %3818 = vmatpush2.bf16.msra.mxu0 0
        %3819 = vmatprep.subr.bf16.mxu0 0
        %3820 = vmatpush2.bf16.msra.mxu0 0
        %3821 = vmatprep.subr.bf16.mxu0 0
        %3822 = vmatpush2.bf16.msra.mxu0 0
        %3823 = vmatprep.subr.bf16.mxu0 0
        %3824 = vmatpush2.bf16.msra.mxu0 0
        %3825 = vmatprep.subr.bf16.mxu0 0
        %3826 = vmatpush2.bf16.msra.mxu0 0
        %3827 = vmatprep.subr.bf16.mxu0 0
        %3828 = vmatpush2.bf16.msra.mxu0 0
        %3829 = vmatprep.subr.bf16.mxu0 0
        %3830 = vmatpush2.bf16.msra.mxu0 0
        %3831 = vmatprep.mubr.bf16.mxu0 0
        %3832 = vmatmul.mubr.bf16.gmra.mxu0 %v271
        %v3833 = vpop.f32.mrf.mxu0
        %v3834 = vadd.f32 %v3026, %v3833
        %v3835 = vpop.f32.mrf.mxu0
        %v3836 = vadd.f32 %v3028, %v3835
        %v3837 = vpop.f32.mrf.mxu0
        %v3838 = vpop.f32.mrf.mxu0
        %3839 = vdwg.mxu0
        %3840 = vmatprep.subr.bf16.mxu0 %v3577
        %3841 = vmatpush1.bf16.msra.mxu0 %v3576
        %3842 = vmatprep.subr.bf16.mxu0 %v3565
        %3843 = vmatpush1.bf16.msra.mxu0 %v3564
        %3844 = vmatprep.subr.bf16.mxu0 %v3553
        %3845 = vmatpush1.bf16.msra.mxu0 %v3552
        %3846 = vmatprep.subr.bf16.mxu0 %v3541
        %3847 = vmatpush1.bf16.msra.mxu0 %v3540
        %3848 = vmatprep.subr.bf16.mxu0 %v3529
        %3849 = vmatpush1.bf16.msra.mxu0 %v3528
        %3850 = vmatprep.subr.bf16.mxu0 %v3517
        %3851 = vmatpush1.bf16.msra.mxu0 %v3516
        %3852 = vmatprep.subr.bf16.mxu0 %v3505
        %3853 = vmatpush1.bf16.msra.mxu0 %v3504
        %3854 = vmatprep.subr.bf16.mxu0 %v3493
        %3855 = vmatpush1.bf16.msra.mxu0 %v3492
        %3856 = vmatprep.subr.bf16.mxu0 0
        %3857 = vmatpush2.bf16.msra.mxu0 0
        %3858 = vmatprep.subr.bf16.mxu0 0
        %3859 = vmatpush2.bf16.msra.mxu0 0
        %3860 = vmatprep.subr.bf16.mxu0 0
        %3861 = vmatpush2.bf16.msra.mxu0 0
        %3862 = vmatprep.subr.bf16.mxu0 0
        %3863 = vmatpush2.bf16.msra.mxu0 0
        %3864 = vmatprep.subr.bf16.mxu0 0
        %3865 = vmatpush2.bf16.msra.mxu0 0
        %3866 = vmatprep.subr.bf16.mxu0 0
        %3867 = vmatpush2.bf16.msra.mxu0 0
        %3868 = vmatprep.subr.bf16.mxu0 0
        %3869 = vmatpush2.bf16.msra.mxu0 0
        %3870 = vmatprep.subr.bf16.mxu0 0
        %3871 = vmatpush2.bf16.msra.mxu0 0
        %3872 = vmatprep.mubr.bf16.mxu0 0
        %3873 = vmatmul.mubr.bf16.gmra.mxu0 %v271
        %v3874 = vpop.f32.mrf.mxu0
        %v3875 = vadd.f32 %v3108, %v3874
        %v3876 = vpop.f32.mrf.mxu0
        %v3877 = vadd.f32 %v3110, %v3876
        %v3878 = vpop.f32.mrf.mxu0
        %v3879 = vpop.f32.mrf.mxu0
        %3880 = vdwg.mxu0
        %3881 = vmatprep.subr.bf16.mxu0 %v3579
        %3882 = vmatpush1.bf16.msra.mxu0 %v3578
        %3883 = vmatprep.subr.bf16.mxu0 %v3567
        %3884 = vmatpush1.bf16.msra.mxu0 %v3566
        %3885 = vmatprep.subr.bf16.mxu0 %v3555
        %3886 = vmatpush1.bf16.msra.mxu0 %v3554
        %3887 = vmatprep.subr.bf16.mxu0 %v3543
        %3888 = vmatpush1.bf16.msra.mxu0 %v3542
        %3889 = vmatprep.subr.bf16.mxu0 %v3531
        %3890 = vmatpush1.bf16.msra.mxu0 %v3530
        %3891 = vmatprep.subr.bf16.mxu0 %v3519
        %3892 = vmatpush1.bf16.msra.mxu0 %v3518
        %3893 = vmatprep.subr.bf16.mxu0 %v3507
        %3894 = vmatpush1.bf16.msra.mxu0 %v3506
        %3895 = vmatprep.subr.bf16.mxu0 %v3495
        %3896 = vmatpush1.bf16.msra.mxu0 %v3494
        %3897 = vmatprep.subr.bf16.mxu0 0
        %3898 = vmatpush2.bf16.msra.mxu0 0
        %3899 = vmatprep.subr.bf16.mxu0 0
        %3900 = vmatpush2.bf16.msra.mxu0 0
        %3901 = vmatprep.subr.bf16.mxu0 0
        %3902 = vmatpush2.bf16.msra.mxu0 0
        %3903 = vmatprep.subr.bf16.mxu0 0
        %3904 = vmatpush2.bf16.msra.mxu0 0
        %3905 = vmatprep.subr.bf16.mxu0 0
        %3906 = vmatpush2.bf16.msra.mxu0 0
        %3907 = vmatprep.subr.bf16.mxu0 0
        %3908 = vmatpush2.bf16.msra.mxu0 0
        %3909 = vmatprep.subr.bf16.mxu0 0
        %3910 = vmatpush2.bf16.msra.mxu0 0
        %3911 = vmatprep.subr.bf16.mxu0 0
        %3912 = vmatpush2.bf16.msra.mxu0 0
        %3913 = vmatprep.mubr.bf16.mxu0 0
        %3914 = vmatmul.mubr.bf16.gmra.mxu0 %v271
        %v3915 = vpop.f32.mrf.mxu0
        %v3916 = vadd.f32 %v3190, %v3915
        %v3917 = vpop.f32.mrf.mxu0
        %v3918 = vadd.f32 %v3192, %v3917
        %v3919 = vpop.f32.mrf.mxu0
        %v3920 = vpop.f32.mrf.mxu0
        %3921 = vdwg.mxu0
        %v3922 = vtanh.pop %v3711
        %v3923 = vtanh.pop %v3713
        %v3924 = vtanh.pop %v3752
        %v3925 = vtanh.pop %v3754
        %v3926 = vtanh.pop %v3793
        %v3927 = vtanh.pop %v3795
        %v3928 = vtanh.pop %v3834
        %v3929 = vtanh.pop %v3836
        %v3930 = vtanh.pop %v3875
        %v3931 = vtanh.pop %v3877
        %v3932 = vtanh.pop %v3916
        %v3933 = vtanh.pop %v3918
        %v3934 = vadd.f32 %v3922, 1.0
        %v3935 = vadd.f32 %v3923, 1.0
        %v3936 = vadd.f32 %v3924, 1.0
        %v3937 = vadd.f32 %v3925, 1.0
        %v3938 = vadd.f32 %v3926, 1.0
        %v3939 = vadd.f32 %v3927, 1.0
        %v3940 = vadd.f32 %v3928, 1.0
        %v3941 = vadd.f32 %v3929, 1.0
        %v3942 = vadd.f32 %v3930, 1.0
        %v3943 = vadd.f32 %v3931, 1.0
        %v3944 = vadd.f32 %v3932, 1.0
        %v3945 = vadd.f32 %v3933, 1.0
        %v3946 = vmul.f32 %v3934, 0.5
        %v3947 = vmul.f32 %v3935, 0.5
        %v3948 = vmul.f32 %v3936, 0.5
        %v3949 = vmul.f32 %v3937, 0.5
        %v3950 = vmul.f32 %v3938, 0.5
        %v3951 = vmul.f32 %v3939, 0.5
        %v3952 = vmul.f32 %v3940, 0.5
        %v3953 = vmul.f32 %v3941, 0.5
        %v3954 = vmul.f32 %v3942, 0.5
        %v3955 = vmul.f32 %v3943, 0.5
        %v3956 = vmul.f32 %v3944, 0.5
        %v3957 = vmul.f32 %v3945, 0.5
        %v3970 = vcombine.low %v3946, %v3947
        %v3971 = vcombine.low %v3948, %v3949
        %v3972 = vcombine.low %v3950, %v3951
        %v3973 = vcombine.low %v3952, %v3953
        %v3975 = vunpack.c.l.s4 1966171168
        %v3976 = vunpack.c.0.s8 %v3975
        %v3977 = vlaneseq
        %v3978 = vshrl.u32 %v3977, 7
        %v3979 = vsub.s32 %v3976, %v3978
        %v3980 = vrot.slane %v3970, %v3979
        %v3982 = vunpack.c.l.s4 1966171168
        %v3983 = vunpack.c.0.s8 %v3982
        %v3984 = vlaneseq
        %v3985 = vshrl.u32 %v3984, 7
        %v3986 = vsub.s32 %v3983, %v3985
        %v3987 = vrot.slane %v3971, %v3986
        %v3989 = vunpack.c.l.s4 1966171168
        %v3990 = vunpack.c.0.s8 %v3989
        %v3991 = vlaneseq
        %v3992 = vshrl.u32 %v3991, 7
        %v3993 = vsub.s32 %v3990, %v3992
        %v3994 = vrot.slane %v3972, %v3993
        %v3996 = vunpack.c.l.s4 1966171168
        %v3997 = vunpack.c.0.s8 %v3996
        %v3998 = vlaneseq
        %v3999 = vshrl.u32 %v3998, 7
        %v4000 = vsub.s32 %v3997, %v3999
        %v4001 = vrot.slane %v3973, %v4000
        %v4002 = vcombine.low %v3980, %v3987
        %v4003 = vcombine.low %v3994, %v4001
        %v4005 = vunpack.c.l.s4 1966171168
        %v4006 = vunpack.c.0.s8 %v4005
        %v4007 = vlaneseq
        %v4008 = vshrl.u32 %v4007, 7
        %v4009 = vsub.s32 %v4006, %v4008
        %v4010 = vrot.slane %v4002, %v4009
        %v4012 = vunpack.c.l.s4 1966171168
        %v4013 = vunpack.c.0.s8 %v4012
        %v4014 = vlaneseq
        %v4015 = vshrl.u32 %v4014, 7
        %v4016 = vsub.s32 %v4013, %v4015
        %v4017 = vrot.slane %v4003, %v4016
        %v4018 = vcombine.low %v4010, %v4017
        %v4019 = vcombine.low %v3954, %v3955
        %v4020 = vcombine.low %v3956, %v3957
        %v4022 = vunpack.c.l.s4 1966171168
        %v4023 = vunpack.c.0.s8 %v4022
        %v4024 = vlaneseq
        %v4025 = vshrl.u32 %v4024, 7
        %v4026 = vsub.s32 %v4023, %v4025
        %v4027 = vrot.slane %v4019, %v4026
        %v4029 = vunpack.c.l.s4 1966171168
        %v4030 = vunpack.c.0.s8 %v4029
        %v4031 = vlaneseq
        %v4032 = vshrl.u32 %v4031, 7
        %v4033 = vsub.s32 %v4030, %v4032
        %v4034 = vrot.slane %v4020, %v4033
        %v4035 = vcombine.low %v4027, %v4034
        %v4037 = vunpack.c.l.s4 1966171168
        %v4038 = vunpack.c.0.s8 %v4037
        %v4039 = vlaneseq
        %v4040 = vshrl.u32 %v4039, 7
        %v4041 = vsub.s32 %v4038, %v4040
        %v4042 = vrot.slane %v4035, %v4041
        %4045 = vst [vmem:[%s267] sm:$0xff] %v4018
        %v4046 = vlaneseq
        %vm4047 = vcmp.ge.s32.totalorder %v4046, 0
        %vm4048 = vcmp.lt.s32.totalorder %v4046, 512
        %vm4049 = vmand %vm4047, %vm4048
        %4050 = vst.msk [vmem:[%s267 + $0x8] sm:$0xf] %vm4049, %v4042
        %s4051 = smul.u32 12, %s19
        %p4052 = scmp.lt.s32.totalorder %s4051, 23
        %s4053 = scalar_select %p4052, %s4051, 23
        %s4054 = scalar_lea.vmem %s4, %s4053
        // Predicated region
        $region49: #{_forward_loss_impl.2} parent=35 // pred_check
          %p4055 = pneg %p131
        $region50: #{_forward_loss_impl.2} parent=35 // pred_check_branch
          %4057 = sbr.rel (%p4055) target = $region52
        $region51: #{_forward_loss_impl.2} parent=35 // pred_region
          %s4058 = smul.u32 12, %s19
        $region52: #{_forward_loss_impl.2} parent=35 // pred_fallthru
          _
      $region36: #{_forward_loss_impl.2} parent=5 // pred_fallthru
        _
      %p4059 = scmp.le.s32.totalorder 2, %s14
      // Predicated region
      $region53: #{_forward_loss_impl.2} parent=5 // pred_check
        %p4060 = pneg %p4059
      $region54: #{_forward_loss_impl.2} parent=5 // pred_check_branch
        %4062 = sbr.rel (%p4060) target = $region56
      $region55: #{_forward_loss_impl.2} parent=5 // pred_region
        %s4063 = ssub.s32 %s14, 2
        // Predicated region
        $region57: #{_forward_loss_impl.2} parent=55 // pred_check
          %p4064 = pneg %p137
        $region58: #{_forward_loss_impl.2} parent=55 // pred_check_branch
          %4066 = sbr.rel (%p4064) target = $region60
        $region59: #{_forward_loss_impl.2} parent=55 // pred_region
          %s4067 = smul.u32 12, %s20
          %p4068 = scmp.lt.s32.totalorder %s4067, 23
          %s4069 = scalar_select %p4068, %s4067, 23
          %s4070 = scalar_lea.vmem %s4, %s4069
        $region60: #{_forward_loss_impl.2} parent=55 // pred_fallthru
          _
      $region56: #{_forward_loss_impl.2} parent=5 // pred_fallthru
        _
    $region6: #{_forward_loss_impl.2} parent=1 // loop_footer
      %s18 = sadd.s32 1, %s14
    $region7: #{_forward_loss_impl.2} parent=1 // loop_footer_branch
      %13 = sbr.rel target = $region3
    $region8: #{_forward_loss_impl.2} parent=1 // loop_exit
      _
    %4071 = vsyncpa [#allocation3], 1
    %s4072 = scalar_lea.sflag [#allocation3], 1
    %4073 = vsyncpa %s4072, 1
    %4074 = vsyncpa [#allocation5], 1
    %s4075 = scalar_lea.sflag [#allocation5], 1
    %4076 = vsyncpa %s4075, 1

</llo_original>
